<compile_context>
chip_gen: v5e
topology: v5e:2x2
jax: 0.10.0
libtpu: 0.0.40
codegen_flags: <defaults>
</compile_context>

<pallas_src>
import functools

import jax
import jax.numpy as jnp
from jax.experimental import pallas as pl
from jax.experimental.pallas import tpu as pltpu

LANE = 128


def _basic_block_kernel(x_ref, w1_ref, w2_ref, s1_ref, b1_ref, s2_ref, b2_ref,
                        o_ref, y_ref, *, W, C, TILE):
    """Per-row-tile BasicBlock forward.

    x_ref : (HW, C) f32   full image (resident across row tiles of one image)
    w1_ref: (C, C) bf16   conv1x1 weights
    w2_ref: (9C, C) bf16  conv3x3 weights, row-block order tap k = ky*3 + kx
    s*/b* : (1, C) f32    folded BatchNorm scale / bias
    o_ref : (TILE, C)     output tile
    y_ref : (TILE+2W, C) f32 scratch: conv1 output for this tile + 1-row halos
    """
    r = pl.program_id(1)
    nr = pl.num_programs(1)
    base = pl.multiple_of(r * TILE, TILE)

    def conv1(rows_f32):
        y = jnp.dot(rows_f32.astype(jnp.bfloat16), w1_ref[...],
                    preferred_element_type=jnp.float32)
        return jnp.maximum(y * s1_ref[...] + b1_ref[...], 0.0)

    # ---- conv1x1 + BN1 + ReLU, per tile with +/- one image-row halo ---------
    y_ref[W:W + TILE, :] = conv1(x_ref[pl.ds(base, TILE), :])

    @pl.when(r > 0)
    def _():
        y_ref[0:W, :] = conv1(x_ref[pl.ds(base - W, W), :])

    @pl.when(r == 0)
    def _():
        y_ref[0:W, :] = jnp.zeros((W, C), jnp.float32)     # zero padding (top)

    @pl.when(r < nr - 1)
    def _():
        y_ref[W + TILE:2 * W + TILE, :] = conv1(x_ref[pl.ds(base + TILE, W), :])

    @pl.when(r == nr - 1)
    def _():
        y_ref[W + TILE:2 * W + TILE, :] = jnp.zeros((W, C), jnp.float32)

    # ---- conv3x3: three accumulating (TILE, 3C) @ (3C, C) matmuls -----------
    col = jax.lax.broadcasted_iota(jnp.int32, (TILE, 1), 0) % W
    mask_l = col > 0            # column (w - 1) exists
    mask_r = col < (W - 1)      # column (w + 1) exists
    zero = jnp.zeros((), jnp.bfloat16)

    acc = None
    for ky in range(3):                          # dy = ky - 1
        # Row-aligned window of conv1 output covering this tile's rows + dy.
        t = y_ref[ky * W:ky * W + TILE, :]       # (TILE, C) f32, 8-aligned
        tc = t.astype(jnp.bfloat16)
        # dx = -1: shift down by one element, mask the wrapped w == 0 column.
        tl = jnp.where(mask_l, pltpu.roll(t, 1, axis=0).astype(jnp.bfloat16),
                       zero)
        # dx = +1: shift up by one element, mask the wrapped w == W-1 column.
        tr = jnp.where(mask_r,
                       pltpu.roll(t, TILE - 1, axis=0).astype(jnp.bfloat16),
                       zero)
        chunk = jnp.concatenate([tl, tc, tr], axis=1)          # (TILE, 3C) bf16
        part = jnp.dot(chunk, w2_ref[ky * 3 * C:(ky + 1) * 3 * C, :],
                       preferred_element_type=jnp.float32)
        acc = part if acc is None else acc + part

    # ---- BN2 + identity residual + ReLU --------------------------------------
    resid = x_ref[pl.ds(base, TILE), :]
    out = jnp.maximum(acc * s2_ref[...] + b2_ref[...] + resid, 0.0)
    o_ref[...] = out.astype(o_ref.dtype)


def _pick_tile_rows(H, W, max_tile=512):
    """Largest row count d | H with (d*W) % 8 == 0 and d*W <= max_tile."""
    best = None
    for d in range(1, H + 1):
        if H % d or (d * W) % 8:
            continue
        if d * W <= max_tile:
            best = d
    return best if best is not None else H      # whole-image fallback


def basic_block_pallas(x, w1, w2, s1, b1, s2, b2, *, tile_rows=None):
    """x: (N, H, W, C) f32 NHWC. w1: (Cin, Cout). w2: (9, Cin, Cout) with tap
    index k = ky*3 + kx (PyTorch (Cout,Cin,kh,kw) transposed). s*, b*: (C,)
    folded BatchNorm scale / bias. Returns (N, H, W, C) f32."""
    N, H, W, C = x.shape
    HW = H * W

    if tile_rows is None or H % tile_rows or (tile_rows * W) % 8:
        tile_rows = _pick_tile_rows(H, W)
    TILE = tile_rows * W
    assert HW % TILE == 0

    Cp = max(LANE, -(-C // LANE) * LANE)        # lane-dense channel count
    pc = Cp - C

    # Wrapper-side layout plumbing: flatten spatial dims, pad channels, cast
    # matmul weights to bf16, reshape w2 to the fused per-dy im2col layout.
    xp = jnp.pad(x, ((0, 0), (0, 0), (0, 0), (0, pc))).reshape(N, HW, Cp)
    w1p = jnp.pad(w1, ((0, pc), (0, pc))).astype(jnp.bfloat16)
    w2p = (jnp.pad(w2, ((0, 0), (0, pc), (0, pc)))
           .reshape(9 * Cp, Cp).astype(jnp.bfloat16))
    s1p = jnp.pad(s1, (0, pc)).reshape(1, Cp)
    b1p = jnp.pad(b1, (0, pc)).reshape(1, Cp)
    s2p = jnp.pad(s2, (0, pc)).reshape(1, Cp)
    b2p = jnp.pad(b2, (0, pc)).reshape(1, Cp)

    kernel = functools.partial(_basic_block_kernel, W=W, C=Cp, TILE=TILE)

    # Explicit VMEM budget from actual block sizes (default scoped limit is
    # 16/32 MiB; physical VMEM is 128 MiB v5e/v6e, 64 MiB v7x -> cap at 56 MiB).
    needed = (2 * HW * Cp * 4              # x image block, double-buffered
              + 2 * TILE * Cp * 4          # output tile, double-buffered
              + 2 * Cp * Cp * 2            # w1 bf16
              + 2 * 9 * Cp * Cp * 2        # w2 bf16
              + 8 * Cp * 4                 # scale / bias
              + (TILE + 2 * W) * Cp * 4)   # conv1 halo scratch
    vmem_limit = int(min(max(2 * needed, 32 << 20), 56 << 20))

    grid_spec = pltpu.PrefetchScalarGridSpec(
        num_scalar_prefetch=0,
        grid=(N, HW // TILE),
        in_specs=[
            pl.BlockSpec((None, HW, Cp), lambda n, r: (n, 0, 0)),   # x (image)
            pl.BlockSpec((Cp, Cp), lambda n, r: (0, 0)),            # w1
            pl.BlockSpec((9 * Cp, Cp), lambda n, r: (0, 0)),        # w2
            pl.BlockSpec((1, Cp), lambda n, r: (0, 0)),             # scale1
            pl.BlockSpec((1, Cp), lambda n, r: (0, 0)),             # bias1
            pl.BlockSpec((1, Cp), lambda n, r: (0, 0)),             # scale2
            pl.BlockSpec((1, Cp), lambda n, r: (0, 0)),             # bias2
        ],
        out_specs=pl.BlockSpec((None, TILE, Cp), lambda n, r: (n, r, 0)),
        scratch_shapes=[pltpu.VMEM((TILE + 2 * W, Cp), jnp.float32)],
    )
    out = pl.pallas_call(
        kernel,
        out_shape=jax.ShapeDtypeStruct((N, HW, Cp), x.dtype),
        grid_spec=grid_spec,
        compiler_params=pltpu.CompilerParams(
            dimension_semantics=("parallel", "parallel"),
            vmem_limit_bytes=vmem_limit),
    )(xp, w1p, w2p, s1p, b1p, s2p, b2p)
    # TODO(synk): if the consumer accepts Cp-padded channels, return `out`
    # directly and skip this extra full-tensor HBM pass (matters when C << 128).
    return out.reshape(N, H, W, Cp)[..., :C]


def basic_block_reference(x, w1, w2, s1, b1, s2, b2):
    """Pure-JAX f32 reference with identical NHWC semantics."""
    N, H, W, C = x.shape
    y = jnp.einsum('nhwc,cd->nhwd', x, w1)
    y = jnp.maximum(y * s1 + b1, 0.0)
    yp = jnp.pad(y, ((0, 0), (1, 1), (1, 1), (0, 0)))
    acc = jnp.zeros_like(y)
    for ky in range(3):
        for kx in range(3):
            acc = acc + jnp.einsum('nhwc,cd->nhwd',
                                   yp[:, ky:ky + H, kx:kx + W, :],
                                   w2[ky * 3 + kx])
    out = acc * s2 + b2 + x
    return jnp.maximum(out, 0.0)


if __name__ == "__main__":
    key = jax.random.PRNGKey(0)
    N, H, W, C = 2, 16, 16, 32           # inplanes == planes == 32, stride=1
    eps = 1e-5

    k = jax.random.split(key, 10)
    x = jax.random.normal(k[0], (N, H, W, C), jnp.float32)

    # conv weights, already in kernel layout: (Cin, Cout) and (9, Cin, Cout)
    w1 = jax.random.normal(k[1], (C, C), jnp.float32) * 0.1
    w2 = jax.random.normal(k[2], (9, C, C), jnp.float32) * 0.05

    # eval-mode BatchNorm params, folded into scale/bias
    g1 = 1.0 + 0.1 * jax.random.normal(k[3], (C,), jnp.float32)
    be1 = 0.1 * jax.random.normal(k[4], (C,), jnp.float32)
    m1 = 0.1 * jax.random.normal(k[5], (C,), jnp.float32)
    v1 = jnp.abs(1.0 + 0.1 * jax.random.normal(k[6], (C,), jnp.float32))
    g2 = 1.0 + 0.1 * jax.random.normal(k[7], (C,), jnp.float32)
    be2 = 0.1 * jax.random.normal(k[8], (C,), jnp.float32)
    m2 = 0.1 * jax.random.normal(k[9], (C,), jnp.float32)
    v2 = jnp.abs(1.0 + 0.1 * jax.random.normal(jax.random.PRNGKey(1), (C,),
                                               jnp.float32))

    s1 = g1 / jnp.sqrt(v1 + eps)
    b1 = be1 - m1 * s1
    s2 = g2 / jnp.sqrt(v2 + eps)
    b2 = be2 - m2 * s2

    ref = basic_block_reference(x, w1, w2, s1, b1, s2, b2)

    # Auto-tiled run (whole-image tile at this small size) ...
    out = jax.block_until_ready(basic_block_pallas(x, w1, w2, s1, b1, s2, b2))
    # ... plus an explicit multi-row-tile run that exercises the per-tile
    # conv1 halo path (r == 0 / interior / r == last).
    out_t = jax.block_until_ready(
        basic_block_pallas(x, w1, w2, s1, b1, s2, b2, tile_rows=4))

    assert out.shape == (N, H, W, C)
    err = float(jnp.max(jnp.abs(out - ref)))
    err_t = float(jnp.max(jnp.abs(out_t - ref)))
    # bf16 MXU operands (f32 accumulation) vs a pure-f32 reference.
    assert err < 2e-2, f"mismatch vs reference (auto tile): max abs err = {err}"
    assert err_t < 2e-2, f"mismatch vs reference (tile_rows=4): max abs err = {err_t}"
    print("KERNEL_OK")
</pallas_src>

<mosaic_0001>
module attributes {stable_mosaic.version = 11 : i64} {
  func.func @_basic_block_kernel(%arg0: i32, %arg1: i32, %arg2: memref<1x256x128xf32, #tpu.memory_space<vmem>>, %arg3: memref<128x128xbf16, #tpu.memory_space<vmem>>, %arg4: memref<1152x128xbf16, #tpu.memory_space<vmem>>, %arg5: memref<1x128xf32, #tpu.memory_space<vmem>>, %arg6: memref<1x128xf32, #tpu.memory_space<vmem>>, %arg7: memref<1x128xf32, #tpu.memory_space<vmem>>, %arg8: memref<1x128xf32, #tpu.memory_space<vmem>>, %arg9: memref<1x256x128xf32, #tpu.memory_space<vmem>>, %arg10: memref<288x128xf32, #tpu.memory_space<vmem>>) attributes {dimension_semantics = [#tpu.dimension_semantics<parallel>, #tpu.dimension_semantics<parallel>], iteration_bounds = array<i64: 2, 1>, scalar_prefetch = 0 : i64, scratch_operands = 1 : i64, tpu.core_type = #tpu.core_type<tc>, window_params = [{transform_indices = @transform_0, window_bounds = array<i64: 1, 256, 128>}, {pipeline_mode = #tpu.pipeline_mode<synchronous>, transform_indices = @transform_1, window_bounds = array<i64: 128, 128>}, {pipeline_mode = #tpu.pipeline_mode<synchronous>, transform_indices = @transform_2, window_bounds = array<i64: 1152, 128>}, {pipeline_mode = #tpu.pipeline_mode<synchronous>, transform_indices = @transform_3, window_bounds = array<i64: 1, 128>}, {pipeline_mode = #tpu.pipeline_mode<synchronous>, transform_indices = @transform_4, window_bounds = array<i64: 1, 128>}, {pipeline_mode = #tpu.pipeline_mode<synchronous>, transform_indices = @transform_5, window_bounds = array<i64: 1, 128>}, {pipeline_mode = #tpu.pipeline_mode<synchronous>, transform_indices = @transform_6, window_bounds = array<i64: 1, 128>}, {transform_indices = @transform_7, window_bounds = array<i64: 1, 256, 128>}]} {
    %c256_i32 = arith.constant 256 : i32
    %0 = arith.muli %arg1, %c256_i32 : i32
    %1 = tpu.assume_multiple %0, 256 : i32
    %c0 = arith.constant 0 : index
    %2 = arith.index_cast %1 : i32 to index
    %c0_0 = arith.constant 0 : index
    %3 = vector.load %arg2[%c0, %2, %c0_0] : memref<1x256x128xf32, #tpu.memory_space<vmem>>, vector<1x256x128xf32>
    %4 = vector.shape_cast %3 : vector<1x256x128xf32> to vector<256x128xf32>
    %5 = arith.truncf %4 : vector<256x128xf32> to vector<256x128xbf16>
    %c0_1 = arith.constant 0 : index
    %c0_2 = arith.constant 0 : index
    %6 = vector.load %arg3[%c0_1, %c0_2] : memref<128x128xbf16, #tpu.memory_space<vmem>>, vector<128x128xbf16>
    %cst = arith.constant dense<0.000000e+00> : vector<256x128xf32>
    %7 = tpu.matmul %5, %6, %cst {dimension_numbers = #tpu.dot_dimension_numbers<[1], [0], [0], [1], [0, 0, 1, 1], [], []>} : vector<256x128xbf16>, vector<128x128xbf16>, vector<256x128xf32> -> vector<256x128xf32>
    %c0_3 = arith.constant 0 : index
    %c0_4 = arith.constant 0 : index
    %8 = vector.load %arg5[%c0_3, %c0_4] : memref<1x128xf32, #tpu.memory_space<vmem>>, vector<1x128xf32>
    %9 = vector.broadcast %8 : vector<1x128xf32> to vector<256x128xf32>
    %10 = arith.mulf %7, %9 : vector<256x128xf32>
    %c0_5 = arith.constant 0 : index
    %c0_6 = arith.constant 0 : index
    %11 = vector.load %arg6[%c0_5, %c0_6] : memref<1x128xf32, #tpu.memory_space<vmem>>, vector<1x128xf32>
    %12 = vector.broadcast %11 : vector<1x128xf32> to vector<256x128xf32>
    %13 = arith.addf %10, %12 : vector<256x128xf32>
    %cst_7 = arith.constant 0.000000e+00 : f32
    %14 = vector.broadcast %cst_7 : f32 to vector<256x128xf32>
    %15 = arith.maximumf %13, %14 : vector<256x128xf32>
    %c16 = arith.constant 16 : index
    %c0_8 = arith.constant 0 : index
    %16 = vector.load %arg10[%c16, %c0_8] : memref<288x128xf32, #tpu.memory_space<vmem>>, vector<256x128xf32>
    tpu.vector_store %arg10[%c16, %c0_8], %15 {strides = array<i32>} : memref<288x128xf32, #tpu.memory_space<vmem>>, vector<256x128xf32>,
    %c0_i32 = arith.constant 0 : i32
    %17 = arith.cmpi sgt, %arg1, %c0_i32 : i32
    %18 = arith.extui %17 : i1 to i32
    %c0_i32_9 = arith.constant 0 : i32
    %19 = arith.cmpi ne, %18, %c0_i32_9 : i32
    scf.if %19 {
      %c16_i32_54 = arith.constant 16 : i32
      %118 = arith.subi %1, %c16_i32_54 : i32
      %c0_55 = arith.constant 0 : index
      %119 = arith.index_cast %118 : i32 to index
      %c0_56 = arith.constant 0 : index
      %120 = vector.load %arg2[%c0_55, %119, %c0_56] : memref<1x256x128xf32, #tpu.memory_space<vmem>>, vector<1x16x128xf32>
      %121 = vector.shape_cast %120 : vector<1x16x128xf32> to vector<16x128xf32>
      %122 = arith.truncf %121 : vector<16x128xf32> to vector<16x128xbf16>
      %c0_57 = arith.constant 0 : index
      %c0_58 = arith.constant 0 : index
      %123 = vector.load %arg3[%c0_57, %c0_58] : memref<128x128xbf16, #tpu.memory_space<vmem>>, vector<128x128xbf16>
      %cst_59 = arith.constant dense<0.000000e+00> : vector<16x128xf32>
      %124 = tpu.matmul %122, %123, %cst_59 {dimension_numbers = #tpu.dot_dimension_numbers<[1], [0], [0], [1], [0, 0, 1, 1], [], []>} : vector<16x128xbf16>, vector<128x128xbf16>, vector<16x128xf32> -> vector<16x128xf32>
      %c0_60 = arith.constant 0 : index
      %c0_61 = arith.constant 0 : index
      %125 = vector.load %arg5[%c0_60, %c0_61] : memref<1x128xf32, #tpu.memory_space<vmem>>, vector<1x128xf32>
      %126 = vector.broadcast %125 : vector<1x128xf32> to vector<16x128xf32>
      %127 = arith.mulf %124, %126 : vector<16x128xf32>
      %c0_62 = arith.constant 0 : index
      %c0_63 = arith.constant 0 : index
      %128 = vector.load %arg6[%c0_62, %c0_63] : memref<1x128xf32, #tpu.memory_space<vmem>>, vector<1x128xf32>
      %129 = vector.broadcast %128 : vector<1x128xf32> to vector<16x128xf32>
      %130 = arith.addf %127, %129 : vector<16x128xf32>
      %cst_64 = arith.constant 0.000000e+00 : f32
      %131 = vector.broadcast %cst_64 : f32 to vector<16x128xf32>
      %132 = arith.maximumf %130, %131 : vector<16x128xf32>
      %c0_65 = arith.constant 0 : index
      %c0_66 = arith.constant 0 : index
      %133 = vector.load %arg10[%c0_65, %c0_66] : memref<288x128xf32, #tpu.memory_space<vmem>>, vector<16x128xf32>
      tpu.vector_store %arg10[%c0_65, %c0_66], %132 {strides = array<i32>} : memref<288x128xf32, #tpu.memory_space<vmem>>, vector<16x128xf32>,
    } else {
    }
    %c0_i32_10 = arith.constant 0 : i32
    %20 = arith.cmpi eq, %arg1, %c0_i32_10 : i32
    %21 = arith.extui %20 : i1 to i32
    %c0_i32_11 = arith.constant 0 : i32
    %22 = arith.cmpi ne, %21, %c0_i32_11 : i32
    scf.if %22 {
      %cst_54 = arith.constant 0.000000e+00 : f32
      %118 = vector.broadcast %cst_54 : f32 to vector<16x128xf32>
      %c0_55 = arith.constant 0 : index
      %c0_56 = arith.constant 0 : index
      %119 = vector.load %arg10[%c0_55, %c0_56] : memref<288x128xf32, #tpu.memory_space<vmem>>, vector<16x128xf32>
      tpu.vector_store %arg10[%c0_55, %c0_56], %118 {strides = array<i32>} : memref<288x128xf32, #tpu.memory_space<vmem>>, vector<16x128xf32>,
    } else {
    }
    %c0_i32_12 = arith.constant 0 : i32
    %23 = arith.cmpi slt, %arg1, %c0_i32_12 : i32
    %24 = arith.extui %23 : i1 to i32
    %c0_i32_13 = arith.constant 0 : i32
    %25 = arith.cmpi ne, %24, %c0_i32_13 : i32
    scf.if %25 {
      %c256_i32_54 = arith.constant 256 : i32
      %118 = arith.addi %1, %c256_i32_54 : i32
      %c0_55 = arith.constant 0 : index
      %119 = arith.index_cast %118 : i32 to index
      %c0_56 = arith.constant 0 : index
      %120 = vector.load %arg2[%c0_55, %119, %c0_56] : memref<1x256x128xf32, #tpu.memory_space<vmem>>, vector<1x16x128xf32>
      %121 = vector.shape_cast %120 : vector<1x16x128xf32> to vector<16x128xf32>
      %122 = arith.truncf %121 : vector<16x128xf32> to vector<16x128xbf16>
      %c0_57 = arith.constant 0 : index
      %c0_58 = arith.constant 0 : index
      %123 = vector.load %arg3[%c0_57, %c0_58] : memref<128x128xbf16, #tpu.memory_space<vmem>>, vector<128x128xbf16>
      %cst_59 = arith.constant dense<0.000000e+00> : vector<16x128xf32>
      %124 = tpu.matmul %122, %123, %cst_59 {dimension_numbers = #tpu.dot_dimension_numbers<[1], [0], [0], [1], [0, 0, 1, 1], [], []>} : vector<16x128xbf16>, vector<128x128xbf16>, vector<16x128xf32> -> vector<16x128xf32>
      %c0_60 = arith.constant 0 : index
      %c0_61 = arith.constant 0 : index
      %125 = vector.load %arg5[%c0_60, %c0_61] : memref<1x128xf32, #tpu.memory_space<vmem>>, vector<1x128xf32>
      %126 = vector.broadcast %125 : vector<1x128xf32> to vector<16x128xf32>
      %127 = arith.mulf %124, %126 : vector<16x128xf32>
      %c0_62 = arith.constant 0 : index
      %c0_63 = arith.constant 0 : index
      %128 = vector.load %arg6[%c0_62, %c0_63] : memref<1x128xf32, #tpu.memory_space<vmem>>, vector<1x128xf32>
      %129 = vector.broadcast %128 : vector<1x128xf32> to vector<16x128xf32>
      %130 = arith.addf %127, %129 : vector<16x128xf32>
      %cst_64 = arith.constant 0.000000e+00 : f32
      %131 = vector.broadcast %cst_64 : f32 to vector<16x128xf32>
      %132 = arith.maximumf %130, %131 : vector<16x128xf32>
      %c272 = arith.constant 272 : index
      %c0_65 = arith.constant 0 : index
      %133 = vector.load %arg10[%c272, %c0_65] : memref<288x128xf32, #tpu.memory_space<vmem>>, vector<16x128xf32>
      tpu.vector_store %arg10[%c272, %c0_65], %132 {strides = array<i32>} : memref<288x128xf32, #tpu.memory_space<vmem>>, vector<16x128xf32>,
    } else {
    }
    %c0_i32_14 = arith.constant 0 : i32
    %26 = arith.cmpi eq, %arg1, %c0_i32_14 : i32
    %27 = arith.extui %26 : i1 to i32
    %c0_i32_15 = arith.constant 0 : i32
    %28 = arith.cmpi ne, %27, %c0_i32_15 : i32
    scf.if %28 {
      %cst_54 = arith.constant 0.000000e+00 : f32
      %118 = vector.broadcast %cst_54 : f32 to vector<16x128xf32>
      %c272 = arith.constant 272 : index
      %c0_55 = arith.constant 0 : index
      %119 = vector.load %arg10[%c272, %c0_55] : memref<288x128xf32, #tpu.memory_space<vmem>>, vector<16x128xf32>
      tpu.vector_store %arg10[%c272, %c0_55], %118 {strides = array<i32>} : memref<288x128xf32, #tpu.memory_space<vmem>>, vector<16x128xf32>,
    } else {
    }
    %29 = tpu.iota {dimensions = array<i32: 0>} : vector<256x1xi32>
    %c16_i32 = arith.constant 16 : i32
    %c0_i32_16 = arith.constant 0 : i32
    %30 = arith.cmpi eq, %c16_i32, %c0_i32_16 : i32
    %c1_i32 = arith.constant 1 : i32
    %31 = arith.select %30, %c1_i32, %c16_i32 : i32
    %32 = vector.broadcast %31 : i32 to vector<256x1xi32>
    %33 = arith.remsi %29, %32 : vector<256x1xi32>
    %c0_i32_17 = arith.constant 0 : i32
    %34 = vector.broadcast %c0_i32_17 : i32 to vector<256x1xi32>
    %35 = arith.cmpi ne, %33, %34 : vector<256x1xi32>
    %c0_i32_18 = arith.constant 0 : i32
    %36 = vector.broadcast %c0_i32_18 : i32 to vector<256x1xi32>
    %37 = arith.cmpi slt, %33, %36 : vector<256x1xi32>
    %c0_i32_19 = arith.constant 0 : i32
    %38 = arith.cmpi slt, %31, %c0_i32_19 : i32
    %39 = vector.broadcast %38 : i1 to vector<256x1xi1>
    %40 = vector.broadcast %39 : vector<256x1xi1> to vector<256x1xi1>
    %41 = arith.xori %37, %40 : vector<256x1xi1>
    %42 = arith.andi %41, %35 : vector<256x1xi1>
    %43 = vector.broadcast %31 : i32 to vector<256x1xi32>
    %44 = arith.addi %33, %43 : vector<256x1xi32>
    %45 = arith.select %42, %44, %33 : vector<256x1xi1>, vector<256x1xi32>
    %c0_i32_20 = arith.constant 0 : i32
    %46 = vector.broadcast %c0_i32_20 : i32 to vector<256x1xi32>
    %47 = arith.cmpi sgt, %45, %46 : vector<256x1xi32>
    %c15_i32 = arith.constant 15 : i32
    %48 = vector.broadcast %c15_i32 : i32 to vector<256x1xi32>
    %49 = arith.cmpi slt, %45, %48 : vector<256x1xi32>
    %c0_21 = arith.constant 0 : index
    %c0_22 = arith.constant 0 : index
    %50 = vector.load %arg10[%c0_21, %c0_22] : memref<288x128xf32, #tpu.memory_space<vmem>>, vector<256x128xf32>
    %51 = arith.truncf %50 : vector<256x128xf32> to vector<256x128xbf16>
    %c1_i32_23 = arith.constant 1 : i32
    %52 = tpu.dynamic_rotate %50 by %c1_i32_23 dim 0 : vector<256x128xf32>, i32 -> vector<256x128xf32>
    %53 = arith.truncf %52 : vector<256x128xf32> to vector<256x128xbf16>
    %cst_24 = arith.constant 0.000000e+00 : bf16
    %54 = vector.shape_cast %47 : vector<256x1xi1> to vector<256x1xi1>
    %55 = vector.broadcast %54 : vector<256x1xi1> to vector<256x128xi1>
    %56 = vector.broadcast %cst_24 : bf16 to vector<256x128xbf16>
    %57 = arith.select %55, %53, %56 : vector<256x128xi1>, vector<256x128xbf16>
    %c255_i32 = arith.constant 255 : i32
    %58 = tpu.dynamic_rotate %50 by %c255_i32 dim 0 : vector<256x128xf32>, i32 -> vector<256x128xf32>
    %59 = arith.truncf %58 : vector<256x128xf32> to vector<256x128xbf16>
    %cst_25 = arith.constant 0.000000e+00 : bf16
    %60 = vector.shape_cast %49 : vector<256x1xi1> to vector<256x1xi1>
    %61 = vector.broadcast %60 : vector<256x1xi1> to vector<256x128xi1>
    %62 = vector.broadcast %cst_25 : bf16 to vector<256x128xbf16>
    %63 = arith.select %61, %59, %62 : vector<256x128xi1>, vector<256x128xbf16>
    %64 = tpu.concatenate %57, %51, %63 in 1 : vector<256x128xbf16>, vector<256x128xbf16>, vector<256x128xbf16> -> vector<256x384xbf16>
    %c0_26 = arith.constant 0 : index
    %c0_27 = arith.constant 0 : index
    %65 = vector.load %arg4[%c0_26, %c0_27] : memref<1152x128xbf16, #tpu.memory_space<vmem>>, vector<384x128xbf16>
    %cst_28 = arith.constant dense<0.000000e+00> : vector<256x128xf32>
    %66 = tpu.matmul %64, %65, %cst_28 {dimension_numbers = #tpu.dot_dimension_numbers<[1], [0], [0], [1], [0, 0, 1, 1], [], []>} : vector<256x384xbf16>, vector<384x128xbf16>, vector<256x128xf32> -> vector<256x128xf32>
    %c16_29 = arith.constant 16 : index
    %c0_30 = arith.constant 0 : index
    %67 = vector.load %arg10[%c16_29, %c0_30] : memref<288x128xf32, #tpu.memory_space<vmem>>, vector<256x128xf32>
    %68 = arith.truncf %67 : vector<256x128xf32> to vector<256x128xbf16>
    %c1_i32_31 = arith.constant 1 : i32
    %69 = tpu.dynamic_rotate %67 by %c1_i32_31 dim 0 : vector<256x128xf32>, i32 -> vector<256x128xf32>
    %70 = arith.truncf %69 : vector<256x128xf32> to vector<256x128xbf16>
    %cst_32 = arith.constant 0.000000e+00 : bf16
    %71 = vector.shape_cast %47 : vector<256x1xi1> to vector<256x1xi1>
    %72 = vector.broadcast %71 : vector<256x1xi1> to vector<256x128xi1>
    %73 = vector.broadcast %cst_32 : bf16 to vector<256x128xbf16>
    %74 = arith.select %72, %70, %73 : vector<256x128xi1>, vector<256x128xbf16>
    %c255_i32_33 = arith.constant 255 : i32
    %75 = tpu.dynamic_rotate %67 by %c255_i32_33 dim 0 : vector<256x128xf32>, i32 -> vector<256x128xf32>
    %76 = arith.truncf %75 : vector<256x128xf32> to vector<256x128xbf16>
    %cst_34 = arith.constant 0.000000e+00 : bf16
    %77 = vector.shape_cast %49 : vector<256x1xi1> to vector<256x1xi1>
    %78 = vector.broadcast %77 : vector<256x1xi1> to vector<256x128xi1>
    %79 = vector.broadcast %cst_34 : bf16 to vector<256x128xbf16>
    %80 = arith.select %78, %76, %79 : vector<256x128xi1>, vector<256x128xbf16>
    %81 = tpu.concatenate %74, %68, %80 in 1 : vector<256x128xbf16>, vector<256x128xbf16>, vector<256x128xbf16> -> vector<256x384xbf16>
    %c384 = arith.constant 384 : index
    %c0_35 = arith.constant 0 : index
    %82 = vector.load %arg4[%c384, %c0_35] : memref<1152x128xbf16, #tpu.memory_space<vmem>>, vector<384x128xbf16>
    %cst_36 = arith.constant dense<0.000000e+00> : vector<256x128xf32>
    %83 = tpu.matmul %81, %82, %cst_36 {dimension_numbers = #tpu.dot_dimension_numbers<[1], [0], [0], [1], [0, 0, 1, 1], [], []>} : vector<256x384xbf16>, vector<384x128xbf16>, vector<256x128xf32> -> vector<256x128xf32>
    %84 = arith.addf %66, %83 : vector<256x128xf32>
    %c32 = arith.constant 32 : index
    %c0_37 = arith.constant 0 : index
    %85 = vector.load %arg10[%c32, %c0_37] : memref<288x128xf32, #tpu.memory_space<vmem>>, vector<256x128xf32>
    %86 = arith.truncf %85 : vector<256x128xf32> to vector<256x128xbf16>
    %c1_i32_38 = arith.constant 1 : i32
    %87 = tpu.dynamic_rotate %85 by %c1_i32_38 dim 0 : vector<256x128xf32>, i32 -> vector<256x128xf32>
    %88 = arith.truncf %87 : vector<256x128xf32> to vector<256x128xbf16>
    %cst_39 = arith.constant 0.000000e+00 : bf16
    %89 = vector.shape_cast %47 : vector<256x1xi1> to vector<256x1xi1>
    %90 = vector.broadcast %89 : vector<256x1xi1> to vector<256x128xi1>
    %91 = vector.broadcast %cst_39 : bf16 to vector<256x128xbf16>
    %92 = arith.select %90, %88, %91 : vector<256x128xi1>, vector<256x128xbf16>
    %c255_i32_40 = arith.constant 255 : i32
    %93 = tpu.dynamic_rotate %85 by %c255_i32_40 dim 0 : vector<256x128xf32>, i32 -> vector<256x128xf32>
    %94 = arith.truncf %93 : vector<256x128xf32> to vector<256x128xbf16>
    %cst_41 = arith.constant 0.000000e+00 : bf16
    %95 = vector.shape_cast %49 : vector<256x1xi1> to vector<256x1xi1>
    %96 = vector.broadcast %95 : vector<256x1xi1> to vector<256x128xi1>
    %97 = vector.broadcast %cst_41 : bf16 to vector<256x128xbf16>
    %98 = arith.select %96, %94, %97 : vector<256x128xi1>, vector<256x128xbf16>
    %99 = tpu.concatenate %92, %86, %98 in 1 : vector<256x128xbf16>, vector<256x128xbf16>, vector<256x128xbf16> -> vector<256x384xbf16>
    %c768 = arith.constant 768 : index
    %c0_42 = arith.constant 0 : index
    %100 = vector.load %arg4[%c768, %c0_42] : memref<1152x128xbf16, #tpu.memory_space<vmem>>, vector<384x128xbf16>
    %cst_43 = arith.constant dense<0.000000e+00> : vector<256x128xf32>
    %101 = tpu.matmul %99, %100, %cst_43 {dimension_numbers = #tpu.dot_dimension_numbers<[1], [0], [0], [1], [0, 0, 1, 1], [], []>} : vector<256x384xbf16>, vector<384x128xbf16>, vector<256x128xf32> -> vector<256x128xf32>
    %102 = arith.addf %84, %101 : vector<256x128xf32>
    %c0_44 = arith.constant 0 : index
    %103 = arith.index_cast %1 : i32 to index
    %c0_45 = arith.constant 0 : index
    %104 = vector.load %arg2[%c0_44, %103, %c0_45] : memref<1x256x128xf32, #tpu.memory_space<vmem>>, vector<1x256x128xf32>
    %105 = vector.shape_cast %104 : vector<1x256x128xf32> to vector<256x128xf32>
    %c0_46 = arith.constant 0 : index
    %c0_47 = arith.constant 0 : index
    %106 = vector.load %arg7[%c0_46, %c0_47] : memref<1x128xf32, #tpu.memory_space<vmem>>, vector<1x128xf32>
    %107 = vector.broadcast %106 : vector<1x128xf32> to vector<256x128xf32>
    %108 = arith.mulf %102, %107 : vector<256x128xf32>
    %c0_48 = arith.constant 0 : index
    %c0_49 = arith.constant 0 : index
    %109 = vector.load %arg8[%c0_48, %c0_49] : memref<1x128xf32, #tpu.memory_space<vmem>>, vector<1x128xf32>
    %110 = vector.broadcast %109 : vector<1x128xf32> to vector<256x128xf32>
    %111 = arith.addf %108, %110 : vector<256x128xf32>
    %112 = arith.addf %111, %105 : vector<256x128xf32>
    %cst_50 = arith.constant 0.000000e+00 : f32
    %113 = vector.broadcast %cst_50 : f32 to vector<256x128xf32>
    %114 = arith.maximumf %112, %113 : vector<256x128xf32>
    %c0_51 = arith.constant 0 : index
    %c0_52 = arith.constant 0 : index
    %c0_53 = arith.constant 0 : index
    %115 = vector.load %arg9[%c0_51, %c0_52, %c0_53] : memref<1x256x128xf32, #tpu.memory_space<vmem>>, vector<1x256x128xf32>
    %116 = vector.shape_cast %115 : vector<1x256x128xf32> to vector<256x128xf32>
    %117 = vector.shape_cast %114 : vector<256x128xf32> to vector<1x256x128xf32>
    tpu.vector_store %arg9[%c0_51, %c0_52, %c0_53], %117 {strides = array<i32>} : memref<1x256x128xf32, #tpu.memory_space<vmem>>, vector<1x256x128xf32>,
    return
  }
  func.func @transform_0(%arg0: i32, %arg1: i32) -> (i32, i32, i32) {
    %c0_i32 = arith.constant 0 : i32
    %c0_i32_0 = arith.constant 0 : i32
    %c0_i32_1 = arith.constant 0 : i32
    return %arg0, %c0_i32, %c0_i32_0 : i32, i32, i32
  }
  func.func @transform_1(%arg0: i32, %arg1: i32) -> (i32, i32) {
    %c0_i32 = arith.constant 0 : i32
    %c0_i32_0 = arith.constant 0 : i32
    %c0_i32_1 = arith.constant 0 : i32
    return %c0_i32, %c0_i32_0 : i32, i32
  }
  func.func @transform_2(%arg0: i32, %arg1: i32) -> (i32, i32) {
    %c0_i32 = arith.constant 0 : i32
    %c0_i32_0 = arith.constant 0 : i32
    %c0_i32_1 = arith.constant 0 : i32
    return %c0_i32, %c0_i32_0 : i32, i32
  }
  func.func @transform_3(%arg0: i32, %arg1: i32) -> (i32, i32) {
    %c0_i32 = arith.constant 0 : i32
    %c0_i32_0 = arith.constant 0 : i32
    %c0_i32_1 = arith.constant 0 : i32
    return %c0_i32, %c0_i32_0 : i32, i32
  }
  func.func @transform_4(%arg0: i32, %arg1: i32) -> (i32, i32) {
    %c0_i32 = arith.constant 0 : i32
    %c0_i32_0 = arith.constant 0 : i32
    %c0_i32_1 = arith.constant 0 : i32
    return %c0_i32, %c0_i32_0 : i32, i32
  }
  func.func @transform_5(%arg0: i32, %arg1: i32) -> (i32, i32) {
    %c0_i32 = arith.constant 0 : i32
    %c0_i32_0 = arith.constant 0 : i32
    %c0_i32_1 = arith.constant 0 : i32
    return %c0_i32, %c0_i32_0 : i32, i32
  }
  func.func @transform_6(%arg0: i32, %arg1: i32) -> (i32, i32) {
    %c0_i32 = arith.constant 0 : i32
    %c0_i32_0 = arith.constant 0 : i32
    %c0_i32_1 = arith.constant 0 : i32
    return %c0_i32, %c0_i32_0 : i32, i32
  }
  func.func @transform_7(%arg0: i32, %arg1: i32) -> (i32, i32, i32) {
    %c0_i32 = arith.constant 0 : i32
    %c0_i32_0 = arith.constant 0 : i32
    return %arg0, %arg1, %c0_i32 : i32, i32, i32
  }
}

</mosaic_0001>

<llo_original>
// kernel: tpu_custom_call.1
$region0: #{tpu_custom_call.1}
  #allocation0 [shape = 'u32[]', space=smem, size = 0x4, offset = 0x4, fixed_abs, tag = 'smem constant byte address 0x4 - core index']
  #allocation1 [shape = 'u32[72,128]{1,0:T(1,128)}', space=vmem, size = 0x9000, scoped, tag = 'internal scratch']
  #allocation2 [shape = 'f32[288,128]{1,0:T(8,128)}', space=vmem, size = 0x24000, scoped, tag = 'scratch operand']
  %s0 = inlined_call_operand.hbm [shape: f32[2,256,128], index: 0, kind: input, shape index: {}]
  %s1 = inlined_call_operand.hbm [shape: bf16[128,128], index: 1, kind: input, shape index: {}]
  %s2 = inlined_call_operand.hbm [shape: bf16[1152,128], index: 2, kind: input, shape index: {}]
  %s3 = inlined_call_operand.vmem [shape: f32[1,128], index: 3, kind: input, shape index: {}]
  %s4 = inlined_call_operand.vmem [shape: f32[1,128], index: 4, kind: input, shape index: {}]
  %s5 = inlined_call_operand.vmem [shape: f32[1,128], index: 5, kind: input, shape index: {}]
  %s6 = inlined_call_operand.vmem [shape: f32[1,128], index: 6, kind: input, shape index: {}]
  %s7 = inlined_call_operand.hbm [shape: f32[2,256,128], index: 7, kind: output, shape index: {}]
  %s8 = sld [smem:[#allocation0]]
  $region89: #{tpu_custom_call.1} parent=0
    _
  %s10 = ssub.s32 1, %s8
  %s11 = scalar_select 0, %s10, %s8
  $region1: #{tpu_custom_call.1} parent=0
    #allocation3 [shape = 'u8[262144]{0}', space=vmem, size = 0x40000, scoped, tag = 'input window, operand 0']
    #allocation4 [shape = 's32[2]{0}', space=sflag, size = 0x8, scoped, tag = 'scoped memory for tpu_custom_call.1']
    #allocation5 [shape = 's32[2]{0}', space=sflag, size = 0x8, scoped, tag = 'scoped memory for tpu_custom_call.1']
    #allocation6 [shape = 'u8[32768]{0}', space=vmem, size = 0x8000, scoped, tag = 'input window, operand 1, single buffered']
    #allocation7 [shape = 's32[1]{0}', space=sflag, size = 0x4, scoped, tag = 'scoped memory for tpu_custom_call.1']
    #allocation8 [shape = 'u8[294912]{0}', space=vmem, size = 0x48000, scoped, tag = 'input window, operand 2, single buffered']
    #allocation9 [shape = 'u8[262144]{0}', space=vmem, size = 0x40000, scoped, tag = 'output window, operand 0']
    %12 = vsyncpa [#allocation4], 0
    %s13 = scalar_lea.sflag [#allocation4], 1
    %14 = vsyncpa %s13, 0
    %15 = vsyncpa [#allocation7], 0
    %16 = vsyncpa [#allocation5], 0
    %s17 = scalar_lea.sflag [#allocation5], 1
    %18 = vsyncpa %s17, 0
    loop: start=0, step=1, limit=4
    $region2: #{tpu_custom_call.1} parent=1 // loop_pre_header
      _
    $region3: #{tpu_custom_call.1} parent=1 // loop_header
      %s20 = sphi 0, %s24
      %p21 = scmp.ge.s32.totalorder %s20, 4
      %s27 = sphi 0, %s39
      %s28 = sphi 0, %s35
      %s29 = sphi 0, %s27
      %s30 = sphi 0, %s28
      %s31 = sphi 0, %s29
      %s32 = sphi 0, %s30
      %s42 = sphi 0, %s44
      %s45 = sphi 0, %s42
      %s46 = sphi 0, %s45
      %s62 = sphi 0, %s46
      %s66 = sphi 0, %s66
      %s68 = sphi 0, %s66
      %s69 = sphi 0, %s68
      %s83 = sphi 0, %s69
      %s87 = sphi 0, %s87
      %s89 = sphi 0, %s87
      %s90 = sphi 0, %s89
      %s104 = sphi 0, %s90
      %s108 = sphi 0, %s108
      %s110 = sphi 0, %s108
      %s111 = sphi 0, %s110
      %s125 = sphi 0, %s111
      %s129 = sphi 0, %s129
      %s131 = sphi 0, %s129
      %s132 = sphi 0, %s131
      %s146 = sphi 0, %s132
      %s150 = sphi 0, %s150
      %s152 = sphi 0, %s150
      %s153 = sphi 0, %s152
      %s167 = sphi 0, %s153
      %s171 = sphi 0, %s171
      %s173 = sphi 0, %s171
      %s174 = sphi 0, %s173
      %s188 = sphi 0, %s174
      %s196 = sphi 0, %s198
      %s199 = sphi 0, %s196
      %s200 = sphi 0, %s199
      %s216 = sphi 0, %s200
    $region4: #{tpu_custom_call.1} parent=1 // loop_header_branch
      %23 = sbr.rel (%p21) target = $region8
    $region5: #{tpu_custom_call.1} parent=1 // loop_body
      %s25 = ssub.s32 %s20, 1
      %s26 = ssub.s32 %s20, 2
      %s33 = sadd.s32 1, %s28
      %p34 = scmp.ge.s32.totalorder %s33, 1
      %s35 = scalar_select %p34, 0, %s33
      %s36 = sadd.s32 1, %s27
      %s37 = scalar_select %p34, %s36, %s27
      %p38 = scmp.ge.s32.totalorder %s37, 2
      %s39 = scalar_select %p38, 0, %s37
      %s40 = ssub.s32 %s27, %s39
      %p41 = scmp.eq.s32.totalorder %s40, 0
      %s43 = sadd.s32 %s42, 1
      %s44 = scalar_select %p41, %s42, %s43
      %p47 = pneg %p41
      %p48 = scmp.eq.s32.totalorder %s20, 1
      %p49 = por %p47, %p48
      %p50 = scmp.ne.s32.totalorder %s42, %s45
      %p51 = scmp.eq.s32.totalorder %s20, 0
      %p52 = por %p50, %p51
      %p53 = scmp.ne.s32.totalorder %s42, %s45
      %p54 = scmp.eq.s32.totalorder %s25, 1
      %p55 = por %p53, %p54
      %p56 = scmp.ne.s32.totalorder %s45, %s46
      %p57 = scmp.eq.s32.totalorder %s25, 0
      %p58 = por %p56, %p57
      %p59 = scmp.ne.s32.totalorder %s45, %s46
      %p60 = scmp.eq.s32.totalorder %s26, 1
      %p61 = por %p59, %p60
      %p63 = scmp.ne.s32.totalorder %s46, %s62
      %p64 = scmp.eq.s32.totalorder %s26, 0
      %p65 = por %p63, %p64
      %s67 = sadd.s32 %s66, 1
      %p70 = scmp.eq.s32.totalorder %s20, 1
      %p71 = scmp.ne.s32.totalorder %s66, %s68
      %p72 = scmp.eq.s32.totalorder %s20, 0
      %p73 = por %p71, %p72
      %p74 = scmp.ne.s32.totalorder %s66, %s68
      %p75 = scmp.eq.s32.totalorder %s25, 1
      %p76 = por %p74, %p75
      %p77 = scmp.ne.s32.totalorder %s68, %s69
      %p78 = scmp.eq.s32.totalorder %s25, 0
      %p79 = por %p77, %p78
      %p80 = scmp.ne.s32.totalorder %s68, %s69
      %p81 = scmp.eq.s32.totalorder %s26, 1
      %p82 = por %p80, %p81
      %p84 = scmp.ne.s32.totalorder %s69, %s83
      %p85 = scmp.eq.s32.totalorder %s26, 0
      %p86 = por %p84, %p85
      %s88 = sadd.s32 %s87, 1
      %p91 = scmp.eq.s32.totalorder %s20, 1
      %p92 = scmp.ne.s32.totalorder %s87, %s89
      %p93 = scmp.eq.s32.totalorder %s20, 0
      %p94 = por %p92, %p93
      %p95 = scmp.ne.s32.totalorder %s87, %s89
      %p96 = scmp.eq.s32.totalorder %s25, 1
      %p97 = por %p95, %p96
      %p98 = scmp.ne.s32.totalorder %s89, %s90
      %p99 = scmp.eq.s32.totalorder %s25, 0
      %p100 = por %p98, %p99
      %p101 = scmp.ne.s32.totalorder %s89, %s90
      %p102 = scmp.eq.s32.totalorder %s26, 1
      %p103 = por %p101, %p102
      %p105 = scmp.ne.s32.totalorder %s90, %s104
      %p106 = scmp.eq.s32.totalorder %s26, 0
      %p107 = por %p105, %p106
      %s109 = sadd.s32 %s108, 1
      %p112 = scmp.eq.s32.totalorder %s20, 1
      %p113 = scmp.ne.s32.totalorder %s108, %s110
      %p114 = scmp.eq.s32.totalorder %s20, 0
      %p115 = por %p113, %p114
      %p116 = scmp.ne.s32.totalorder %s108, %s110
      %p117 = scmp.eq.s32.totalorder %s25, 1
      %p118 = por %p116, %p117
      %p119 = scmp.ne.s32.totalorder %s110, %s111
      %p120 = scmp.eq.s32.totalorder %s25, 0
      %p121 = por %p119, %p120
      %p122 = scmp.ne.s32.totalorder %s110, %s111
      %p123 = scmp.eq.s32.totalorder %s26, 1
      %p124 = por %p122, %p123
      %p126 = scmp.ne.s32.totalorder %s111, %s125
      %p127 = scmp.eq.s32.totalorder %s26, 0
      %p128 = por %p126, %p127
      %s130 = sadd.s32 %s129, 1
      %p133 = scmp.eq.s32.totalorder %s20, 1
      %p134 = scmp.ne.s32.totalorder %s129, %s131
      %p135 = scmp.eq.s32.totalorder %s20, 0
      %p136 = por %p134, %p135
      %p137 = scmp.ne.s32.totalorder %s129, %s131
      %p138 = scmp.eq.s32.totalorder %s25, 1
      %p139 = por %p137, %p138
      %p140 = scmp.ne.s32.totalorder %s131, %s132
      %p141 = scmp.eq.s32.totalorder %s25, 0
      %p142 = por %p140, %p141
      %p143 = scmp.ne.s32.totalorder %s131, %s132
      %p144 = scmp.eq.s32.totalorder %s26, 1
      %p145 = por %p143, %p144
      %p147 = scmp.ne.s32.totalorder %s132, %s146
      %p148 = scmp.eq.s32.totalorder %s26, 0
      %p149 = por %p147, %p148
      %s151 = sadd.s32 %s150, 1
      %p154 = scmp.eq.s32.totalorder %s20, 1
      %p155 = scmp.ne.s32.totalorder %s150, %s152
      %p156 = scmp.eq.s32.totalorder %s20, 0
      %p157 = por %p155, %p156
      %p158 = scmp.ne.s32.totalorder %s150, %s152
      %p159 = scmp.eq.s32.totalorder %s25, 1
      %p160 = por %p158, %p159
      %p161 = scmp.ne.s32.totalorder %s152, %s153
      %p162 = scmp.eq.s32.totalorder %s25, 0
      %p163 = por %p161, %p162
      %p164 = scmp.ne.s32.totalorder %s152, %s153
      %p165 = scmp.eq.s32.totalorder %s26, 1
      %p166 = por %p164, %p165
      %p168 = scmp.ne.s32.totalorder %s153, %s167
      %p169 = scmp.eq.s32.totalorder %s26, 0
      %p170 = por %p168, %p169
      %s172 = sadd.s32 %s171, 1
      %p175 = scmp.eq.s32.totalorder %s20, 1
      %p176 = scmp.ne.s32.totalorder %s171, %s173
      %p177 = scmp.eq.s32.totalorder %s20, 0
      %p178 = por %p176, %p177
      %p179 = scmp.ne.s32.totalorder %s171, %s173
      %p180 = scmp.eq.s32.totalorder %s25, 1
      %p181 = por %p179, %p180
      %p182 = scmp.ne.s32.totalorder %s173, %s174
      %p183 = scmp.eq.s32.totalorder %s25, 0
      %p184 = por %p182, %p183
      %p185 = scmp.ne.s32.totalorder %s173, %s174
      %p186 = scmp.eq.s32.totalorder %s26, 1
      %p187 = por %p185, %p186
      %p189 = scmp.ne.s32.totalorder %s174, %s188
      %p190 = scmp.eq.s32.totalorder %s26, 0
      %p191 = por %p189, %p190
      %s192 = ssub.s32 %s27, %s39
      %s193 = ssub.s32 %s28, %s35
      %s194 = sor.u32 %s192, %s193
      %p195 = scmp.eq.s32.totalorder %s194, 0
      %s197 = sadd.s32 %s196, 1
      %s198 = scalar_select %p195, %s196, %s197
      %p201 = pneg %p195
      %p202 = scmp.eq.s32.totalorder %s20, 1
      %p203 = por %p201, %p202
      %p204 = scmp.ne.s32.totalorder %s196, %s199
      %p205 = scmp.eq.s32.totalorder %s20, 0
      %p206 = por %p204, %p205
      %p207 = scmp.ne.s32.totalorder %s196, %s199
      %p208 = scmp.eq.s32.totalorder %s25, 1
      %p209 = por %p207, %p208
      %p210 = scmp.ne.s32.totalorder %s199, %s200
      %p211 = scmp.eq.s32.totalorder %s25, 0
      %p212 = por %p210, %p211
      %p213 = scmp.ne.s32.totalorder %s199, %s200
      %p214 = scmp.eq.s32.totalorder %s26, 1
      %p215 = por %p213, %p214
      %p217 = scmp.ne.s32.totalorder %s200, %s216
      %p218 = scmp.eq.s32.totalorder %s26, 0
      %p219 = por %p217, %p218
      %p220 = scmp.le.s32.totalorder 1, %s20
      %p221 = scmp.lt.s32.totalorder %s20, 3
      %p222 = pnand %p220, %p221
      %p223 = pneg %p222
      // Predicated region
      $region9: #{tpu_custom_call.1} parent=5 // pred_check
        _
      $region10: #{tpu_custom_call.1} parent=5 // pred_check_branch
        %225 = sbr.rel (%p222) target = $region12
      $region11: #{tpu_custom_call.1} parent=5 // pred_region
        %s226 = ssub.s32 %s20, 1
        // Predicated region
        $region13: #{tpu_custom_call.1} parent=11 // pred_check
          %p227 = pneg %p79
        $region14: #{tpu_custom_call.1} parent=11 // pred_check_branch
          %229 = sbr.rel (%p227) target = $region16
        $region15: #{tpu_custom_call.1} parent=11 // pred_region
          %231 = vsyncadd [#allocation7], 0
          %s232 = sshll.u32 %s1, 4
          %s233 = int_to_ptr.hbm [resolvable:$true] %s232
          %s234 = sshll.u32 [#allocation6], 4
          %s235 = int_to_ptr.vmem [resolvable:$true] %s234
          %240 = dma.hbm_to_vmem [thread:$0]  %s233, 1024, %s235, [#allocation7], 64, 64, 4
        $region16: #{tpu_custom_call.1} parent=11 // pred_fallthru
          _
        // Predicated region
        $region17: #{tpu_custom_call.1} parent=11 // pred_check
          %p241 = pneg %p100
        $region18: #{tpu_custom_call.1} parent=11 // pred_check_branch
          %243 = sbr.rel (%p241) target = $region20
        $region19: #{tpu_custom_call.1} parent=11 // pred_region
          %245 = vsyncadd [#allocation7], 0
          %s246 = sshll.u32 %s2, 4
          %s247 = int_to_ptr.hbm [resolvable:$true] %s246
          %s248 = sshll.u32 [#allocation8], 4
          %s249 = int_to_ptr.vmem [resolvable:$true] %s248
          %254 = dma.hbm_to_vmem [thread:$0]  %s247, 9216, %s249, [#allocation7], 64, 64, 4
        $region20: #{tpu_custom_call.1} parent=11 // pred_fallthru
          _
        // Predicated region
        $region21: #{tpu_custom_call.1} parent=11 // pred_check
          %p255 = pneg %p121
        $region22: #{tpu_custom_call.1} parent=11 // pred_check_branch
          %257 = sbr.rel (%p255) target = $region24
        $region23: #{tpu_custom_call.1} parent=11 // pred_region
          _
        $region24: #{tpu_custom_call.1} parent=11 // pred_fallthru
          _
        // Predicated region
        $region25: #{tpu_custom_call.1} parent=11 // pred_check
          %p258 = pneg %p142
        $region26: #{tpu_custom_call.1} parent=11 // pred_check_branch
          %260 = sbr.rel (%p258) target = $region28
        $region27: #{tpu_custom_call.1} parent=11 // pred_region
          _
        $region28: #{tpu_custom_call.1} parent=11 // pred_fallthru
          _
        // Predicated region
        $region29: #{tpu_custom_call.1} parent=11 // pred_check
          %p261 = pneg %p163
        $region30: #{tpu_custom_call.1} parent=11 // pred_check_branch
          %263 = sbr.rel (%p261) target = $region32
        $region31: #{tpu_custom_call.1} parent=11 // pred_region
          _
        $region32: #{tpu_custom_call.1} parent=11 // pred_fallthru
          _
        // Predicated region
        $region33: #{tpu_custom_call.1} parent=11 // pred_check
          %p264 = pneg %p184
        $region34: #{tpu_custom_call.1} parent=11 // pred_check_branch
          %266 = sbr.rel (%p264) target = $region36
        $region35: #{tpu_custom_call.1} parent=11 // pred_region
          _
        $region36: #{tpu_custom_call.1} parent=11 // pred_fallthru
          _
      $region12: #{tpu_custom_call.1} parent=5 // pred_fallthru
        _
      %p267 = scmp.lt.s32.totalorder %s20, 2
      // Predicated region
      $region37: #{tpu_custom_call.1} parent=5 // pred_check
        %p268 = pneg %p267
      $region38: #{tpu_custom_call.1} parent=5 // pred_check_branch
        %270 = sbr.rel (%p268) target = $region40
      $region39: #{tpu_custom_call.1} parent=5 // pred_region
        // Predicated region
        $region41: #{tpu_custom_call.1} parent=39 // pred_check
          %p271 = pneg %p52
        $region42: #{tpu_custom_call.1} parent=39 // pred_check_branch
          %273 = sbr.rel (%p271) target = $region44
        $region43: #{tpu_custom_call.1} parent=39 // pred_region
          %s274 = sand.u32 %s42, 1
          %s275 = scalar_lea.sflag [#allocation4], %s274
          %s276 = sand.u32 %s42, 1
          %s277 = smul.addr %s276, 256
          %s278 = scalar_lea.vmem [#allocation3], %s277
          %280 = vsyncadd %s275, 0
          %s281 = smul.addr %s27, 32
          %s282 = smul.addr %s281, 8
          %s283 = scalar_lea.hbm %s0, %s282
          %s284 = sshll.u32 %s283, 4
          %s285 = int_to_ptr.hbm [resolvable:$true] %s284
          %s286 = sshll.u32 %s278, 4
          %s287 = int_to_ptr.vmem [resolvable:$true] %s286
          %292 = dma.hbm_to_vmem [thread:$0]  %s285, 4096, %s287, %s275, 128, 128, 8
        $region44: #{tpu_custom_call.1} parent=39 // pred_fallthru
          _
      $region40: #{tpu_custom_call.1} parent=5 // pred_fallthru
        _
      %p293 = scmp.le.s32.totalorder 1, %s20
      %p294 = scmp.lt.s32.totalorder %s20, 3
      %p295 = pnand %p293, %p294
      %p296 = pneg %p295
      // Predicated region
      $region45: #{tpu_custom_call.1} parent=5 // pred_check
        _
      $region46: #{tpu_custom_call.1} parent=5 // pred_check_branch
        %298 = sbr.rel (%p295) target = $region48
      $region47: #{tpu_custom_call.1} parent=5 // pred_region
        %s299 = ssub.s32 %s20, 1
        %s300 = sand.u32 %s45, 1
        %s301 = scalar_lea.sflag [#allocation4], %s300
        %s302 = sand.u32 %s45, 1
        %s303 = smul.addr %s302, 256
        %s304 = scalar_lea.vmem [#allocation3], %s303
        // Predicated region
        $region49: #{tpu_custom_call.1} parent=47 // pred_check
          %p305 = pneg %p58
        $region50: #{tpu_custom_call.1} parent=47 // pred_check_branch
          %307 = sbr.rel (%p305) target = $region52
        $region51: #{tpu_custom_call.1} parent=47 // pred_region
          %309 = dma.done %s301, 4096
        $region52: #{tpu_custom_call.1} parent=47 // pred_fallthru
          _
        // Predicated region
        $region53: #{tpu_custom_call.1} parent=47 // pred_check
          %p310 = pneg %p79
        $region54: #{tpu_custom_call.1} parent=47 // pred_check_branch
          %312 = sbr.rel (%p310) target = $region56
        $region55: #{tpu_custom_call.1} parent=47 // pred_region
          %314 = dma.done [#allocation7], 1024
        $region56: #{tpu_custom_call.1} parent=47 // pred_fallthru
          _
        // Predicated region
        $region57: #{tpu_custom_call.1} parent=47 // pred_check
          %p315 = pneg %p100
        $region58: #{tpu_custom_call.1} parent=47 // pred_check_branch
          %317 = sbr.rel (%p315) target = $region60
        $region59: #{tpu_custom_call.1} parent=47 // pred_region
          %319 = dma.done [#allocation7], 9216
        $region60: #{tpu_custom_call.1} parent=47 // pred_fallthru
          _
        %s320 = sand.u32 %s45, 1
        %s321 = scalar_lea.sflag [#allocation4], %s320
        %s322 = sand.u32 %s45, 1
        %s323 = smul.addr %s322, 256
        %s324 = scalar_lea.vmem [#allocation3], %s323
        %p325 = pneg %p58
        %p326 = pneg %p55
        %p327 = pneg %p79
        %p328 = pneg %p76
        %p329 = pneg %p100
        %p330 = pneg %p97
        %p331 = pneg %p121
        %p332 = pneg %p118
        %p333 = pneg %p142
        %p334 = pneg %p139
        %p335 = pneg %p163
        %p336 = pneg %p160
        %p337 = pneg %p184
        %p338 = pneg %p181
        %p339 = pneg %p212
        %p340 = pneg %p209
        %s341 = sand.u32 %s199, 1
        %s342 = scalar_lea.sflag [#allocation5], %s341
        %s343 = sand.u32 %s199, 1
        %s344 = smul.addr %s343, 256
        %s345 = scalar_lea.vmem [#allocation9], %s344
        %s346 = smul.u32 32, %s30
        %s348 = smul.u32 %s30, 256
        %s349 = scalar_lea.vmem %s304, %s348 [#allocation3]
        %v350 = vld [vmem:[%s349] sm:$0xff]
        %v351 = vld [vmem:[%s349 + $0x8] sm:$0xff]
        %v352 = vld [vmem:[%s349 + $0x10] sm:$0xff]
        %v353 = vld [vmem:[%s349 + $0x18] sm:$0xff]
        %v354 = vld [vmem:[%s349 + $0x20] sm:$0xff]
        %v355 = vld [vmem:[%s349 + $0x28] sm:$0xff]
        %v356 = vld [vmem:[%s349 + $0x30] sm:$0xff]
        %v357 = vld [vmem:[%s349 + $0x38] sm:$0xff]
        %v358 = vld [vmem:[%s349 + $0x40] sm:$0xff]
        %v359 = vld [vmem:[%s349 + $0x48] sm:$0xff]
        %v360 = vld [vmem:[%s349 + $0x50] sm:$0xff]
        %v361 = vld [vmem:[%s349 + $0x58] sm:$0xff]
        %v362 = vld [vmem:[%s349 + $0x60] sm:$0xff]
        %v363 = vld [vmem:[%s349 + $0x68] sm:$0xff]
        %v364 = vld [vmem:[%s349 + $0x70] sm:$0xff]
        %v365 = vld [vmem:[%s349 + $0x78] sm:$0xff]
        %v366 = vld [vmem:[%s349 + $0x80] sm:$0xff]
        %v367 = vld [vmem:[%s349 + $0x88] sm:$0xff]
        %v368 = vld [vmem:[%s349 + $0x90] sm:$0xff]
        %v369 = vld [vmem:[%s349 + $0x98] sm:$0xff]
        %v370 = vld [vmem:[%s349 + $0xa0] sm:$0xff]
        %v371 = vld [vmem:[%s349 + $0xa8] sm:$0xff]
        %v372 = vld [vmem:[%s349 + $0xb0] sm:$0xff]
        %v373 = vld [vmem:[%s349 + $0xb8] sm:$0xff]
        %v374 = vld [vmem:[%s349 + $0xc0] sm:$0xff]
        %v375 = vld [vmem:[%s349 + $0xc8] sm:$0xff]
        %v376 = vld [vmem:[%s349 + $0xd0] sm:$0xff]
        %v377 = vld [vmem:[%s349 + $0xd8] sm:$0xff]
        %v378 = vld [vmem:[%s349 + $0xe0] sm:$0xff]
        %v379 = vld [vmem:[%s349 + $0xe8] sm:$0xff]
        %v380 = vld [vmem:[%s349 + $0xf0] sm:$0xff]
        %v381 = vld [vmem:[%s349 + $0xf8] sm:$0xff]
        %v382 = vpack.c.bf16 %v351, %v350
        %v383 = vpack.c.bf16 %v353, %v352
        %v384 = vpack.c.bf16 %v355, %v354
        %v385 = vpack.c.bf16 %v357, %v356
        %v386 = vpack.c.bf16 %v359, %v358
        %v387 = vpack.c.bf16 %v361, %v360
        %v388 = vpack.c.bf16 %v363, %v362
        %v389 = vpack.c.bf16 %v365, %v364
        %v390 = vpack.c.bf16 %v367, %v366
        %v391 = vpack.c.bf16 %v369, %v368
        %v392 = vpack.c.bf16 %v371, %v370
        %v393 = vpack.c.bf16 %v373, %v372
        %v394 = vpack.c.bf16 %v375, %v374
        %v395 = vpack.c.bf16 %v377, %v376
        %v396 = vpack.c.bf16 %v379, %v378
        %v397 = vpack.c.bf16 %v381, %v380
        %v398 = vld [vmem:[#allocation6] sm:$0xf]
        %v399 = vld [vmem:[#allocation6 + $0x4] sm:$0xf]
        %v400 = vld [vmem:[#allocation6 + $0x8] sm:$0xf]
        %v401 = vld [vmem:[#allocation6 + $0xc] sm:$0xf]
        %v402 = vld [vmem:[#allocation6 + $0x10] sm:$0xf]
        %v403 = vld [vmem:[#allocation6 + $0x14] sm:$0xf]
        %v404 = vld [vmem:[#allocation6 + $0x18] sm:$0xf]
        %v405 = vld [vmem:[#allocation6 + $0x1c] sm:$0xf]
        %v406 = vld [vmem:[#allocation6 + $0x20] sm:$0xf]
        %v407 = vld [vmem:[#allocation6 + $0x24] sm:$0xf]
        %v408 = vld [vmem:[#allocation6 + $0x28] sm:$0xf]
        %v409 = vld [vmem:[#allocation6 + $0x2c] sm:$0xf]
        %v410 = vld [vmem:[#allocation6 + $0x30] sm:$0xf]
        %v411 = vld [vmem:[#allocation6 + $0x34] sm:$0xf]
        %v412 = vld [vmem:[#allocation6 + $0x38] sm:$0xf]
        %v413 = vld [vmem:[#allocation6 + $0x3c] sm:$0xf]
        %v430 = vunpack.c.l.b16 %v398
        %v431 = vunpack.c.l.b16 %v399
        %v432 = vunpack.c.l.b16 %v400
        %v433 = vunpack.c.l.b16 %v401
        %v434 = vunpack.c.l.b16 %v402
        %v435 = vunpack.c.l.b16 %v403
        %v436 = vunpack.c.l.b16 %v404
        %v437 = vunpack.c.l.b16 %v405
        %v438 = vunpack.c.l.b16 %v406
        %v439 = vunpack.c.l.b16 %v407
        %v440 = vunpack.c.l.b16 %v408
        %v441 = vunpack.c.l.b16 %v409
        %v442 = vunpack.c.l.b16 %v410
        %v443 = vunpack.c.l.b16 %v411
        %v444 = vunpack.c.l.b16 %v412
        %v445 = vunpack.c.l.b16 %v413
        %v446 = vpack.c.b16 %v431, %v430
        %v447 = vpack.c.b16 %v433, %v432
        %v448 = vpack.c.b16 %v435, %v434
        %v449 = vpack.c.b16 %v437, %v436
        %v450 = vpack.c.b16 %v439, %v438
        %v451 = vpack.c.b16 %v441, %v440
        %v452 = vpack.c.b16 %v443, %v442
        %v453 = vpack.c.b16 %v445, %v444
        %462 = vmatpush.bf16.msra.mxu0 %v453
        %463 = vmatpush.bf16.msra.mxu0 %v452
        %464 = vmatpush.bf16.msra.mxu0 %v451
        %465 = vmatpush.bf16.msra.mxu0 %v450
        %466 = vmatpush.bf16.msra.mxu0 %v449
        %467 = vmatpush.bf16.msra.mxu0 %v448
        %468 = vmatpush.bf16.msra.mxu0 %v447
        %469 = vmatpush.bf16.msra.mxu0 %v446
        %470 = vmatmul.bf16.gmra.mxu0 %v382
        %v471 = vpop.f32.mrf.mxu0
        %v472 = vadd.f32 0.0, %v471
        %v473 = vpop.f32.mrf.mxu0
        %v474 = vadd.f32 0.0, %v473
        %475 = vmatmul.bf16.gmra.mxu0 %v383
        %v476 = vpop.f32.mrf.mxu0
        %v477 = vadd.f32 0.0, %v476
        %v478 = vpop.f32.mrf.mxu0
        %v479 = vadd.f32 0.0, %v478
        %480 = vmatmul.bf16.gmra.mxu0 %v384
        %v481 = vpop.f32.mrf.mxu0
        %v482 = vadd.f32 0.0, %v481
        %v483 = vpop.f32.mrf.mxu0
        %v484 = vadd.f32 0.0, %v483
        %485 = vmatmul.bf16.gmra.mxu0 %v385
        %v486 = vpop.f32.mrf.mxu0
        %v487 = vadd.f32 0.0, %v486
        %v488 = vpop.f32.mrf.mxu0
        %v489 = vadd.f32 0.0, %v488
        %490 = vmatmul.bf16.gmra.mxu0 %v386
        %v491 = vpop.f32.mrf.mxu0
        %v492 = vadd.f32 0.0, %v491
        %v493 = vpop.f32.mrf.mxu0
        %v494 = vadd.f32 0.0, %v493
        %495 = vmatmul.bf16.gmra.mxu0 %v387
        %v496 = vpop.f32.mrf.mxu0
        %v497 = vadd.f32 0.0, %v496
        %v498 = vpop.f32.mrf.mxu0
        %v499 = vadd.f32 0.0, %v498
        %500 = vmatmul.bf16.gmra.mxu0 %v388
        %v501 = vpop.f32.mrf.mxu0
        %v502 = vadd.f32 0.0, %v501
        %v503 = vpop.f32.mrf.mxu0
        %v504 = vadd.f32 0.0, %v503
        %505 = vmatmul.bf16.gmra.mxu0 %v389
        %v506 = vpop.f32.mrf.mxu0
        %v507 = vadd.f32 0.0, %v506
        %v508 = vpop.f32.mrf.mxu0
        %v509 = vadd.f32 0.0, %v508
        %510 = vmatmul.bf16.gmra.mxu0 %v390
        %v511 = vpop.f32.mrf.mxu0
        %v512 = vadd.f32 0.0, %v511
        %v513 = vpop.f32.mrf.mxu0
        %v514 = vadd.f32 0.0, %v513
        %515 = vmatmul.bf16.gmra.mxu0 %v391
        %v516 = vpop.f32.mrf.mxu0
        %v517 = vadd.f32 0.0, %v516
        %v518 = vpop.f32.mrf.mxu0
        %v519 = vadd.f32 0.0, %v518
        %520 = vmatmul.bf16.gmra.mxu0 %v392
        %v521 = vpop.f32.mrf.mxu0
        %v522 = vadd.f32 0.0, %v521
        %v523 = vpop.f32.mrf.mxu0
        %v524 = vadd.f32 0.0, %v523
        %525 = vmatmul.bf16.gmra.mxu0 %v393
        %v526 = vpop.f32.mrf.mxu0
        %v527 = vadd.f32 0.0, %v526
        %v528 = vpop.f32.mrf.mxu0
        %v529 = vadd.f32 0.0, %v528
        %530 = vmatmul.bf16.gmra.mxu0 %v394
        %v531 = vpop.f32.mrf.mxu0
        %v532 = vadd.f32 0.0, %v531
        %v533 = vpop.f32.mrf.mxu0
        %v534 = vadd.f32 0.0, %v533
        %535 = vmatmul.bf16.gmra.mxu0 %v395
        %v536 = vpop.f32.mrf.mxu0
        %v537 = vadd.f32 0.0, %v536
        %v538 = vpop.f32.mrf.mxu0
        %v539 = vadd.f32 0.0, %v538
        %540 = vmatmul.bf16.gmra.mxu0 %v396
        %v541 = vpop.f32.mrf.mxu0
        %v542 = vadd.f32 0.0, %v541
        %v543 = vpop.f32.mrf.mxu0
        %v544 = vadd.f32 0.0, %v543
        %545 = vmatmul.bf16.gmra.mxu0 %v397
        %v546 = vpop.f32.mrf.mxu0
        %v547 = vadd.f32 0.0, %v546
        %v548 = vpop.f32.mrf.mxu0
        %v549 = vadd.f32 0.0, %v548
        %550 = vdwg.mxu0
        %v551 = vld [vmem:[%s3] sm:$0x1]
        %v553 = vperm.slane %v551, 0
        %v555 = vmul.f32 %v472, %v553
        %v556 = vmul.f32 %v474, %v553
        %v557 = vmul.f32 %v477, %v553
        %v558 = vmul.f32 %v479, %v553
        %v559 = vmul.f32 %v482, %v553
        %v560 = vmul.f32 %v484, %v553
        %v561 = vmul.f32 %v487, %v553
        %v562 = vmul.f32 %v489, %v553
        %v563 = vmul.f32 %v492, %v553
        %v564 = vmul.f32 %v494, %v553
        %v565 = vmul.f32 %v497, %v553
        %v566 = vmul.f32 %v499, %v553
        %v567 = vmul.f32 %v502, %v553
        %v568 = vmul.f32 %v504, %v553
        %v569 = vmul.f32 %v507, %v553
        %v570 = vmul.f32 %v509, %v553
        %v571 = vmul.f32 %v512, %v553
        %v572 = vmul.f32 %v514, %v553
        %v573 = vmul.f32 %v517, %v553
        %v574 = vmul.f32 %v519, %v553
        %v575 = vmul.f32 %v522, %v553
        %v576 = vmul.f32 %v524, %v553
        %v577 = vmul.f32 %v527, %v553
        %v578 = vmul.f32 %v529, %v553
        %v579 = vmul.f32 %v532, %v553
        %v580 = vmul.f32 %v534, %v553
        %v581 = vmul.f32 %v537, %v553
        %v582 = vmul.f32 %v539, %v553
        %v583 = vmul.f32 %v542, %v553
        %v584 = vmul.f32 %v544, %v553
        %v585 = vmul.f32 %v547, %v553
        %v586 = vmul.f32 %v549, %v553
        %v587 = vld [vmem:[%s4] sm:$0x1]
        %v589 = vperm.slane %v587, 0
        %v591 = vadd.f32 %v555, %v589
        %v592 = vadd.f32 %v556, %v589
        %v593 = vadd.f32 %v557, %v589
        %v594 = vadd.f32 %v558, %v589
        %v595 = vadd.f32 %v559, %v589
        %v596 = vadd.f32 %v560, %v589
        %v597 = vadd.f32 %v561, %v589
        %v598 = vadd.f32 %v562, %v589
        %v599 = vadd.f32 %v563, %v589
        %v600 = vadd.f32 %v564, %v589
        %v601 = vadd.f32 %v565, %v589
        %v602 = vadd.f32 %v566, %v589
        %v603 = vadd.f32 %v567, %v589
        %v604 = vadd.f32 %v568, %v589
        %v605 = vadd.f32 %v569, %v589
        %v606 = vadd.f32 %v570, %v589
        %v607 = vadd.f32 %v571, %v589
        %v608 = vadd.f32 %v572, %v589
        %v609 = vadd.f32 %v573, %v589
        %v610 = vadd.f32 %v574, %v589
        %v611 = vadd.f32 %v575, %v589
        %v612 = vadd.f32 %v576, %v589
        %v613 = vadd.f32 %v577, %v589
        %v614 = vadd.f32 %v578, %v589
        %v615 = vadd.f32 %v579, %v589
        %v616 = vadd.f32 %v580, %v589
        %v617 = vadd.f32 %v581, %v589
        %v618 = vadd.f32 %v582, %v589
        %v619 = vadd.f32 %v583, %v589
        %v620 = vadd.f32 %v584, %v589
        %v621 = vadd.f32 %v585, %v589
        %v622 = vadd.f32 %v586, %v589
        %v623 = vmax.f32 %v591, 0.0
        %v624 = vmax.f32 %v592, 0.0
        %v625 = vmax.f32 %v593, 0.0
        %v626 = vmax.f32 %v594, 0.0
        %v627 = vmax.f32 %v595, 0.0
        %v628 = vmax.f32 %v596, 0.0
        %v629 = vmax.f32 %v597, 0.0
        %v630 = vmax.f32 %v598, 0.0
        %v631 = vmax.f32 %v599, 0.0
        %v632 = vmax.f32 %v600, 0.0
        %v633 = vmax.f32 %v601, 0.0
        %v634 = vmax.f32 %v602, 0.0
        %v635 = vmax.f32 %v603, 0.0
        %v636 = vmax.f32 %v604, 0.0
        %v637 = vmax.f32 %v605, 0.0
        %v638 = vmax.f32 %v606, 0.0
        %v639 = vmax.f32 %v607, 0.0
        %v640 = vmax.f32 %v608, 0.0
        %v641 = vmax.f32 %v609, 0.0
        %v642 = vmax.f32 %v610, 0.0
        %v643 = vmax.f32 %v611, 0.0
        %v644 = vmax.f32 %v612, 0.0
        %v645 = vmax.f32 %v613, 0.0
        %v646 = vmax.f32 %v614, 0.0
        %v647 = vmax.f32 %v615, 0.0
        %v648 = vmax.f32 %v616, 0.0
        %v649 = vmax.f32 %v617, 0.0
        %v650 = vmax.f32 %v618, 0.0
        %v651 = vmax.f32 %v619, 0.0
        %v652 = vmax.f32 %v620, 0.0
        %v653 = vmax.f32 %v621, 0.0
        %v654 = vmax.f32 %v622, 0.0
        %655 = vst [vmem:[#allocation2 + $0x10] sm:$0xff] %v623
        %656 = vst [vmem:[#allocation2 + $0x18] sm:$0xff] %v624
        %657 = vst [vmem:[#allocation2 + $0x20] sm:$0xff] %v625
        %658 = vst [vmem:[#allocation2 + $0x28] sm:$0xff] %v626
        %659 = vst [vmem:[#allocation2 + $0x30] sm:$0xff] %v627
        %660 = vst [vmem:[#allocation2 + $0x38] sm:$0xff] %v628
        %661 = vst [vmem:[#allocation2 + $0x40] sm:$0xff] %v629
        %662 = vst [vmem:[#allocation2 + $0x48] sm:$0xff] %v630
        %663 = vst [vmem:[#allocation2 + $0x50] sm:$0xff] %v631
        %664 = vst [vmem:[#allocation2 + $0x58] sm:$0xff] %v632
        %665 = vst [vmem:[#allocation2 + $0x60] sm:$0xff] %v633
        %666 = vst [vmem:[#allocation2 + $0x68] sm:$0xff] %v634
        %667 = vst [vmem:[#allocation2 + $0x70] sm:$0xff] %v635
        %668 = vst [vmem:[#allocation2 + $0x78] sm:$0xff] %v636
        %669 = vst [vmem:[#allocation2 + $0x80] sm:$0xff] %v637
        %670 = vst [vmem:[#allocation2 + $0x88] sm:$0xff] %v638
        %671 = vst [vmem:[#allocation2 + $0x90] sm:$0xff] %v639
        %672 = vst [vmem:[#allocation2 + $0x98] sm:$0xff] %v640
        %673 = vst [vmem:[#allocation2 + $0xa0] sm:$0xff] %v641
        %674 = vst [vmem:[#allocation2 + $0xa8] sm:$0xff] %v642
        %675 = vst [vmem:[#allocation2 + $0xb0] sm:$0xff] %v643
        %676 = vst [vmem:[#allocation2 + $0xb8] sm:$0xff] %v644
        %677 = vst [vmem:[#allocation2 + $0xc0] sm:$0xff] %v645
        %678 = vst [vmem:[#allocation2 + $0xc8] sm:$0xff] %v646
        %679 = vst [vmem:[#allocation2 + $0xd0] sm:$0xff] %v647
        %680 = vst [vmem:[#allocation2 + $0xd8] sm:$0xff] %v648
        %681 = vst [vmem:[#allocation2 + $0xe0] sm:$0xff] %v649
        %682 = vst [vmem:[#allocation2 + $0xe8] sm:$0xff] %v650
        %683 = vst [vmem:[#allocation2 + $0xf0] sm:$0xff] %v651
        %684 = vst [vmem:[#allocation2 + $0xf8] sm:$0xff] %v652
        %685 = vst [vmem:[#allocation2 + $0x100] sm:$0xff] %v653
        %686 = vst [vmem:[#allocation2 + $0x108] sm:$0xff] %v654
        %p687 = scmp.gt.s32.totalorder %s30, 0
        // Predicated region
        $region61: #{tpu_custom_call.1} parent=47 // pred_check
          %p688 = pneg %p687
        $region62: #{tpu_custom_call.1} parent=47 // pred_check_branch
          %690 = sbr.rel (%p688) target = $region64
        $region63: #{tpu_custom_call.1} parent=47 // pred_region
          %s691 = ssub.s32 %s348, 16
          %s692 = scalar_lea.vmem %s304, %s691 [#allocation3]
          %v693 = vld [vmem:[%s692] sm:$0xff]
          %v694 = vld [vmem:[%s692 + $0x8] sm:$0xff]
          %v695 = vpack.c.bf16 %v694, %v693
          %v696 = vld [vmem:[#allocation6] sm:$0xf]
          %v697 = vld [vmem:[#allocation6 + $0x4] sm:$0xf]
          %v698 = vld [vmem:[#allocation6 + $0x8] sm:$0xf]
          %v699 = vld [vmem:[#allocation6 + $0xc] sm:$0xf]
          %v700 = vld [vmem:[#allocation6 + $0x10] sm:$0xf]
          %v701 = vld [vmem:[#allocation6 + $0x14] sm:$0xf]
          %v702 = vld [vmem:[#allocation6 + $0x18] sm:$0xf]
          %v703 = vld [vmem:[#allocation6 + $0x1c] sm:$0xf]
          %v704 = vld [vmem:[#allocation6 + $0x20] sm:$0xf]
          %v705 = vld [vmem:[#allocation6 + $0x24] sm:$0xf]
          %v706 = vld [vmem:[#allocation6 + $0x28] sm:$0xf]
          %v707 = vld [vmem:[#allocation6 + $0x2c] sm:$0xf]
          %v708 = vld [vmem:[#allocation6 + $0x30] sm:$0xf]
          %v709 = vld [vmem:[#allocation6 + $0x34] sm:$0xf]
          %v710 = vld [vmem:[#allocation6 + $0x38] sm:$0xf]
          %v711 = vld [vmem:[#allocation6 + $0x3c] sm:$0xf]
          %v728 = vunpack.c.l.b16 %v696
          %v729 = vunpack.c.l.b16 %v697
          %v730 = vunpack.c.l.b16 %v698
          %v731 = vunpack.c.l.b16 %v699
          %v732 = vunpack.c.l.b16 %v700
          %v733 = vunpack.c.l.b16 %v701
          %v734 = vunpack.c.l.b16 %v702
          %v735 = vunpack.c.l.b16 %v703
          %v736 = vunpack.c.l.b16 %v704
          %v737 = vunpack.c.l.b16 %v705
          %v738 = vunpack.c.l.b16 %v706
          %v739 = vunpack.c.l.b16 %v707
          %v740 = vunpack.c.l.b16 %v708
          %v741 = vunpack.c.l.b16 %v709
          %v742 = vunpack.c.l.b16 %v710
          %v743 = vunpack.c.l.b16 %v711
          %v744 = vpack.c.b16 %v729, %v728
          %v745 = vpack.c.b16 %v731, %v730
          %v746 = vpack.c.b16 %v733, %v732
          %v747 = vpack.c.b16 %v735, %v734
          %v748 = vpack.c.b16 %v737, %v736
          %v749 = vpack.c.b16 %v739, %v738
          %v750 = vpack.c.b16 %v741, %v740
          %v751 = vpack.c.b16 %v743, %v742
          %760 = vmatpush.bf16.msra.mxu0 %v751
          %761 = vmatpush.bf16.msra.mxu0 %v750
          %762 = vmatpush.bf16.msra.mxu0 %v749
          %763 = vmatpush.bf16.msra.mxu0 %v748
          %764 = vmatpush.bf16.msra.mxu0 %v747
          %765 = vmatpush.bf16.msra.mxu0 %v746
          %766 = vmatpush.bf16.msra.mxu0 %v745
          %767 = vmatpush.bf16.msra.mxu0 %v744
          %768 = vmatmul.bf16.gmra.mxu0 %v695
          %v769 = vpop.f32.mrf.mxu0
          %v770 = vadd.f32 0.0, %v769
          %v771 = vpop.f32.mrf.mxu0
          %v772 = vadd.f32 0.0, %v771
          %773 = vdwg.mxu0
          %v774 = vld [vmem:[%s3] sm:$0x1]
          %v776 = vperm.slane %v774, 0
          %v778 = vmul.f32 %v770, %v776
          %v779 = vmul.f32 %v772, %v776
          %v780 = vld [vmem:[%s4] sm:$0x1]
          %v782 = vperm.slane %v780, 0
          %v784 = vadd.f32 %v778, %v782
          %v785 = vadd.f32 %v779, %v782
          %v786 = vmax.f32 %v784, 0.0
          %v787 = vmax.f32 %v785, 0.0
          %788 = vst [vmem:[#allocation2] sm:$0xff] %v786
          %789 = vst [vmem:[#allocation2 + $0x8] sm:$0xff] %v787
        $region64: #{tpu_custom_call.1} parent=47 // pred_fallthru
          _
        %p790 = scmp.eq.s32.totalorder %s30, 0
        // Predicated region
        $region65: #{tpu_custom_call.1} parent=47 // pred_check
          %p791 = pneg %p790
        $region66: #{tpu_custom_call.1} parent=47 // pred_check_branch
          %793 = sbr.rel (%p791) target = $region68
        $region67: #{tpu_custom_call.1} parent=47 // pred_region
          %794 = vst [vmem:[#allocation2] sm:$0xff] 0.0
          %795 = vst [vmem:[#allocation2 + $0x8] sm:$0xff] 0.0
        $region68: #{tpu_custom_call.1} parent=47 // pred_fallthru
          _
        %p796 = scmp.lt.s32.totalorder %s30, 0
        // Predicated region
        $region69: #{tpu_custom_call.1} parent=47 // pred_check
          %p797 = pneg %p796
        $region70: #{tpu_custom_call.1} parent=47 // pred_check_branch
          %799 = sbr.rel (%p797) target = $region72
        $region71: #{tpu_custom_call.1} parent=47 // pred_region
          %s800 = sadd.s32 %s348, 256
          %s801 = scalar_lea.vmem %s304, %s800 [#allocation3]
          %v802 = vld [vmem:[%s801] sm:$0xff]
          %v803 = vld [vmem:[%s801 + $0x8] sm:$0xff]
          %v804 = vpack.c.bf16 %v803, %v802
          %v805 = vld [vmem:[#allocation6] sm:$0xf]
          %v806 = vld [vmem:[#allocation6 + $0x4] sm:$0xf]
          %v807 = vld [vmem:[#allocation6 + $0x8] sm:$0xf]
          %v808 = vld [vmem:[#allocation6 + $0xc] sm:$0xf]
          %v809 = vld [vmem:[#allocation6 + $0x10] sm:$0xf]
          %v810 = vld [vmem:[#allocation6 + $0x14] sm:$0xf]
          %v811 = vld [vmem:[#allocation6 + $0x18] sm:$0xf]
          %v812 = vld [vmem:[#allocation6 + $0x1c] sm:$0xf]
          %v813 = vld [vmem:[#allocation6 + $0x20] sm:$0xf]
          %v814 = vld [vmem:[#allocation6 + $0x24] sm:$0xf]
          %v815 = vld [vmem:[#allocation6 + $0x28] sm:$0xf]
          %v816 = vld [vmem:[#allocation6 + $0x2c] sm:$0xf]
          %v817 = vld [vmem:[#allocation6 + $0x30] sm:$0xf]
          %v818 = vld [vmem:[#allocation6 + $0x34] sm:$0xf]
          %v819 = vld [vmem:[#allocation6 + $0x38] sm:$0xf]
          %v820 = vld [vmem:[#allocation6 + $0x3c] sm:$0xf]
          %v837 = vunpack.c.l.b16 %v805
          %v838 = vunpack.c.l.b16 %v806
          %v839 = vunpack.c.l.b16 %v807
          %v840 = vunpack.c.l.b16 %v808
          %v841 = vunpack.c.l.b16 %v809
          %v842 = vunpack.c.l.b16 %v810
          %v843 = vunpack.c.l.b16 %v811
          %v844 = vunpack.c.l.b16 %v812
          %v845 = vunpack.c.l.b16 %v813
          %v846 = vunpack.c.l.b16 %v814
          %v847 = vunpack.c.l.b16 %v815
          %v848 = vunpack.c.l.b16 %v816
          %v849 = vunpack.c.l.b16 %v817
          %v850 = vunpack.c.l.b16 %v818
          %v851 = vunpack.c.l.b16 %v819
          %v852 = vunpack.c.l.b16 %v820
          %v853 = vpack.c.b16 %v838, %v837
          %v854 = vpack.c.b16 %v840, %v839
          %v855 = vpack.c.b16 %v842, %v841
          %v856 = vpack.c.b16 %v844, %v843
          %v857 = vpack.c.b16 %v846, %v845
          %v858 = vpack.c.b16 %v848, %v847
          %v859 = vpack.c.b16 %v850, %v849
          %v860 = vpack.c.b16 %v852, %v851
          %869 = vmatpush.bf16.msra.mxu0 %v860
          %870 = vmatpush.bf16.msra.mxu0 %v859
          %871 = vmatpush.bf16.msra.mxu0 %v858
          %872 = vmatpush.bf16.msra.mxu0 %v857
          %873 = vmatpush.bf16.msra.mxu0 %v856
          %874 = vmatpush.bf16.msra.mxu0 %v855
          %875 = vmatpush.bf16.msra.mxu0 %v854
          %876 = vmatpush.bf16.msra.mxu0 %v853
          %877 = vmatmul.bf16.gmra.mxu0 %v804
          %v878 = vpop.f32.mrf.mxu0
          %v879 = vadd.f32 0.0, %v878
          %v880 = vpop.f32.mrf.mxu0
          %v881 = vadd.f32 0.0, %v880
          %882 = vdwg.mxu0
          %v883 = vld [vmem:[%s3] sm:$0x1]
          %v885 = vperm.slane %v883, 0
          %v887 = vmul.f32 %v879, %v885
          %v888 = vmul.f32 %v881, %v885
          %v889 = vld [vmem:[%s4] sm:$0x1]
          %v891 = vperm.slane %v889, 0
          %v893 = vadd.f32 %v887, %v891
          %v894 = vadd.f32 %v888, %v891
          %v895 = vmax.f32 %v893, 0.0
          %v896 = vmax.f32 %v894, 0.0
          %897 = vst [vmem:[#allocation2 + $0x110] sm:$0xff] %v895
          %898 = vst [vmem:[#allocation2 + $0x118] sm:$0xff] %v896
        $region72: #{tpu_custom_call.1} parent=47 // pred_fallthru
          _
        // Predicated region
        $region73: #{tpu_custom_call.1} parent=47 // pred_check
          %p899 = pneg %p790
        $region74: #{tpu_custom_call.1} parent=47 // pred_check_branch
          %901 = sbr.rel (%p899) target = $region76
        $region75: #{tpu_custom_call.1} parent=47 // pred_region
          %902 = vst [vmem:[#allocation2 + $0x110] sm:$0xff] 0.0
          %903 = vst [vmem:[#allocation2 + $0x118] sm:$0xff] 0.0
        $region76: #{tpu_custom_call.1} parent=47 // pred_fallthru
          _
        %v904 = vlaneseq
        %v905 = vshrl.u32 %v904, 7
        %v906 = vadd.s32 %v905, 8
        %v907 = vadd.s32 %v905, 16
        %v908 = vadd.s32 %v905, 24
        %v909 = vadd.s32 %v905, 32
        %v910 = vadd.s32 %v905, 40
        %v911 = vadd.s32 %v905, 48
        %v912 = vadd.s32 %v905, 56
        %v913 = vadd.s32 %v905, 64
        %v914 = vadd.s32 %v905, 72
        %v915 = vadd.s32 %v905, 80
        %v916 = vadd.s32 %v905, 88
        %v917 = vadd.s32 %v905, 96
        %v918 = vadd.s32 %v905, 104
        %v919 = vadd.s32 %v905, 112
        %v920 = vadd.s32 %v905, 120
        %v921 = vadd.s32 %v905, 128
        %v922 = vadd.s32 %v905, 136
        %v923 = vadd.s32 %v905, 144
        %v924 = vadd.s32 %v905, 152
        %v925 = vadd.s32 %v905, 160
        %v926 = vadd.s32 %v905, 168
        %v927 = vadd.s32 %v905, 176
        %v928 = vadd.s32 %v905, 184
        %v929 = vadd.s32 %v905, 192
        %v930 = vadd.s32 %v905, 200
        %v931 = vadd.s32 %v905, 208
        %v932 = vadd.s32 %v905, 216
        %v933 = vadd.s32 %v905, 224
        %v934 = vadd.s32 %v905, 232
        %v935 = vadd.s32 %v905, 240
        %v936 = vadd.s32 %v905, 248
        %vm937 = vcmp.lt.s32.totalorder %v905, 0
        %v938 = vsub.s32 0, %v905
        %v939 = vsel %vm937, %v938, %v905
        %v940 = vshrl.u32 %v939, 4
        %v941 = vand.u32 %v939, 15
        %v942 = vsub.s32 0, %v941
        %v943 = vsel %vm937, %v942, %v941
        %vm944 = vcmp.lt.s32.totalorder %v906, 0
        %v945 = vsub.s32 0, %v906
        %v946 = vsel %vm944, %v945, %v906
        %v947 = vshrl.u32 %v946, 4
        %v948 = vand.u32 %v946, 15
        %v949 = vsub.s32 0, %v948
        %v950 = vsel %vm944, %v949, %v948
        %vm951 = vcmp.lt.s32.totalorder %v907, 0
        %v952 = vsub.s32 0, %v907
        %v953 = vsel %vm951, %v952, %v907
        %v954 = vshrl.u32 %v953, 4
        %v955 = vand.u32 %v953, 15
        %v956 = vsub.s32 0, %v955
        %v957 = vsel %vm951, %v956, %v955
        %vm958 = vcmp.lt.s32.totalorder %v908, 0
        %v959 = vsub.s32 0, %v908
        %v960 = vsel %vm958, %v959, %v908
        %v961 = vshrl.u32 %v960, 4
        %v962 = vand.u32 %v960, 15
        %v963 = vsub.s32 0, %v962
        %v964 = vsel %vm958, %v963, %v962
        %vm965 = vcmp.lt.s32.totalorder %v909, 0
        %v966 = vsub.s32 0, %v909
        %v967 = vsel %vm965, %v966, %v909
        %v968 = vshrl.u32 %v967, 4
        %v969 = vand.u32 %v967, 15
        %v970 = vsub.s32 0, %v969
        %v971 = vsel %vm965, %v970, %v969
        %vm972 = vcmp.lt.s32.totalorder %v910, 0
        %v973 = vsub.s32 0, %v910
        %v974 = vsel %vm972, %v973, %v910
        %v975 = vshrl.u32 %v974, 4
        %v976 = vand.u32 %v974, 15
        %v977 = vsub.s32 0, %v976
        %v978 = vsel %vm972, %v977, %v976
        %vm979 = vcmp.lt.s32.totalorder %v911, 0
        %v980 = vsub.s32 0, %v911
        %v981 = vsel %vm979, %v980, %v911
        %v982 = vshrl.u32 %v981, 4
        %v983 = vand.u32 %v981, 15
        %v984 = vsub.s32 0, %v983
        %v985 = vsel %vm979, %v984, %v983
        %vm986 = vcmp.lt.s32.totalorder %v912, 0
        %v987 = vsub.s32 0, %v912
        %v988 = vsel %vm986, %v987, %v912
        %v989 = vshrl.u32 %v988, 4
        %v990 = vand.u32 %v988, 15
        %v991 = vsub.s32 0, %v990
        %v992 = vsel %vm986, %v991, %v990
        %vm993 = vcmp.lt.s32.totalorder %v913, 0
        %v994 = vsub.s32 0, %v913
        %v995 = vsel %vm993, %v994, %v913
        %v996 = vshrl.u32 %v995, 4
        %v997 = vand.u32 %v995, 15
        %v998 = vsub.s32 0, %v997
        %v999 = vsel %vm993, %v998, %v997
        %vm1000 = vcmp.lt.s32.totalorder %v914, 0
        %v1001 = vsub.s32 0, %v914
        %v1002 = vsel %vm1000, %v1001, %v914
        %v1003 = vshrl.u32 %v1002, 4
        %v1004 = vand.u32 %v1002, 15
        %v1005 = vsub.s32 0, %v1004
        %v1006 = vsel %vm1000, %v1005, %v1004
        %vm1007 = vcmp.lt.s32.totalorder %v915, 0
        %v1008 = vsub.s32 0, %v915
        %v1009 = vsel %vm1007, %v1008, %v915
        %v1010 = vshrl.u32 %v1009, 4
        %v1011 = vand.u32 %v1009, 15
        %v1012 = vsub.s32 0, %v1011
        %v1013 = vsel %vm1007, %v1012, %v1011
        %vm1014 = vcmp.lt.s32.totalorder %v916, 0
        %v1015 = vsub.s32 0, %v916
        %v1016 = vsel %vm1014, %v1015, %v916
        %v1017 = vshrl.u32 %v1016, 4
        %v1018 = vand.u32 %v1016, 15
        %v1019 = vsub.s32 0, %v1018
        %v1020 = vsel %vm1014, %v1019, %v1018
        %vm1021 = vcmp.lt.s32.totalorder %v917, 0
        %v1022 = vsub.s32 0, %v917
        %v1023 = vsel %vm1021, %v1022, %v917
        %v1024 = vshrl.u32 %v1023, 4
        %v1025 = vand.u32 %v1023, 15
        %v1026 = vsub.s32 0, %v1025
        %v1027 = vsel %vm1021, %v1026, %v1025
        %vm1028 = vcmp.lt.s32.totalorder %v918, 0
        %v1029 = vsub.s32 0, %v918
        %v1030 = vsel %vm1028, %v1029, %v918
        %v1031 = vshrl.u32 %v1030, 4
        %v1032 = vand.u32 %v1030, 15
        %v1033 = vsub.s32 0, %v1032
        %v1034 = vsel %vm1028, %v1033, %v1032
        %vm1035 = vcmp.lt.s32.totalorder %v919, 0
        %v1036 = vsub.s32 0, %v919
        %v1037 = vsel %vm1035, %v1036, %v919
        %v1038 = vshrl.u32 %v1037, 4
        %v1039 = vand.u32 %v1037, 15
        %v1040 = vsub.s32 0, %v1039
        %v1041 = vsel %vm1035, %v1040, %v1039
        %vm1042 = vcmp.lt.s32.totalorder %v920, 0
        %v1043 = vsub.s32 0, %v920
        %v1044 = vsel %vm1042, %v1043, %v920
        %v1045 = vshrl.u32 %v1044, 4
        %v1046 = vand.u32 %v1044, 15
        %v1047 = vsub.s32 0, %v1046
        %v1048 = vsel %vm1042, %v1047, %v1046
        %vm1049 = vcmp.lt.s32.totalorder %v921, 0
        %v1050 = vsub.s32 0, %v921
        %v1051 = vsel %vm1049, %v1050, %v921
        %v1052 = vshrl.u32 %v1051, 4
        %v1053 = vand.u32 %v1051, 15
        %v1054 = vsub.s32 0, %v1053
        %v1055 = vsel %vm1049, %v1054, %v1053
        %vm1056 = vcmp.lt.s32.totalorder %v922, 0
        %v1057 = vsub.s32 0, %v922
        %v1058 = vsel %vm1056, %v1057, %v922
        %v1059 = vshrl.u32 %v1058, 4
        %v1060 = vand.u32 %v1058, 15
        %v1061 = vsub.s32 0, %v1060
        %v1062 = vsel %vm1056, %v1061, %v1060
        %vm1063 = vcmp.lt.s32.totalorder %v923, 0
        %v1064 = vsub.s32 0, %v923
        %v1065 = vsel %vm1063, %v1064, %v923
        %v1066 = vshrl.u32 %v1065, 4
        %v1067 = vand.u32 %v1065, 15
        %v1068 = vsub.s32 0, %v1067
        %v1069 = vsel %vm1063, %v1068, %v1067
        %vm1070 = vcmp.lt.s32.totalorder %v924, 0
        %v1071 = vsub.s32 0, %v924
        %v1072 = vsel %vm1070, %v1071, %v924
        %v1073 = vshrl.u32 %v1072, 4
        %v1074 = vand.u32 %v1072, 15
        %v1075 = vsub.s32 0, %v1074
        %v1076 = vsel %vm1070, %v1075, %v1074
        %vm1077 = vcmp.lt.s32.totalorder %v925, 0
        %v1078 = vsub.s32 0, %v925
        %v1079 = vsel %vm1077, %v1078, %v925
        %v1080 = vshrl.u32 %v1079, 4
        %v1081 = vand.u32 %v1079, 15
        %v1082 = vsub.s32 0, %v1081
        %v1083 = vsel %vm1077, %v1082, %v1081
        %vm1084 = vcmp.lt.s32.totalorder %v926, 0
        %v1085 = vsub.s32 0, %v926
        %v1086 = vsel %vm1084, %v1085, %v926
        %v1087 = vshrl.u32 %v1086, 4
        %v1088 = vand.u32 %v1086, 15
        %v1089 = vsub.s32 0, %v1088
        %v1090 = vsel %vm1084, %v1089, %v1088
        %vm1091 = vcmp.lt.s32.totalorder %v927, 0
        %v1092 = vsub.s32 0, %v927
        %v1093 = vsel %vm1091, %v1092, %v927
        %v1094 = vshrl.u32 %v1093, 4
        %v1095 = vand.u32 %v1093, 15
        %v1096 = vsub.s32 0, %v1095
        %v1097 = vsel %vm1091, %v1096, %v1095
        %vm1098 = vcmp.lt.s32.totalorder %v928, 0
        %v1099 = vsub.s32 0, %v928
        %v1100 = vsel %vm1098, %v1099, %v928
        %v1101 = vshrl.u32 %v1100, 4
        %v1102 = vand.u32 %v1100, 15
        %v1103 = vsub.s32 0, %v1102
        %v1104 = vsel %vm1098, %v1103, %v1102
        %vm1105 = vcmp.lt.s32.totalorder %v929, 0
        %v1106 = vsub.s32 0, %v929
        %v1107 = vsel %vm1105, %v1106, %v929
        %v1108 = vshrl.u32 %v1107, 4
        %v1109 = vand.u32 %v1107, 15
        %v1110 = vsub.s32 0, %v1109
        %v1111 = vsel %vm1105, %v1110, %v1109
        %vm1112 = vcmp.lt.s32.totalorder %v930, 0
        %v1113 = vsub.s32 0, %v930
        %v1114 = vsel %vm1112, %v1113, %v930
        %v1115 = vshrl.u32 %v1114, 4
        %v1116 = vand.u32 %v1114, 15
        %v1117 = vsub.s32 0, %v1116
        %v1118 = vsel %vm1112, %v1117, %v1116
        %vm1119 = vcmp.lt.s32.totalorder %v931, 0
        %v1120 = vsub.s32 0, %v931
        %v1121 = vsel %vm1119, %v1120, %v931
        %v1122 = vshrl.u32 %v1121, 4
        %v1123 = vand.u32 %v1121, 15
        %v1124 = vsub.s32 0, %v1123
        %v1125 = vsel %vm1119, %v1124, %v1123
        %vm1126 = vcmp.lt.s32.totalorder %v932, 0
        %v1127 = vsub.s32 0, %v932
        %v1128 = vsel %vm1126, %v1127, %v932
        %v1129 = vshrl.u32 %v1128, 4
        %v1130 = vand.u32 %v1128, 15
        %v1131 = vsub.s32 0, %v1130
        %v1132 = vsel %vm1126, %v1131, %v1130
        %vm1133 = vcmp.lt.s32.totalorder %v933, 0
        %v1134 = vsub.s32 0, %v933
        %v1135 = vsel %vm1133, %v1134, %v933
        %v1136 = vshrl.u32 %v1135, 4
        %v1137 = vand.u32 %v1135, 15
        %v1138 = vsub.s32 0, %v1137
        %v1139 = vsel %vm1133, %v1138, %v1137
        %vm1140 = vcmp.lt.s32.totalorder %v934, 0
        %v1141 = vsub.s32 0, %v934
        %v1142 = vsel %vm1140, %v1141, %v934
        %v1143 = vshrl.u32 %v1142, 4
        %v1144 = vand.u32 %v1142, 15
        %v1145 = vsub.s32 0, %v1144
        %v1146 = vsel %vm1140, %v1145, %v1144
        %vm1147 = vcmp.lt.s32.totalorder %v935, 0
        %v1148 = vsub.s32 0, %v935
        %v1149 = vsel %vm1147, %v1148, %v935
        %v1150 = vshrl.u32 %v1149, 4
        %v1151 = vand.u32 %v1149, 15
        %v1152 = vsub.s32 0, %v1151
        %v1153 = vsel %vm1147, %v1152, %v1151
        %vm1154 = vcmp.lt.s32.totalorder %v936, 0
        %v1155 = vsub.s32 0, %v936
        %v1156 = vsel %vm1154, %v1155, %v936
        %v1157 = vshrl.u32 %v1156, 4
        %v1158 = vand.u32 %v1156, 15
        %v1159 = vsub.s32 0, %v1158
        %v1160 = vsel %vm1154, %v1159, %v1158
        %vm1161 = vcmp.ne.s32.totalorder %v943, 0
        %vm1162 = vcmp.ne.s32.totalorder %v950, 0
        %vm1163 = vcmp.ne.s32.totalorder %v957, 0
        %vm1164 = vcmp.ne.s32.totalorder %v964, 0
        %vm1165 = vcmp.ne.s32.totalorder %v971, 0
        %vm1166 = vcmp.ne.s32.totalorder %v978, 0
        %vm1167 = vcmp.ne.s32.totalorder %v985, 0
        %vm1168 = vcmp.ne.s32.totalorder %v992, 0
        %vm1169 = vcmp.ne.s32.totalorder %v999, 0
        %vm1170 = vcmp.ne.s32.totalorder %v1006, 0
        %vm1171 = vcmp.ne.s32.totalorder %v1013, 0
        %vm1172 = vcmp.ne.s32.totalorder %v1020, 0
        %vm1173 = vcmp.ne.s32.totalorder %v1027, 0
        %vm1174 = vcmp.ne.s32.totalorder %v1034, 0
        %vm1175 = vcmp.ne.s32.totalorder %v1041, 0
        %vm1176 = vcmp.ne.s32.totalorder %v1048, 0
        %vm1177 = vcmp.ne.s32.totalorder %v1055, 0
        %vm1178 = vcmp.ne.s32.totalorder %v1062, 0
        %vm1179 = vcmp.ne.s32.totalorder %v1069, 0
        %vm1180 = vcmp.ne.s32.totalorder %v1076, 0
        %vm1181 = vcmp.ne.s32.totalorder %v1083, 0
        %vm1182 = vcmp.ne.s32.totalorder %v1090, 0
        %vm1183 = vcmp.ne.s32.totalorder %v1097, 0
        %vm1184 = vcmp.ne.s32.totalorder %v1104, 0
        %vm1185 = vcmp.ne.s32.totalorder %v1111, 0
        %vm1186 = vcmp.ne.s32.totalorder %v1118, 0
        %vm1187 = vcmp.ne.s32.totalorder %v1125, 0
        %vm1188 = vcmp.ne.s32.totalorder %v1132, 0
        %vm1189 = vcmp.ne.s32.totalorder %v1139, 0
        %vm1190 = vcmp.ne.s32.totalorder %v1146, 0
        %vm1191 = vcmp.ne.s32.totalorder %v1153, 0
        %vm1192 = vcmp.ne.s32.totalorder %v1160, 0
        %vm1193 = vcmp.lt.s32.totalorder %v943, 0
        %vm1194 = vcmp.lt.s32.totalorder %v950, 0
        %vm1195 = vcmp.lt.s32.totalorder %v957, 0
        %vm1196 = vcmp.lt.s32.totalorder %v964, 0
        %vm1197 = vcmp.lt.s32.totalorder %v971, 0
        %vm1198 = vcmp.lt.s32.totalorder %v978, 0
        %vm1199 = vcmp.lt.s32.totalorder %v985, 0
        %vm1200 = vcmp.lt.s32.totalorder %v992, 0
        %vm1201 = vcmp.lt.s32.totalorder %v999, 0
        %vm1202 = vcmp.lt.s32.totalorder %v1006, 0
        %vm1203 = vcmp.lt.s32.totalorder %v1013, 0
        %vm1204 = vcmp.lt.s32.totalorder %v1020, 0
        %vm1205 = vcmp.lt.s32.totalorder %v1027, 0
        %vm1206 = vcmp.lt.s32.totalorder %v1034, 0
        %vm1207 = vcmp.lt.s32.totalorder %v1041, 0
        %vm1208 = vcmp.lt.s32.totalorder %v1048, 0
        %vm1209 = vcmp.lt.s32.totalorder %v1055, 0
        %vm1210 = vcmp.lt.s32.totalorder %v1062, 0
        %vm1211 = vcmp.lt.s32.totalorder %v1069, 0
        %vm1212 = vcmp.lt.s32.totalorder %v1076, 0
        %vm1213 = vcmp.lt.s32.totalorder %v1083, 0
        %vm1214 = vcmp.lt.s32.totalorder %v1090, 0
        %vm1215 = vcmp.lt.s32.totalorder %v1097, 0
        %vm1216 = vcmp.lt.s32.totalorder %v1104, 0
        %vm1217 = vcmp.lt.s32.totalorder %v1111, 0
        %vm1218 = vcmp.lt.s32.totalorder %v1118, 0
        %vm1219 = vcmp.lt.s32.totalorder %v1125, 0
        %vm1220 = vcmp.lt.s32.totalorder %v1132, 0
        %vm1221 = vcmp.lt.s32.totalorder %v1139, 0
        %vm1222 = vcmp.lt.s32.totalorder %v1146, 0
        %vm1223 = vcmp.lt.s32.totalorder %v1153, 0
        %vm1224 = vcmp.lt.s32.totalorder %v1160, 0
        %vm1225 = vmand %vm1193, %vm1161
        %vm1226 = vmand %vm1194, %vm1162
        %vm1227 = vmand %vm1195, %vm1163
        %vm1228 = vmand %vm1196, %vm1164
        %vm1229 = vmand %vm1197, %vm1165
        %vm1230 = vmand %vm1198, %vm1166
        %vm1231 = vmand %vm1199, %vm1167
        %vm1232 = vmand %vm1200, %vm1168
        %vm1233 = vmand %vm1201, %vm1169
        %vm1234 = vmand %vm1202, %vm1170
        %vm1235 = vmand %vm1203, %vm1171
        %vm1236 = vmand %vm1204, %vm1172
        %vm1237 = vmand %vm1205, %vm1173
        %vm1238 = vmand %vm1206, %vm1174
        %vm1239 = vmand %vm1207, %vm1175
        %vm1240 = vmand %vm1208, %vm1176
        %vm1241 = vmand %vm1209, %vm1177
        %vm1242 = vmand %vm1210, %vm1178
        %vm1243 = vmand %vm1211, %vm1179
        %vm1244 = vmand %vm1212, %vm1180
        %vm1245 = vmand %vm1213, %vm1181
        %vm1246 = vmand %vm1214, %vm1182
        %vm1247 = vmand %vm1215, %vm1183
        %vm1248 = vmand %vm1216, %vm1184
        %vm1249 = vmand %vm1217, %vm1185
        %vm1250 = vmand %vm1218, %vm1186
        %vm1251 = vmand %vm1219, %vm1187
        %vm1252 = vmand %vm1220, %vm1188
        %vm1253 = vmand %vm1221, %vm1189
        %vm1254 = vmand %vm1222, %vm1190
        %vm1255 = vmand %vm1223, %vm1191
        %vm1256 = vmand %vm1224, %vm1192
        %v1257 = vadd.s32 %v943, 16
        %v1258 = vadd.s32 %v950, 16
        %v1259 = vadd.s32 %v957, 16
        %v1260 = vadd.s32 %v964, 16
        %v1261 = vadd.s32 %v971, 16
        %v1262 = vadd.s32 %v978, 16
        %v1263 = vadd.s32 %v985, 16
        %v1264 = vadd.s32 %v992, 16
        %v1265 = vadd.s32 %v999, 16
        %v1266 = vadd.s32 %v1006, 16
        %v1267 = vadd.s32 %v1013, 16
        %v1268 = vadd.s32 %v1020, 16
        %v1269 = vadd.s32 %v1027, 16
        %v1270 = vadd.s32 %v1034, 16
        %v1271 = vadd.s32 %v1041, 16
        %v1272 = vadd.s32 %v1048, 16
        %v1273 = vadd.s32 %v1055, 16
        %v1274 = vadd.s32 %v1062, 16
        %v1275 = vadd.s32 %v1069, 16
        %v1276 = vadd.s32 %v1076, 16
        %v1277 = vadd.s32 %v1083, 16
        %v1278 = vadd.s32 %v1090, 16
        %v1279 = vadd.s32 %v1097, 16
        %v1280 = vadd.s32 %v1104, 16
        %v1281 = vadd.s32 %v1111, 16
        %v1282 = vadd.s32 %v1118, 16
        %v1283 = vadd.s32 %v1125, 16
        %v1284 = vadd.s32 %v1132, 16
        %v1285 = vadd.s32 %v1139, 16
        %v1286 = vadd.s32 %v1146, 16
        %v1287 = vadd.s32 %v1153, 16
        %v1288 = vadd.s32 %v1160, 16
        %v1289 = vsel %vm1225, %v1257, %v943
        %v1290 = vsel %vm1226, %v1258, %v950
        %v1291 = vsel %vm1227, %v1259, %v957
        %v1292 = vsel %vm1228, %v1260, %v964
        %v1293 = vsel %vm1229, %v1261, %v971
        %v1294 = vsel %vm1230, %v1262, %v978
        %v1295 = vsel %vm1231, %v1263, %v985
        %v1296 = vsel %vm1232, %v1264, %v992
        %v1297 = vsel %vm1233, %v1265, %v999
        %v1298 = vsel %vm1234, %v1266, %v1006
        %v1299 = vsel %vm1235, %v1267, %v1013
        %v1300 = vsel %vm1236, %v1268, %v1020
        %v1301 = vsel %vm1237, %v1269, %v1027
        %v1302 = vsel %vm1238, %v1270, %v1034
        %v1303 = vsel %vm1239, %v1271, %v1041
        %v1304 = vsel %vm1240, %v1272, %v1048
        %v1305 = vsel %vm1241, %v1273, %v1055
        %v1306 = vsel %vm1242, %v1274, %v1062
        %v1307 = vsel %vm1243, %v1275, %v1069
        %v1308 = vsel %vm1244, %v1276, %v1076
        %v1309 = vsel %vm1245, %v1277, %v1083
        %v1310 = vsel %vm1246, %v1278, %v1090
        %v1311 = vsel %vm1247, %v1279, %v1097
        %v1312 = vsel %vm1248, %v1280, %v1104
        %v1313 = vsel %vm1249, %v1281, %v1111
        %v1314 = vsel %vm1250, %v1282, %v1118
        %v1315 = vsel %vm1251, %v1283, %v1125
        %v1316 = vsel %vm1252, %v1284, %v1132
        %v1317 = vsel %vm1253, %v1285, %v1139
        %v1318 = vsel %vm1254, %v1286, %v1146
        %v1319 = vsel %vm1255, %v1287, %v1153
        %v1320 = vsel %vm1256, %v1288, %v1160
        %vm1321 = vcmp.gt.s32.totalorder %v1289, 0
        %vm1322 = vcmp.gt.s32.totalorder %v1290, 0
        %vm1323 = vcmp.gt.s32.totalorder %v1291, 0
        %vm1324 = vcmp.gt.s32.totalorder %v1292, 0
        %vm1325 = vcmp.gt.s32.totalorder %v1293, 0
        %vm1326 = vcmp.gt.s32.totalorder %v1294, 0
        %vm1327 = vcmp.gt.s32.totalorder %v1295, 0
        %vm1328 = vcmp.gt.s32.totalorder %v1296, 0
        %vm1329 = vcmp.gt.s32.totalorder %v1297, 0
        %vm1330 = vcmp.gt.s32.totalorder %v1298, 0
        %vm1331 = vcmp.gt.s32.totalorder %v1299, 0
        %vm1332 = vcmp.gt.s32.totalorder %v1300, 0
        %vm1333 = vcmp.gt.s32.totalorder %v1301, 0
        %vm1334 = vcmp.gt.s32.totalorder %v1302, 0
        %vm1335 = vcmp.gt.s32.totalorder %v1303, 0
        %vm1336 = vcmp.gt.s32.totalorder %v1304, 0
        %vm1337 = vcmp.gt.s32.totalorder %v1305, 0
        %vm1338 = vcmp.gt.s32.totalorder %v1306, 0
        %vm1339 = vcmp.gt.s32.totalorder %v1307, 0
        %vm1340 = vcmp.gt.s32.totalorder %v1308, 0
        %vm1341 = vcmp.gt.s32.totalorder %v1309, 0
        %vm1342 = vcmp.gt.s32.totalorder %v1310, 0
        %vm1343 = vcmp.gt.s32.totalorder %v1311, 0
        %vm1344 = vcmp.gt.s32.totalorder %v1312, 0
        %vm1345 = vcmp.gt.s32.totalorder %v1313, 0
        %vm1346 = vcmp.gt.s32.totalorder %v1314, 0
        %vm1347 = vcmp.gt.s32.totalorder %v1315, 0
        %vm1348 = vcmp.gt.s32.totalorder %v1316, 0
        %vm1349 = vcmp.gt.s32.totalorder %v1317, 0
        %vm1350 = vcmp.gt.s32.totalorder %v1318, 0
        %vm1351 = vcmp.gt.s32.totalorder %v1319, 0
        %vm1352 = vcmp.gt.s32.totalorder %v1320, 0
        %vm1353 = vcmp.lt.s32.totalorder %v1289, 15
        %vm1354 = vcmp.lt.s32.totalorder %v1290, 15
        %vm1355 = vcmp.lt.s32.totalorder %v1291, 15
        %vm1356 = vcmp.lt.s32.totalorder %v1292, 15
        %vm1357 = vcmp.lt.s32.totalorder %v1293, 15
        %vm1358 = vcmp.lt.s32.totalorder %v1294, 15
        %vm1359 = vcmp.lt.s32.totalorder %v1295, 15
        %vm1360 = vcmp.lt.s32.totalorder %v1296, 15
        %vm1361 = vcmp.lt.s32.totalorder %v1297, 15
        %vm1362 = vcmp.lt.s32.totalorder %v1298, 15
        %vm1363 = vcmp.lt.s32.totalorder %v1299, 15
        %vm1364 = vcmp.lt.s32.totalorder %v1300, 15
        %vm1365 = vcmp.lt.s32.totalorder %v1301, 15
        %vm1366 = vcmp.lt.s32.totalorder %v1302, 15
        %vm1367 = vcmp.lt.s32.totalorder %v1303, 15
        %vm1368 = vcmp.lt.s32.totalorder %v1304, 15
        %vm1369 = vcmp.lt.s32.totalorder %v1305, 15
        %vm1370 = vcmp.lt.s32.totalorder %v1306, 15
        %vm1371 = vcmp.lt.s32.totalorder %v1307, 15
        %vm1372 = vcmp.lt.s32.totalorder %v1308, 15
        %vm1373 = vcmp.lt.s32.totalorder %v1309, 15
        %vm1374 = vcmp.lt.s32.totalorder %v1310, 15
        %vm1375 = vcmp.lt.s32.totalorder %v1311, 15
        %vm1376 = vcmp.lt.s32.totalorder %v1312, 15
        %vm1377 = vcmp.lt.s32.totalorder %v1313, 15
        %vm1378 = vcmp.lt.s32.totalorder %v1314, 15
        %vm1379 = vcmp.lt.s32.totalorder %v1315, 15
        %vm1380 = vcmp.lt.s32.totalorder %v1316, 15
        %vm1381 = vcmp.lt.s32.totalorder %v1317, 15
        %vm1382 = vcmp.lt.s32.totalorder %v1318, 15
        %vm1383 = vcmp.lt.s32.totalorder %v1319, 15
        %vm1384 = vcmp.lt.s32.totalorder %v1320, 15
        %v1385 = vld [vmem:[#allocation2] sm:$0xff]
        %v1386 = vld [vmem:[#allocation2 + $0x8] sm:$0xff]
        %v1387 = vld [vmem:[#allocation2 + $0x10] sm:$0xff]
        %v1388 = vld [vmem:[#allocation2 + $0x18] sm:$0xff]
        %v1389 = vld [vmem:[#allocation2 + $0x20] sm:$0xff]
        %v1390 = vld [vmem:[#allocation2 + $0x28] sm:$0xff]
        %v1391 = vld [vmem:[#allocation2 + $0x30] sm:$0xff]
        %v1392 = vld [vmem:[#allocation2 + $0x38] sm:$0xff]
        %v1393 = vld [vmem:[#allocation2 + $0x40] sm:$0xff]
        %v1394 = vld [vmem:[#allocation2 + $0x48] sm:$0xff]
        %v1395 = vld [vmem:[#allocation2 + $0x50] sm:$0xff]
        %v1396 = vld [vmem:[#allocation2 + $0x58] sm:$0xff]
        %v1397 = vld [vmem:[#allocation2 + $0x60] sm:$0xff]
        %v1398 = vld [vmem:[#allocation2 + $0x68] sm:$0xff]
        %v1399 = vld [vmem:[#allocation2 + $0x70] sm:$0xff]
        %v1400 = vld [vmem:[#allocation2 + $0x78] sm:$0xff]
        %v1401 = vld [vmem:[#allocation2 + $0x80] sm:$0xff]
        %v1402 = vld [vmem:[#allocation2 + $0x88] sm:$0xff]
        %v1403 = vld [vmem:[#allocation2 + $0x90] sm:$0xff]
        %v1404 = vld [vmem:[#allocation2 + $0x98] sm:$0xff]
        %v1405 = vld [vmem:[#allocation2 + $0xa0] sm:$0xff]
        %v1406 = vld [vmem:[#allocation2 + $0xa8] sm:$0xff]
        %v1407 = vld [vmem:[#allocation2 + $0xb0] sm:$0xff]
        %v1408 = vld [vmem:[#allocation2 + $0xb8] sm:$0xff]
        %v1409 = vld [vmem:[#allocation2 + $0xc0] sm:$0xff]
        %v1410 = vld [vmem:[#allocation2 + $0xc8] sm:$0xff]
        %v1411 = vld [vmem:[#allocation2 + $0xd0] sm:$0xff]
        %v1412 = vld [vmem:[#allocation2 + $0xd8] sm:$0xff]
        %v1413 = vld [vmem:[#allocation2 + $0xe0] sm:$0xff]
        %v1414 = vld [vmem:[#allocation2 + $0xe8] sm:$0xff]
        %v1415 = vld [vmem:[#allocation2 + $0xf0] sm:$0xff]
        %v1416 = vld [vmem:[#allocation2 + $0xf8] sm:$0xff]
        %v1417 = vpack.c.bf16 %v1385, %v1385
        %v1418 = vpack.c.bf16 %v1386, %v1386
        %v1419 = vpack.c.bf16 %v1387, %v1387
        %v1420 = vpack.c.bf16 %v1388, %v1388
        %v1421 = vpack.c.bf16 %v1389, %v1389
        %v1422 = vpack.c.bf16 %v1390, %v1390
        %v1423 = vpack.c.bf16 %v1391, %v1391
        %v1424 = vpack.c.bf16 %v1392, %v1392
        %v1425 = vpack.c.bf16 %v1393, %v1393
        %v1426 = vpack.c.bf16 %v1394, %v1394
        %v1427 = vpack.c.bf16 %v1395, %v1395
        %v1428 = vpack.c.bf16 %v1396, %v1396
        %v1429 = vpack.c.bf16 %v1397, %v1397
        %v1430 = vpack.c.bf16 %v1398, %v1398
        %v1431 = vpack.c.bf16 %v1399, %v1399
        %v1432 = vpack.c.bf16 %v1400, %v1400
        %v1433 = vpack.c.bf16 %v1401, %v1401
        %v1434 = vpack.c.bf16 %v1402, %v1402
        %v1435 = vpack.c.bf16 %v1403, %v1403
        %v1436 = vpack.c.bf16 %v1404, %v1404
        %v1437 = vpack.c.bf16 %v1405, %v1405
        %v1438 = vpack.c.bf16 %v1406, %v1406
        %v1439 = vpack.c.bf16 %v1407, %v1407
        %v1440 = vpack.c.bf16 %v1408, %v1408
        %v1441 = vpack.c.bf16 %v1409, %v1409
        %v1442 = vpack.c.bf16 %v1410, %v1410
        %v1443 = vpack.c.bf16 %v1411, %v1411
        %v1444 = vpack.c.bf16 %v1412, %v1412
        %v1445 = vpack.c.bf16 %v1413, %v1413
        %v1446 = vpack.c.bf16 %v1414, %v1414
        %v1447 = vpack.c.bf16 %v1415, %v1415
        %v1448 = vpack.c.bf16 %v1416, %v1416
        %v1449 = vrot.slane %v1385, 7
        %v1450 = vrot.slane %v1386, 7
        %v1451 = vrot.slane %v1387, 7
        %v1452 = vrot.slane %v1388, 7
        %v1453 = vrot.slane %v1389, 7
        %v1454 = vrot.slane %v1390, 7
        %v1455 = vrot.slane %v1391, 7
        %v1456 = vrot.slane %v1392, 7
        %v1457 = vrot.slane %v1393, 7
        %v1458 = vrot.slane %v1394, 7
        %v1459 = vrot.slane %v1395, 7
        %v1460 = vrot.slane %v1396, 7
        %v1461 = vrot.slane %v1397, 7
        %v1462 = vrot.slane %v1398, 7
        %v1463 = vrot.slane %v1399, 7
        %v1464 = vrot.slane %v1400, 7
        %v1465 = vrot.slane %v1401, 7
        %v1466 = vrot.slane %v1402, 7
        %v1467 = vrot.slane %v1403, 7
        %v1468 = vrot.slane %v1404, 7
        %v1469 = vrot.slane %v1405, 7
        %v1470 = vrot.slane %v1406, 7
        %v1471 = vrot.slane %v1407, 7
        %v1472 = vrot.slane %v1408, 7
        %v1473 = vrot.slane %v1409, 7
        %v1474 = vrot.slane %v1410, 7
        %v1475 = vrot.slane %v1411, 7
        %v1476 = vrot.slane %v1412, 7
        %v1477 = vrot.slane %v1413, 7
        %v1478 = vrot.slane %v1414, 7
        %v1479 = vrot.slane %v1415, 7
        %v1480 = vrot.slane %v1416, 7
        %vm1481 = vcmp.lt.s32.totalorder %v905, 1
        %v1482 = vsel %vm1481, %v1479, %v1480
        %v1483 = vsel %vm1481, %v1478, %v1479
        %v1484 = vsel %vm1481, %v1477, %v1478
        %v1485 = vsel %vm1481, %v1476, %v1477
        %v1486 = vsel %vm1481, %v1475, %v1476
        %v1487 = vsel %vm1481, %v1474, %v1475
        %v1488 = vsel %vm1481, %v1473, %v1474
        %v1489 = vsel %vm1481, %v1472, %v1473
        %v1490 = vsel %vm1481, %v1471, %v1472
        %v1491 = vsel %vm1481, %v1470, %v1471
        %v1492 = vsel %vm1481, %v1469, %v1470
        %v1493 = vsel %vm1481, %v1468, %v1469
        %v1494 = vsel %vm1481, %v1467, %v1468
        %v1495 = vsel %vm1481, %v1466, %v1467
        %v1496 = vsel %vm1481, %v1465, %v1466
        %v1497 = vsel %vm1481, %v1464, %v1465
        %v1498 = vsel %vm1481, %v1463, %v1464
        %v1499 = vsel %vm1481, %v1462, %v1463
        %v1500 = vsel %vm1481, %v1461, %v1462
        %v1501 = vsel %vm1481, %v1460, %v1461
        %v1502 = vsel %vm1481, %v1459, %v1460
        %v1503 = vsel %vm1481, %v1458, %v1459
        %v1504 = vsel %vm1481, %v1457, %v1458
        %v1505 = vsel %vm1481, %v1456, %v1457
        %v1506 = vsel %vm1481, %v1455, %v1456
        %v1507 = vsel %vm1481, %v1454, %v1455
        %v1508 = vsel %vm1481, %v1453, %v1454
        %v1509 = vsel %vm1481, %v1452, %v1453
        %v1510 = vsel %vm1481, %v1451, %v1452
        %v1511 = vsel %vm1481, %v1450, %v1451
        %v1512 = vsel %vm1481, %v1449, %v1450
        %v1513 = vsel %vm1481, %v1480, %v1449
        %v1514 = vpack.c.bf16 %v1513, %v1513
        %v1515 = vpack.c.bf16 %v1512, %v1512
        %v1516 = vpack.c.bf16 %v1511, %v1511
        %v1517 = vpack.c.bf16 %v1510, %v1510
        %v1518 = vpack.c.bf16 %v1509, %v1509
        %v1519 = vpack.c.bf16 %v1508, %v1508
        %v1520 = vpack.c.bf16 %v1507, %v1507
        %v1521 = vpack.c.bf16 %v1506, %v1506
        %v1522 = vpack.c.bf16 %v1505, %v1505
        %v1523 = vpack.c.bf16 %v1504, %v1504
        %v1524 = vpack.c.bf16 %v1503, %v1503
        %v1525 = vpack.c.bf16 %v1502, %v1502
        %v1526 = vpack.c.bf16 %v1501, %v1501
        %v1527 = vpack.c.bf16 %v1500, %v1500
        %v1528 = vpack.c.bf16 %v1499, %v1499
        %v1529 = vpack.c.bf16 %v1498, %v1498
        %v1530 = vpack.c.bf16 %v1497, %v1497
        %v1531 = vpack.c.bf16 %v1496, %v1496
        %v1532 = vpack.c.bf16 %v1495, %v1495
        %v1533 = vpack.c.bf16 %v1494, %v1494
        %v1534 = vpack.c.bf16 %v1493, %v1493
        %v1535 = vpack.c.bf16 %v1492, %v1492
        %v1536 = vpack.c.bf16 %v1491, %v1491
        %v1537 = vpack.c.bf16 %v1490, %v1490
        %v1538 = vpack.c.bf16 %v1489, %v1489
        %v1539 = vpack.c.bf16 %v1488, %v1488
        %v1540 = vpack.c.bf16 %v1487, %v1487
        %v1541 = vpack.c.bf16 %v1486, %v1486
        %v1542 = vpack.c.bf16 %v1485, %v1485
        %v1543 = vpack.c.bf16 %v1484, %v1484
        %v1544 = vpack.c.bf16 %v1483, %v1483
        %v1545 = vpack.c.bf16 %v1482, %v1482
        %v1546 = vsel %vm1321, 1, 0
        %v1547 = vsel %vm1322, 1, 0
        %v1548 = vsel %vm1323, 1, 0
        %v1549 = vsel %vm1324, 1, 0
        %v1550 = vsel %vm1325, 1, 0
        %v1551 = vsel %vm1326, 1, 0
        %v1552 = vsel %vm1327, 1, 0
        %v1553 = vsel %vm1328, 1, 0
        %v1554 = vsel %vm1329, 1, 0
        %v1555 = vsel %vm1330, 1, 0
        %v1556 = vsel %vm1331, 1, 0
        %v1557 = vsel %vm1332, 1, 0
        %v1558 = vsel %vm1333, 1, 0
        %v1559 = vsel %vm1334, 1, 0
        %v1560 = vsel %vm1335, 1, 0
        %v1561 = vsel %vm1336, 1, 0
        %v1562 = vsel %vm1337, 1, 0
        %v1563 = vsel %vm1338, 1, 0
        %v1564 = vsel %vm1339, 1, 0
        %v1565 = vsel %vm1340, 1, 0
        %v1566 = vsel %vm1341, 1, 0
        %v1567 = vsel %vm1342, 1, 0
        %v1568 = vsel %vm1343, 1, 0
        %v1569 = vsel %vm1344, 1, 0
        %v1570 = vsel %vm1345, 1, 0
        %v1571 = vsel %vm1346, 1, 0
        %v1572 = vsel %vm1347, 1, 0
        %v1573 = vsel %vm1348, 1, 0
        %v1574 = vsel %vm1349, 1, 0
        %v1575 = vsel %vm1350, 1, 0
        %v1576 = vsel %vm1351, 1, 0
        %v1577 = vsel %vm1352, 1, 0
        %vm1578 = vcmp.eq.s32.totalorder %v1546, 1
        %vm1579 = vcmp.eq.s32.totalorder %v1547, 1
        %vm1580 = vcmp.eq.s32.totalorder %v1548, 1
        %vm1581 = vcmp.eq.s32.totalorder %v1549, 1
        %vm1582 = vcmp.eq.s32.totalorder %v1550, 1
        %vm1583 = vcmp.eq.s32.totalorder %v1551, 1
        %vm1584 = vcmp.eq.s32.totalorder %v1552, 1
        %vm1585 = vcmp.eq.s32.totalorder %v1553, 1
        %vm1586 = vcmp.eq.s32.totalorder %v1554, 1
        %vm1587 = vcmp.eq.s32.totalorder %v1555, 1
        %vm1588 = vcmp.eq.s32.totalorder %v1556, 1
        %vm1589 = vcmp.eq.s32.totalorder %v1557, 1
        %vm1590 = vcmp.eq.s32.totalorder %v1558, 1
        %vm1591 = vcmp.eq.s32.totalorder %v1559, 1
        %vm1592 = vcmp.eq.s32.totalorder %v1560, 1
        %vm1593 = vcmp.eq.s32.totalorder %v1561, 1
        %vm1594 = vcmp.eq.s32.totalorder %v1562, 1
        %vm1595 = vcmp.eq.s32.totalorder %v1563, 1
        %vm1596 = vcmp.eq.s32.totalorder %v1564, 1
        %vm1597 = vcmp.eq.s32.totalorder %v1565, 1
        %vm1598 = vcmp.eq.s32.totalorder %v1566, 1
        %vm1599 = vcmp.eq.s32.totalorder %v1567, 1
        %vm1600 = vcmp.eq.s32.totalorder %v1568, 1
        %vm1601 = vcmp.eq.s32.totalorder %v1569, 1
        %vm1602 = vcmp.eq.s32.totalorder %v1570, 1
        %vm1603 = vcmp.eq.s32.totalorder %v1571, 1
        %vm1604 = vcmp.eq.s32.totalorder %v1572, 1
        %vm1605 = vcmp.eq.s32.totalorder %v1573, 1
        %vm1606 = vcmp.eq.s32.totalorder %v1574, 1
        %vm1607 = vcmp.eq.s32.totalorder %v1575, 1
        %vm1608 = vcmp.eq.s32.totalorder %v1576, 1
        %vm1609 = vcmp.eq.s32.totalorder %v1577, 1
        %vm1610 = vmpackc.low %vm1578, %vm1578
        %vm1611 = vmpackc.low %vm1579, %vm1579
        %vm1612 = vmpackc.low %vm1580, %vm1580
        %vm1613 = vmpackc.low %vm1581, %vm1581
        %vm1614 = vmpackc.low %vm1582, %vm1582
        %vm1615 = vmpackc.low %vm1583, %vm1583
        %vm1616 = vmpackc.low %vm1584, %vm1584
        %vm1617 = vmpackc.low %vm1585, %vm1585
        %vm1618 = vmpackc.low %vm1586, %vm1586
        %vm1619 = vmpackc.low %vm1587, %vm1587
        %vm1620 = vmpackc.low %vm1588, %vm1588
        %vm1621 = vmpackc.low %vm1589, %vm1589
        %vm1622 = vmpackc.low %vm1590, %vm1590
        %vm1623 = vmpackc.low %vm1591, %vm1591
        %vm1624 = vmpackc.low %vm1592, %vm1592
        %vm1625 = vmpackc.low %vm1593, %vm1593
        %vm1626 = vmpackc.low %vm1594, %vm1594
        %vm1627 = vmpackc.low %vm1595, %vm1595
        %vm1628 = vmpackc.low %vm1596, %vm1596
        %vm1629 = vmpackc.low %vm1597, %vm1597
        %vm1630 = vmpackc.low %vm1598, %vm1598
        %vm1631 = vmpackc.low %vm1599, %vm1599
        %vm1632 = vmpackc.low %vm1600, %vm1600
        %vm1633 = vmpackc.low %vm1601, %vm1601
        %vm1634 = vmpackc.low %vm1602, %vm1602
        %vm1635 = vmpackc.low %vm1603, %vm1603
        %vm1636 = vmpackc.low %vm1604, %vm1604
        %vm1637 = vmpackc.low %vm1605, %vm1605
        %vm1638 = vmpackc.low %vm1606, %vm1606
        %vm1639 = vmpackc.low %vm1607, %vm1607
        %vm1640 = vmpackc.low %vm1608, %vm1608
        %vm1641 = vmpackc.low %vm1609, %vm1609
        %v1642 = vsel %vm1610, %v1514, 0
        %v1643 = vsel %vm1611, %v1515, 0
        %v1644 = vsel %vm1612, %v1516, 0
        %v1645 = vsel %vm1613, %v1517, 0
        %v1646 = vsel %vm1614, %v1518, 0
        %v1647 = vsel %vm1615, %v1519, 0
        %v1648 = vsel %vm1616, %v1520, 0
        %v1649 = vsel %vm1617, %v1521, 0
        %v1650 = vsel %vm1618, %v1522, 0
        %v1651 = vsel %vm1619, %v1523, 0
        %v1652 = vsel %vm1620, %v1524, 0
        %v1653 = vsel %vm1621, %v1525, 0
        %v1654 = vsel %vm1622, %v1526, 0
        %v1655 = vsel %vm1623, %v1527, 0
        %v1656 = vsel %vm1624, %v1528, 0
        %v1657 = vsel %vm1625, %v1529, 0
        %v1658 = vsel %vm1626, %v1530, 0
        %v1659 = vsel %vm1627, %v1531, 0
        %v1660 = vsel %vm1628, %v1532, 0
        %v1661 = vsel %vm1629, %v1533, 0
        %v1662 = vsel %vm1630, %v1534, 0
        %v1663 = vsel %vm1631, %v1535, 0
        %v1664 = vsel %vm1632, %v1536, 0
        %v1665 = vsel %vm1633, %v1537, 0
        %v1666 = vsel %vm1634, %v1538, 0
        %v1667 = vsel %vm1635, %v1539, 0
        %v1668 = vsel %vm1636, %v1540, 0
        %v1669 = vsel %vm1637, %v1541, 0
        %v1670 = vsel %vm1638, %v1542, 0
        %v1671 = vsel %vm1639, %v1543, 0
        %v1672 = vsel %vm1640, %v1544, 0
        %v1673 = vsel %vm1641, %v1545, 0
        %v1674 = vrot.slane %v1385, 1
        %v1675 = vrot.slane %v1386, 1
        %v1676 = vrot.slane %v1387, 1
        %v1677 = vrot.slane %v1388, 1
        %v1678 = vrot.slane %v1389, 1
        %v1679 = vrot.slane %v1390, 1
        %v1680 = vrot.slane %v1391, 1
        %v1681 = vrot.slane %v1392, 1
        %v1682 = vrot.slane %v1393, 1
        %v1683 = vrot.slane %v1394, 1
        %v1684 = vrot.slane %v1395, 1
        %v1685 = vrot.slane %v1396, 1
        %v1686 = vrot.slane %v1397, 1
        %v1687 = vrot.slane %v1398, 1
        %v1688 = vrot.slane %v1399, 1
        %v1689 = vrot.slane %v1400, 1
        %v1690 = vrot.slane %v1401, 1
        %v1691 = vrot.slane %v1402, 1
        %v1692 = vrot.slane %v1403, 1
        %v1693 = vrot.slane %v1404, 1
        %v1694 = vrot.slane %v1405, 1
        %v1695 = vrot.slane %v1406, 1
        %v1696 = vrot.slane %v1407, 1
        %v1697 = vrot.slane %v1408, 1
        %v1698 = vrot.slane %v1409, 1
        %v1699 = vrot.slane %v1410, 1
        %v1700 = vrot.slane %v1411, 1
        %v1701 = vrot.slane %v1412, 1
        %v1702 = vrot.slane %v1413, 1
        %v1703 = vrot.slane %v1414, 1
        %v1704 = vrot.slane %v1415, 1
        %v1705 = vrot.slane %v1416, 1
        %vm1706 = vcmp.lt.s32.totalorder %v905, 7
        %v1707 = vsel %vm1706, %v1704, %v1705
        %v1708 = vsel %vm1706, %v1703, %v1704
        %v1709 = vsel %vm1706, %v1702, %v1703
        %v1710 = vsel %vm1706, %v1701, %v1702
        %v1711 = vsel %vm1706, %v1700, %v1701
        %v1712 = vsel %vm1706, %v1699, %v1700
        %v1713 = vsel %vm1706, %v1698, %v1699
        %v1714 = vsel %vm1706, %v1697, %v1698
        %v1715 = vsel %vm1706, %v1696, %v1697
        %v1716 = vsel %vm1706, %v1695, %v1696
        %v1717 = vsel %vm1706, %v1694, %v1695
        %v1718 = vsel %vm1706, %v1693, %v1694
        %v1719 = vsel %vm1706, %v1692, %v1693
        %v1720 = vsel %vm1706, %v1691, %v1692
        %v1721 = vsel %vm1706, %v1690, %v1691
        %v1722 = vsel %vm1706, %v1689, %v1690
        %v1723 = vsel %vm1706, %v1688, %v1689
        %v1724 = vsel %vm1706, %v1687, %v1688
        %v1725 = vsel %vm1706, %v1686, %v1687
        %v1726 = vsel %vm1706, %v1685, %v1686
        %v1727 = vsel %vm1706, %v1684, %v1685
        %v1728 = vsel %vm1706, %v1683, %v1684
        %v1729 = vsel %vm1706, %v1682, %v1683
        %v1730 = vsel %vm1706, %v1681, %v1682
        %v1731 = vsel %vm1706, %v1680, %v1681
        %v1732 = vsel %vm1706, %v1679, %v1680
        %v1733 = vsel %vm1706, %v1678, %v1679
        %v1734 = vsel %vm1706, %v1677, %v1678
        %v1735 = vsel %vm1706, %v1676, %v1677
        %v1736 = vsel %vm1706, %v1675, %v1676
        %v1737 = vsel %vm1706, %v1674, %v1675
        %v1738 = vsel %vm1706, %v1705, %v1674
        %v1739 = vpack.c.bf16 %v1737, %v1737
        %v1740 = vpack.c.bf16 %v1736, %v1736
        %v1741 = vpack.c.bf16 %v1735, %v1735
        %v1742 = vpack.c.bf16 %v1734, %v1734
        %v1743 = vpack.c.bf16 %v1733, %v1733
        %v1744 = vpack.c.bf16 %v1732, %v1732
        %v1745 = vpack.c.bf16 %v1731, %v1731
        %v1746 = vpack.c.bf16 %v1730, %v1730
        %v1747 = vpack.c.bf16 %v1729, %v1729
        %v1748 = vpack.c.bf16 %v1728, %v1728
        %v1749 = vpack.c.bf16 %v1727, %v1727
        %v1750 = vpack.c.bf16 %v1726, %v1726
        %v1751 = vpack.c.bf16 %v1725, %v1725
        %v1752 = vpack.c.bf16 %v1724, %v1724
        %v1753 = vpack.c.bf16 %v1723, %v1723
        %v1754 = vpack.c.bf16 %v1722, %v1722
        %v1755 = vpack.c.bf16 %v1721, %v1721
        %v1756 = vpack.c.bf16 %v1720, %v1720
        %v1757 = vpack.c.bf16 %v1719, %v1719
        %v1758 = vpack.c.bf16 %v1718, %v1718
        %v1759 = vpack.c.bf16 %v1717, %v1717
        %v1760 = vpack.c.bf16 %v1716, %v1716
        %v1761 = vpack.c.bf16 %v1715, %v1715
        %v1762 = vpack.c.bf16 %v1714, %v1714
        %v1763 = vpack.c.bf16 %v1713, %v1713
        %v1764 = vpack.c.bf16 %v1712, %v1712
        %v1765 = vpack.c.bf16 %v1711, %v1711
        %v1766 = vpack.c.bf16 %v1710, %v1710
        %v1767 = vpack.c.bf16 %v1709, %v1709
        %v1768 = vpack.c.bf16 %v1708, %v1708
        %v1769 = vpack.c.bf16 %v1707, %v1707
        %v1770 = vpack.c.bf16 %v1738, %v1738
        %v1771 = vsel %vm1353, 1, 0
        %v1772 = vsel %vm1354, 1, 0
        %v1773 = vsel %vm1355, 1, 0
        %v1774 = vsel %vm1356, 1, 0
        %v1775 = vsel %vm1357, 1, 0
        %v1776 = vsel %vm1358, 1, 0
        %v1777 = vsel %vm1359, 1, 0
        %v1778 = vsel %vm1360, 1, 0
        %v1779 = vsel %vm1361, 1, 0
        %v1780 = vsel %vm1362, 1, 0
        %v1781 = vsel %vm1363, 1, 0
        %v1782 = vsel %vm1364, 1, 0
        %v1783 = vsel %vm1365, 1, 0
        %v1784 = vsel %vm1366, 1, 0
        %v1785 = vsel %vm1367, 1, 0
        %v1786 = vsel %vm1368, 1, 0
        %v1787 = vsel %vm1369, 1, 0
        %v1788 = vsel %vm1370, 1, 0
        %v1789 = vsel %vm1371, 1, 0
        %v1790 = vsel %vm1372, 1, 0
        %v1791 = vsel %vm1373, 1, 0
        %v1792 = vsel %vm1374, 1, 0
        %v1793 = vsel %vm1375, 1, 0
        %v1794 = vsel %vm1376, 1, 0
        %v1795 = vsel %vm1377, 1, 0
        %v1796 = vsel %vm1378, 1, 0
        %v1797 = vsel %vm1379, 1, 0
        %v1798 = vsel %vm1380, 1, 0
        %v1799 = vsel %vm1381, 1, 0
        %v1800 = vsel %vm1382, 1, 0
        %v1801 = vsel %vm1383, 1, 0
        %v1802 = vsel %vm1384, 1, 0
        %vm1803 = vcmp.eq.s32.totalorder %v1771, 1
        %vm1804 = vcmp.eq.s32.totalorder %v1772, 1
        %vm1805 = vcmp.eq.s32.totalorder %v1773, 1
        %vm1806 = vcmp.eq.s32.totalorder %v1774, 1
        %vm1807 = vcmp.eq.s32.totalorder %v1775, 1
        %vm1808 = vcmp.eq.s32.totalorder %v1776, 1
        %vm1809 = vcmp.eq.s32.totalorder %v1777, 1
        %vm1810 = vcmp.eq.s32.totalorder %v1778, 1
        %vm1811 = vcmp.eq.s32.totalorder %v1779, 1
        %vm1812 = vcmp.eq.s32.totalorder %v1780, 1
        %vm1813 = vcmp.eq.s32.totalorder %v1781, 1
        %vm1814 = vcmp.eq.s32.totalorder %v1782, 1
        %vm1815 = vcmp.eq.s32.totalorder %v1783, 1
        %vm1816 = vcmp.eq.s32.totalorder %v1784, 1
        %vm1817 = vcmp.eq.s32.totalorder %v1785, 1
        %vm1818 = vcmp.eq.s32.totalorder %v1786, 1
        %vm1819 = vcmp.eq.s32.totalorder %v1787, 1
        %vm1820 = vcmp.eq.s32.totalorder %v1788, 1
        %vm1821 = vcmp.eq.s32.totalorder %v1789, 1
        %vm1822 = vcmp.eq.s32.totalorder %v1790, 1
        %vm1823 = vcmp.eq.s32.totalorder %v1791, 1
        %vm1824 = vcmp.eq.s32.totalorder %v1792, 1
        %vm1825 = vcmp.eq.s32.totalorder %v1793, 1
        %vm1826 = vcmp.eq.s32.totalorder %v1794, 1
        %vm1827 = vcmp.eq.s32.totalorder %v1795, 1
        %vm1828 = vcmp.eq.s32.totalorder %v1796, 1
        %vm1829 = vcmp.eq.s32.totalorder %v1797, 1
        %vm1830 = vcmp.eq.s32.totalorder %v1798, 1
        %vm1831 = vcmp.eq.s32.totalorder %v1799, 1
        %vm1832 = vcmp.eq.s32.totalorder %v1800, 1
        %vm1833 = vcmp.eq.s32.totalorder %v1801, 1
        %vm1834 = vcmp.eq.s32.totalorder %v1802, 1
        %vm1835 = vmpackc.low %vm1803, %vm1803
        %vm1836 = vmpackc.low %vm1804, %vm1804
        %vm1837 = vmpackc.low %vm1805, %vm1805
        %vm1838 = vmpackc.low %vm1806, %vm1806
        %vm1839 = vmpackc.low %vm1807, %vm1807
        %vm1840 = vmpackc.low %vm1808, %vm1808
        %vm1841 = vmpackc.low %vm1809, %vm1809
        %vm1842 = vmpackc.low %vm1810, %vm1810
        %vm1843 = vmpackc.low %vm1811, %vm1811
        %vm1844 = vmpackc.low %vm1812, %vm1812
        %vm1845 = vmpackc.low %vm1813, %vm1813
        %vm1846 = vmpackc.low %vm1814, %vm1814
        %vm1847 = vmpackc.low %vm1815, %vm1815
        %vm1848 = vmpackc.low %vm1816, %vm1816
        %vm1849 = vmpackc.low %vm1817, %vm1817
        %vm1850 = vmpackc.low %vm1818, %vm1818
        %vm1851 = vmpackc.low %vm1819, %vm1819
        %vm1852 = vmpackc.low %vm1820, %vm1820
        %vm1853 = vmpackc.low %vm1821, %vm1821
        %vm1854 = vmpackc.low %vm1822, %vm1822
        %vm1855 = vmpackc.low %vm1823, %vm1823
        %vm1856 = vmpackc.low %vm1824, %vm1824
        %vm1857 = vmpackc.low %vm1825, %vm1825
        %vm1858 = vmpackc.low %vm1826, %vm1826
        %vm1859 = vmpackc.low %vm1827, %vm1827
        %vm1860 = vmpackc.low %vm1828, %vm1828
        %vm1861 = vmpackc.low %vm1829, %vm1829
        %vm1862 = vmpackc.low %vm1830, %vm1830
        %vm1863 = vmpackc.low %vm1831, %vm1831
        %vm1864 = vmpackc.low %vm1832, %vm1832
        %vm1865 = vmpackc.low %vm1833, %vm1833
        %vm1866 = vmpackc.low %vm1834, %vm1834
        %v1867 = vsel %vm1835, %v1739, 0
        %v1868 = vsel %vm1836, %v1740, 0
        %v1869 = vsel %vm1837, %v1741, 0
        %v1870 = vsel %vm1838, %v1742, 0
        %v1871 = vsel %vm1839, %v1743, 0
        %v1872 = vsel %vm1840, %v1744, 0
        %v1873 = vsel %vm1841, %v1745, 0
        %v1874 = vsel %vm1842, %v1746, 0
        %v1875 = vsel %vm1843, %v1747, 0
        %v1876 = vsel %vm1844, %v1748, 0
        %v1877 = vsel %vm1845, %v1749, 0
        %v1878 = vsel %vm1846, %v1750, 0
        %v1879 = vsel %vm1847, %v1751, 0
        %v1880 = vsel %vm1848, %v1752, 0
        %v1881 = vsel %vm1849, %v1753, 0
        %v1882 = vsel %vm1850, %v1754, 0
        %v1883 = vsel %vm1851, %v1755, 0
        %v1884 = vsel %vm1852, %v1756, 0
        %v1885 = vsel %vm1853, %v1757, 0
        %v1886 = vsel %vm1854, %v1758, 0
        %v1887 = vsel %vm1855, %v1759, 0
        %v1888 = vsel %vm1856, %v1760, 0
        %v1889 = vsel %vm1857, %v1761, 0
        %v1890 = vsel %vm1858, %v1762, 0
        %v1891 = vsel %vm1859, %v1763, 0
        %v1892 = vsel %vm1860, %v1764, 0
        %v1893 = vsel %vm1861, %v1765, 0
        %v1894 = vsel %vm1862, %v1766, 0
        %v1895 = vsel %vm1863, %v1767, 0
        %v1896 = vsel %vm1864, %v1768, 0
        %v1897 = vsel %vm1865, %v1769, 0
        %v1898 = vsel %vm1866, %v1770, 0
        %v1931 = vunpack.c.l.b16 %v1642
        %v1932 = vunpack.c.l.b16 %v1643
        %v1933 = vunpack.c.l.b16 %v1644
        %v1934 = vunpack.c.l.b16 %v1645
        %v1935 = vunpack.c.l.b16 %v1646
        %v1936 = vunpack.c.l.b16 %v1647
        %v1937 = vunpack.c.l.b16 %v1648
        %v1938 = vunpack.c.l.b16 %v1649
        %v1939 = vunpack.c.l.b16 %v1650
        %v1940 = vunpack.c.l.b16 %v1651
        %v1941 = vunpack.c.l.b16 %v1652
        %v1942 = vunpack.c.l.b16 %v1653
        %v1943 = vunpack.c.l.b16 %v1654
        %v1944 = vunpack.c.l.b16 %v1655
        %v1945 = vunpack.c.l.b16 %v1656
        %v1946 = vunpack.c.l.b16 %v1657
        %v1947 = vunpack.c.l.b16 %v1658
        %v1948 = vunpack.c.l.b16 %v1659
        %v1949 = vunpack.c.l.b16 %v1660
        %v1950 = vunpack.c.l.b16 %v1661
        %v1951 = vunpack.c.l.b16 %v1662
        %v1952 = vunpack.c.l.b16 %v1663
        %v1953 = vunpack.c.l.b16 %v1664
        %v1954 = vunpack.c.l.b16 %v1665
        %v1955 = vunpack.c.l.b16 %v1666
        %v1956 = vunpack.c.l.b16 %v1667
        %v1957 = vunpack.c.l.b16 %v1668
        %v1958 = vunpack.c.l.b16 %v1669
        %v1959 = vunpack.c.l.b16 %v1670
        %v1960 = vunpack.c.l.b16 %v1671
        %v1961 = vunpack.c.l.b16 %v1672
        %v1962 = vunpack.c.l.b16 %v1673
        %v1963 = vpack.c.b16 %v1932, %v1931
        %v1964 = vpack.c.b16 %v1934, %v1933
        %v1965 = vpack.c.b16 %v1936, %v1935
        %v1966 = vpack.c.b16 %v1938, %v1937
        %v1967 = vpack.c.b16 %v1940, %v1939
        %v1968 = vpack.c.b16 %v1942, %v1941
        %v1969 = vpack.c.b16 %v1944, %v1943
        %v1970 = vpack.c.b16 %v1946, %v1945
        %v1971 = vpack.c.b16 %v1948, %v1947
        %v1972 = vpack.c.b16 %v1950, %v1949
        %v1973 = vpack.c.b16 %v1952, %v1951
        %v1974 = vpack.c.b16 %v1954, %v1953
        %v1975 = vpack.c.b16 %v1956, %v1955
        %v1976 = vpack.c.b16 %v1958, %v1957
        %v1977 = vpack.c.b16 %v1960, %v1959
        %v1978 = vpack.c.b16 %v1962, %v1961
        %v2027 = vunpack.c.l.b16 %v1417
        %v2028 = vunpack.c.l.b16 %v1418
        %v2029 = vunpack.c.l.b16 %v1419
        %v2030 = vunpack.c.l.b16 %v1420
        %v2031 = vunpack.c.l.b16 %v1421
        %v2032 = vunpack.c.l.b16 %v1422
        %v2033 = vunpack.c.l.b16 %v1423
        %v2034 = vunpack.c.l.b16 %v1424
        %v2035 = vunpack.c.l.b16 %v1425
        %v2036 = vunpack.c.l.b16 %v1426
        %v2037 = vunpack.c.l.b16 %v1427
        %v2038 = vunpack.c.l.b16 %v1428
        %v2039 = vunpack.c.l.b16 %v1429
        %v2040 = vunpack.c.l.b16 %v1430
        %v2041 = vunpack.c.l.b16 %v1431
        %v2042 = vunpack.c.l.b16 %v1432
        %v2043 = vunpack.c.l.b16 %v1433
        %v2044 = vunpack.c.l.b16 %v1434
        %v2045 = vunpack.c.l.b16 %v1435
        %v2046 = vunpack.c.l.b16 %v1436
        %v2047 = vunpack.c.l.b16 %v1437
        %v2048 = vunpack.c.l.b16 %v1438
        %v2049 = vunpack.c.l.b16 %v1439
        %v2050 = vunpack.c.l.b16 %v1440
        %v2051 = vunpack.c.l.b16 %v1441
        %v2052 = vunpack.c.l.b16 %v1442
        %v2053 = vunpack.c.l.b16 %v1443
        %v2054 = vunpack.c.l.b16 %v1444
        %v2055 = vunpack.c.l.b16 %v1445
        %v2056 = vunpack.c.l.b16 %v1446
        %v2057 = vunpack.c.l.b16 %v1447
        %v2058 = vunpack.c.l.b16 %v1448
        %v2059 = vpack.c.b16 %v2028, %v2027
        %v2060 = vpack.c.b16 %v2030, %v2029
        %v2061 = vpack.c.b16 %v2032, %v2031
        %v2062 = vpack.c.b16 %v2034, %v2033
        %v2063 = vpack.c.b16 %v2036, %v2035
        %v2064 = vpack.c.b16 %v2038, %v2037
        %v2065 = vpack.c.b16 %v2040, %v2039
        %v2066 = vpack.c.b16 %v2042, %v2041
        %v2067 = vpack.c.b16 %v2044, %v2043
        %v2068 = vpack.c.b16 %v2046, %v2045
        %v2069 = vpack.c.b16 %v2048, %v2047
        %v2070 = vpack.c.b16 %v2050, %v2049
        %v2071 = vpack.c.b16 %v2052, %v2051
        %v2072 = vpack.c.b16 %v2054, %v2053
        %v2073 = vpack.c.b16 %v2056, %v2055
        %v2074 = vpack.c.b16 %v2058, %v2057
        %v2123 = vunpack.c.l.b16 %v1867
        %v2124 = vunpack.c.l.b16 %v1868
        %v2125 = vunpack.c.l.b16 %v1869
        %v2126 = vunpack.c.l.b16 %v1870
        %v2127 = vunpack.c.l.b16 %v1871
        %v2128 = vunpack.c.l.b16 %v1872
        %v2129 = vunpack.c.l.b16 %v1873
        %v2130 = vunpack.c.l.b16 %v1874
        %v2131 = vunpack.c.l.b16 %v1875
        %v2132 = vunpack.c.l.b16 %v1876
        %v2133 = vunpack.c.l.b16 %v1877
        %v2134 = vunpack.c.l.b16 %v1878
        %v2135 = vunpack.c.l.b16 %v1879
        %v2136 = vunpack.c.l.b16 %v1880
        %v2137 = vunpack.c.l.b16 %v1881
        %v2138 = vunpack.c.l.b16 %v1882
        %v2139 = vunpack.c.l.b16 %v1883
        %v2140 = vunpack.c.l.b16 %v1884
        %v2141 = vunpack.c.l.b16 %v1885
        %v2142 = vunpack.c.l.b16 %v1886
        %v2143 = vunpack.c.l.b16 %v1887
        %v2144 = vunpack.c.l.b16 %v1888
        %v2145 = vunpack.c.l.b16 %v1889
        %v2146 = vunpack.c.l.b16 %v1890
        %v2147 = vunpack.c.l.b16 %v1891
        %v2148 = vunpack.c.l.b16 %v1892
        %v2149 = vunpack.c.l.b16 %v1893
        %v2150 = vunpack.c.l.b16 %v1894
        %v2151 = vunpack.c.l.b16 %v1895
        %v2152 = vunpack.c.l.b16 %v1896
        %v2153 = vunpack.c.l.b16 %v1897
        %v2154 = vunpack.c.l.b16 %v1898
        %v2155 = vpack.c.b16 %v2124, %v2123
        %v2156 = vpack.c.b16 %v2126, %v2125
        %v2157 = vpack.c.b16 %v2128, %v2127
        %v2158 = vpack.c.b16 %v2130, %v2129
        %v2159 = vpack.c.b16 %v2132, %v2131
        %v2160 = vpack.c.b16 %v2134, %v2133
        %v2161 = vpack.c.b16 %v2136, %v2135
        %v2162 = vpack.c.b16 %v2138, %v2137
        %v2163 = vpack.c.b16 %v2140, %v2139
        %v2164 = vpack.c.b16 %v2142, %v2141
        %v2165 = vpack.c.b16 %v2144, %v2143
        %v2166 = vpack.c.b16 %v2146, %v2145
        %v2167 = vpack.c.b16 %v2148, %v2147
        %v2168 = vpack.c.b16 %v2150, %v2149
        %v2169 = vpack.c.b16 %v2152, %v2151
        %v2170 = vpack.c.b16 %v2154, %v2153
        %v2187 = vld [vmem:[#allocation8] sm:$0xf]
        %v2188 = vld [vmem:[#allocation8 + $0x4] sm:$0xf]
        %v2189 = vld [vmem:[#allocation8 + $0x8] sm:$0xf]
        %v2190 = vld [vmem:[#allocation8 + $0xc] sm:$0xf]
        %v2191 = vld [vmem:[#allocation8 + $0x10] sm:$0xf]
        %v2192 = vld [vmem:[#allocation8 + $0x14] sm:$0xf]
        %v2193 = vld [vmem:[#allocation8 + $0x18] sm:$0xf]
        %v2194 = vld [vmem:[#allocation8 + $0x1c] sm:$0xf]
        %v2195 = vld [vmem:[#allocation8 + $0x20] sm:$0xf]
        %v2196 = vld [vmem:[#allocation8 + $0x24] sm:$0xf]
        %v2197 = vld [vmem:[#allocation8 + $0x28] sm:$0xf]
        %v2198 = vld [vmem:[#allocation8 + $0x2c] sm:$0xf]
        %v2199 = vld [vmem:[#allocation8 + $0x30] sm:$0xf]
        %v2200 = vld [vmem:[#allocation8 + $0x34] sm:$0xf]
        %v2201 = vld [vmem:[#allocation8 + $0x38] sm:$0xf]
        %v2202 = vld [vmem:[#allocation8 + $0x3c] sm:$0xf]
        %v2203 = vld [vmem:[#allocation8 + $0x40] sm:$0xf]
        %v2204 = vld [vmem:[#allocation8 + $0x44] sm:$0xf]
        %v2205 = vld [vmem:[#allocation8 + $0x48] sm:$0xf]
        %v2206 = vld [vmem:[#allocation8 + $0x4c] sm:$0xf]
        %v2207 = vld [vmem:[#allocation8 + $0x50] sm:$0xf]
        %v2208 = vld [vmem:[#allocation8 + $0x54] sm:$0xf]
        %v2209 = vld [vmem:[#allocation8 + $0x58] sm:$0xf]
        %v2210 = vld [vmem:[#allocation8 + $0x5c] sm:$0xf]
        %v2211 = vld [vmem:[#allocation8 + $0x60] sm:$0xf]
        %v2212 = vld [vmem:[#allocation8 + $0x64] sm:$0xf]
        %v2213 = vld [vmem:[#allocation8 + $0x68] sm:$0xf]
        %v2214 = vld [vmem:[#allocation8 + $0x6c] sm:$0xf]
        %v2215 = vld [vmem:[#allocation8 + $0x70] sm:$0xf]
        %v2216 = vld [vmem:[#allocation8 + $0x74] sm:$0xf]
        %v2217 = vld [vmem:[#allocation8 + $0x78] sm:$0xf]
        %v2218 = vld [vmem:[#allocation8 + $0x7c] sm:$0xf]
        %v2219 = vld [vmem:[#allocation8 + $0x80] sm:$0xf]
        %v2220 = vld [vmem:[#allocation8 + $0x84] sm:$0xf]
        %v2221 = vld [vmem:[#allocation8 + $0x88] sm:$0xf]
        %v2222 = vld [vmem:[#allocation8 + $0x8c] sm:$0xf]
        %v2223 = vld [vmem:[#allocation8 + $0x90] sm:$0xf]
        %v2224 = vld [vmem:[#allocation8 + $0x94] sm:$0xf]
        %v2225 = vld [vmem:[#allocation8 + $0x98] sm:$0xf]
        %v2226 = vld [vmem:[#allocation8 + $0x9c] sm:$0xf]
        %v2227 = vld [vmem:[#allocation8 + $0xa0] sm:$0xf]
        %v2228 = vld [vmem:[#allocation8 + $0xa4] sm:$0xf]
        %v2229 = vld [vmem:[#allocation8 + $0xa8] sm:$0xf]
        %v2230 = vld [vmem:[#allocation8 + $0xac] sm:$0xf]
        %v2231 = vld [vmem:[#allocation8 + $0xb0] sm:$0xf]
        %v2232 = vld [vmem:[#allocation8 + $0xb4] sm:$0xf]
        %v2233 = vld [vmem:[#allocation8 + $0xb8] sm:$0xf]
        %v2234 = vld [vmem:[#allocation8 + $0xbc] sm:$0xf]
        %v2235 = vld [vmem:[#allocation2 + $0x100] sm:$0xff]
        %v2236 = vld [vmem:[#allocation2 + $0x108] sm:$0xff]
        %v2237 = vpack.c.bf16 %v2235, %v2235
        %v2238 = vpack.c.bf16 %v2236, %v2236
        %v2239 = vrot.slane %v2235, 7
        %v2240 = vrot.slane %v2236, 7
        %v2241 = vsel %vm1481, %v2239, %v2240
        %v2242 = vsel %vm1481, %v1480, %v2239
        %v2243 = vsel %vm1481, %v2240, %v1451
        %v2244 = vpack.c.bf16 %v2243, %v2243
        %v2245 = vpack.c.bf16 %v2242, %v2242
        %v2246 = vpack.c.bf16 %v2241, %v2241
        %v2247 = vsel %vm1610, %v2244, 0
        %v2248 = vsel %vm1611, %v1517, 0
        %v2249 = vsel %vm1612, %v1518, 0
        %v2250 = vsel %vm1613, %v1519, 0
        %v2251 = vsel %vm1614, %v1520, 0
        %v2252 = vsel %vm1615, %v1521, 0
        %v2253 = vsel %vm1616, %v1522, 0
        %v2254 = vsel %vm1617, %v1523, 0
        %v2255 = vsel %vm1618, %v1524, 0
        %v2256 = vsel %vm1619, %v1525, 0
        %v2257 = vsel %vm1620, %v1526, 0
        %v2258 = vsel %vm1621, %v1527, 0
        %v2259 = vsel %vm1622, %v1528, 0
        %v2260 = vsel %vm1623, %v1529, 0
        %v2261 = vsel %vm1624, %v1530, 0
        %v2262 = vsel %vm1625, %v1531, 0
        %v2263 = vsel %vm1626, %v1532, 0
        %v2264 = vsel %vm1627, %v1533, 0
        %v2265 = vsel %vm1628, %v1534, 0
        %v2266 = vsel %vm1629, %v1535, 0
        %v2267 = vsel %vm1630, %v1536, 0
        %v2268 = vsel %vm1631, %v1537, 0
        %v2269 = vsel %vm1632, %v1538, 0
        %v2270 = vsel %vm1633, %v1539, 0
        %v2271 = vsel %vm1634, %v1540, 0
        %v2272 = vsel %vm1635, %v1541, 0
        %v2273 = vsel %vm1636, %v1542, 0
        %v2274 = vsel %vm1637, %v1543, 0
        %v2275 = vsel %vm1638, %v1544, 0
        %v2276 = vsel %vm1639, %v1545, 0
        %v2277 = vsel %vm1640, %v2245, 0
        %v2278 = vsel %vm1641, %v2246, 0
        %v2279 = vrot.slane %v2235, 1
        %v2280 = vrot.slane %v2236, 1
        %v2281 = vsel %vm1706, %v2279, %v2280
        %v2282 = vsel %vm1706, %v1705, %v2279
        %v2283 = vsel %vm1706, %v2280, %v1676
        %v2284 = vpack.c.bf16 %v2282, %v2282
        %v2285 = vpack.c.bf16 %v2281, %v2281
        %v2286 = vpack.c.bf16 %v2283, %v2283
        %v2287 = vsel %vm1835, %v1741, 0
        %v2288 = vsel %vm1836, %v1742, 0
        %v2289 = vsel %vm1837, %v1743, 0
        %v2290 = vsel %vm1838, %v1744, 0
        %v2291 = vsel %vm1839, %v1745, 0
        %v2292 = vsel %vm1840, %v1746, 0
        %v2293 = vsel %vm1841, %v1747, 0
        %v2294 = vsel %vm1842, %v1748, 0
        %v2295 = vsel %vm1843, %v1749, 0
        %v2296 = vsel %vm1844, %v1750, 0
        %v2297 = vsel %vm1845, %v1751, 0
        %v2298 = vsel %vm1846, %v1752, 0
        %v2299 = vsel %vm1847, %v1753, 0
        %v2300 = vsel %vm1848, %v1754, 0
        %v2301 = vsel %vm1849, %v1755, 0
        %v2302 = vsel %vm1850, %v1756, 0
        %v2303 = vsel %vm1851, %v1757, 0
        %v2304 = vsel %vm1852, %v1758, 0
        %v2305 = vsel %vm1853, %v1759, 0
        %v2306 = vsel %vm1854, %v1760, 0
        %v2307 = vsel %vm1855, %v1761, 0
        %v2308 = vsel %vm1856, %v1762, 0
        %v2309 = vsel %vm1857, %v1763, 0
        %v2310 = vsel %vm1858, %v1764, 0
        %v2311 = vsel %vm1859, %v1765, 0
        %v2312 = vsel %vm1860, %v1766, 0
        %v2313 = vsel %vm1861, %v1767, 0
        %v2314 = vsel %vm1862, %v1768, 0
        %v2315 = vsel %vm1863, %v1769, 0
        %v2316 = vsel %vm1864, %v2284, 0
        %v2317 = vsel %vm1865, %v2285, 0
        %v2318 = vsel %vm1866, %v2286, 0
        %v2351 = vunpack.c.l.b16 %v2247
        %v2352 = vunpack.c.l.b16 %v2248
        %v2353 = vunpack.c.l.b16 %v2249
        %v2354 = vunpack.c.l.b16 %v2250
        %v2355 = vunpack.c.l.b16 %v2251
        %v2356 = vunpack.c.l.b16 %v2252
        %v2357 = vunpack.c.l.b16 %v2253
        %v2358 = vunpack.c.l.b16 %v2254
        %v2359 = vunpack.c.l.b16 %v2255
        %v2360 = vunpack.c.l.b16 %v2256
        %v2361 = vunpack.c.l.b16 %v2257
        %v2362 = vunpack.c.l.b16 %v2258
        %v2363 = vunpack.c.l.b16 %v2259
        %v2364 = vunpack.c.l.b16 %v2260
        %v2365 = vunpack.c.l.b16 %v2261
        %v2366 = vunpack.c.l.b16 %v2262
        %v2367 = vunpack.c.l.b16 %v2263
        %v2368 = vunpack.c.l.b16 %v2264
        %v2369 = vunpack.c.l.b16 %v2265
        %v2370 = vunpack.c.l.b16 %v2266
        %v2371 = vunpack.c.l.b16 %v2267
        %v2372 = vunpack.c.l.b16 %v2268
        %v2373 = vunpack.c.l.b16 %v2269
        %v2374 = vunpack.c.l.b16 %v2270
        %v2375 = vunpack.c.l.b16 %v2271
        %v2376 = vunpack.c.l.b16 %v2272
        %v2377 = vunpack.c.l.b16 %v2273
        %v2378 = vunpack.c.l.b16 %v2274
        %v2379 = vunpack.c.l.b16 %v2275
        %v2380 = vunpack.c.l.b16 %v2276
        %v2381 = vunpack.c.l.b16 %v2277
        %v2382 = vunpack.c.l.b16 %v2278
        %v2383 = vpack.c.b16 %v2352, %v2351
        %v2384 = vpack.c.b16 %v2354, %v2353
        %v2385 = vpack.c.b16 %v2356, %v2355
        %v2386 = vpack.c.b16 %v2358, %v2357
        %v2387 = vpack.c.b16 %v2360, %v2359
        %v2388 = vpack.c.b16 %v2362, %v2361
        %v2389 = vpack.c.b16 %v2364, %v2363
        %v2390 = vpack.c.b16 %v2366, %v2365
        %v2391 = vpack.c.b16 %v2368, %v2367
        %v2392 = vpack.c.b16 %v2370, %v2369
        %v2393 = vpack.c.b16 %v2372, %v2371
        %v2394 = vpack.c.b16 %v2374, %v2373
        %v2395 = vpack.c.b16 %v2376, %v2375
        %v2396 = vpack.c.b16 %v2378, %v2377
        %v2397 = vpack.c.b16 %v2380, %v2379
        %v2398 = vpack.c.b16 %v2382, %v2381
        %v2417 = vunpack.c.l.b16 %v2237
        %v2418 = vunpack.c.l.b16 %v2238
        %v2419 = vpack.c.b16 %v2418, %v2417
        %v2453 = vunpack.c.l.b16 %v2287
        %v2454 = vunpack.c.l.b16 %v2288
        %v2455 = vunpack.c.l.b16 %v2289
        %v2456 = vunpack.c.l.b16 %v2290
        %v2457 = vunpack.c.l.b16 %v2291
        %v2458 = vunpack.c.l.b16 %v2292
        %v2459 = vunpack.c.l.b16 %v2293
        %v2460 = vunpack.c.l.b16 %v2294
        %v2461 = vunpack.c.l.b16 %v2295
        %v2462 = vunpack.c.l.b16 %v2296
        %v2463 = vunpack.c.l.b16 %v2297
        %v2464 = vunpack.c.l.b16 %v2298
        %v2465 = vunpack.c.l.b16 %v2299
        %v2466 = vunpack.c.l.b16 %v2300
        %v2467 = vunpack.c.l.b16 %v2301
        %v2468 = vunpack.c.l.b16 %v2302
        %v2469 = vunpack.c.l.b16 %v2303
        %v2470 = vunpack.c.l.b16 %v2304
        %v2471 = vunpack.c.l.b16 %v2305
        %v2472 = vunpack.c.l.b16 %v2306
        %v2473 = vunpack.c.l.b16 %v2307
        %v2474 = vunpack.c.l.b16 %v2308
        %v2475 = vunpack.c.l.b16 %v2309
        %v2476 = vunpack.c.l.b16 %v2310
        %v2477 = vunpack.c.l.b16 %v2311
        %v2478 = vunpack.c.l.b16 %v2312
        %v2479 = vunpack.c.l.b16 %v2313
        %v2480 = vunpack.c.l.b16 %v2314
        %v2481 = vunpack.c.l.b16 %v2315
        %v2482 = vunpack.c.l.b16 %v2316
        %v2483 = vunpack.c.l.b16 %v2317
        %v2484 = vunpack.c.l.b16 %v2318
        %v2485 = vpack.c.b16 %v2454, %v2453
        %v2486 = vpack.c.b16 %v2456, %v2455
        %v2487 = vpack.c.b16 %v2458, %v2457
        %v2488 = vpack.c.b16 %v2460, %v2459
        %v2489 = vpack.c.b16 %v2462, %v2461
        %v2490 = vpack.c.b16 %v2464, %v2463
        %v2491 = vpack.c.b16 %v2466, %v2465
        %v2492 = vpack.c.b16 %v2468, %v2467
        %v2493 = vpack.c.b16 %v2470, %v2469
        %v2494 = vpack.c.b16 %v2472, %v2471
        %v2495 = vpack.c.b16 %v2474, %v2473
        %v2496 = vpack.c.b16 %v2476, %v2475
        %v2497 = vpack.c.b16 %v2478, %v2477
        %v2498 = vpack.c.b16 %v2480, %v2479
        %v2499 = vpack.c.b16 %v2482, %v2481
        %v2500 = vpack.c.b16 %v2484, %v2483
        %v2517 = vld [vmem:[#allocation8 + $0xc0] sm:$0xf]
        %v2518 = vld [vmem:[#allocation8 + $0xc4] sm:$0xf]
        %v2519 = vld [vmem:[#allocation8 + $0xc8] sm:$0xf]
        %v2520 = vld [vmem:[#allocation8 + $0xcc] sm:$0xf]
        %v2521 = vld [vmem:[#allocation8 + $0xd0] sm:$0xf]
        %v2522 = vld [vmem:[#allocation8 + $0xd4] sm:$0xf]
        %v2523 = vld [vmem:[#allocation8 + $0xd8] sm:$0xf]
        %v2524 = vld [vmem:[#allocation8 + $0xdc] sm:$0xf]
        %v2525 = vld [vmem:[#allocation8 + $0xe0] sm:$0xf]
        %v2526 = vld [vmem:[#allocation8 + $0xe4] sm:$0xf]
        %v2527 = vld [vmem:[#allocation8 + $0xe8] sm:$0xf]
        %v2528 = vld [vmem:[#allocation8 + $0xec] sm:$0xf]
        %v2529 = vld [vmem:[#allocation8 + $0xf0] sm:$0xf]
        %v2530 = vld [vmem:[#allocation8 + $0xf4] sm:$0xf]
        %v2531 = vld [vmem:[#allocation8 + $0xf8] sm:$0xf]
        %v2532 = vld [vmem:[#allocation8 + $0xfc] sm:$0xf]
        %v2533 = vld [vmem:[#allocation8 + $0x100] sm:$0xf]
        %v2534 = vld [vmem:[#allocation8 + $0x104] sm:$0xf]
        %v2535 = vld [vmem:[#allocation8 + $0x108] sm:$0xf]
        %v2536 = vld [vmem:[#allocation8 + $0x10c] sm:$0xf]
        %v2537 = vld [vmem:[#allocation8 + $0x110] sm:$0xf]
        %v2538 = vld [vmem:[#allocation8 + $0x114] sm:$0xf]
        %v2539 = vld [vmem:[#allocation8 + $0x118] sm:$0xf]
        %v2540 = vld [vmem:[#allocation8 + $0x11c] sm:$0xf]
        %v2541 = vld [vmem:[#allocation8 + $0x120] sm:$0xf]
        %v2542 = vld [vmem:[#allocation8 + $0x124] sm:$0xf]
        %v2543 = vld [vmem:[#allocation8 + $0x128] sm:$0xf]
        %v2544 = vld [vmem:[#allocation8 + $0x12c] sm:$0xf]
        %v2545 = vld [vmem:[#allocation8 + $0x130] sm:$0xf]
        %v2546 = vld [vmem:[#allocation8 + $0x134] sm:$0xf]
        %v2547 = vld [vmem:[#allocation8 + $0x138] sm:$0xf]
        %v2548 = vld [vmem:[#allocation8 + $0x13c] sm:$0xf]
        %v2549 = vld [vmem:[#allocation8 + $0x140] sm:$0xf]
        %v2550 = vld [vmem:[#allocation8 + $0x144] sm:$0xf]
        %v2551 = vld [vmem:[#allocation8 + $0x148] sm:$0xf]
        %v2552 = vld [vmem:[#allocation8 + $0x14c] sm:$0xf]
        %v2553 = vld [vmem:[#allocation8 + $0x150] sm:$0xf]
        %v2554 = vld [vmem:[#allocation8 + $0x154] sm:$0xf]
        %v2555 = vld [vmem:[#allocation8 + $0x158] sm:$0xf]
        %v2556 = vld [vmem:[#allocation8 + $0x15c] sm:$0xf]
        %v2557 = vld [vmem:[#allocation8 + $0x160] sm:$0xf]
        %v2558 = vld [vmem:[#allocation8 + $0x164] sm:$0xf]
        %v2559 = vld [vmem:[#allocation8 + $0x168] sm:$0xf]
        %v2560 = vld [vmem:[#allocation8 + $0x16c] sm:$0xf]
        %v2561 = vld [vmem:[#allocation8 + $0x170] sm:$0xf]
        %v2562 = vld [vmem:[#allocation8 + $0x174] sm:$0xf]
        %v2563 = vld [vmem:[#allocation8 + $0x178] sm:$0xf]
        %v2564 = vld [vmem:[#allocation8 + $0x17c] sm:$0xf]
        %v2613 = vunpack.c.l.b16 %v2517
        %v2614 = vunpack.c.l.b16 %v2518
        %v2615 = vunpack.c.l.b16 %v2519
        %v2616 = vunpack.c.l.b16 %v2520
        %v2617 = vunpack.c.l.b16 %v2521
        %v2618 = vunpack.c.l.b16 %v2522
        %v2619 = vunpack.c.l.b16 %v2523
        %v2620 = vunpack.c.l.b16 %v2524
        %v2621 = vunpack.c.l.b16 %v2525
        %v2622 = vunpack.c.l.b16 %v2526
        %v2623 = vunpack.c.l.b16 %v2527
        %v2624 = vunpack.c.l.b16 %v2528
        %v2625 = vunpack.c.l.b16 %v2529
        %v2626 = vunpack.c.l.b16 %v2530
        %v2627 = vunpack.c.l.b16 %v2531
        %v2628 = vunpack.c.l.b16 %v2532
        %v2629 = vunpack.c.l.b16 %v2533
        %v2630 = vunpack.c.l.b16 %v2534
        %v2631 = vunpack.c.l.b16 %v2535
        %v2632 = vunpack.c.l.b16 %v2536
        %v2633 = vunpack.c.l.b16 %v2537
        %v2634 = vunpack.c.l.b16 %v2538
        %v2635 = vunpack.c.l.b16 %v2539
        %v2636 = vunpack.c.l.b16 %v2540
        %v2637 = vunpack.c.l.b16 %v2541
        %v2638 = vunpack.c.l.b16 %v2542
        %v2639 = vunpack.c.l.b16 %v2543
        %v2640 = vunpack.c.l.b16 %v2544
        %v2641 = vunpack.c.l.b16 %v2545
        %v2642 = vunpack.c.l.b16 %v2546
        %v2643 = vunpack.c.l.b16 %v2547
        %v2644 = vunpack.c.l.b16 %v2548
        %v2645 = vunpack.c.l.b16 %v2549
        %v2646 = vunpack.c.l.b16 %v2550
        %v2647 = vunpack.c.l.b16 %v2551
        %v2648 = vunpack.c.l.b16 %v2552
        %v2649 = vunpack.c.l.b16 %v2553
        %v2650 = vunpack.c.l.b16 %v2554
        %v2651 = vunpack.c.l.b16 %v2555
        %v2652 = vunpack.c.l.b16 %v2556
        %v2653 = vunpack.c.l.b16 %v2557
        %v2654 = vunpack.c.l.b16 %v2558
        %v2655 = vunpack.c.l.b16 %v2559
        %v2656 = vunpack.c.l.b16 %v2560
        %v2657 = vunpack.c.l.b16 %v2561
        %v2658 = vunpack.c.l.b16 %v2562
        %v2659 = vunpack.c.l.b16 %v2563
        %v2660 = vunpack.c.l.b16 %v2564
        %v2661 = vpack.c.b16 %v2614, %v2613
        %v2662 = vpack.c.b16 %v2616, %v2615
        %v2663 = vpack.c.b16 %v2618, %v2617
        %v2664 = vpack.c.b16 %v2620, %v2619
        %v2665 = vpack.c.b16 %v2622, %v2621
        %v2666 = vpack.c.b16 %v2624, %v2623
        %v2667 = vpack.c.b16 %v2626, %v2625
        %v2668 = vpack.c.b16 %v2628, %v2627
        %v2669 = vpack.c.b16 %v2630, %v2629
        %v2670 = vpack.c.b16 %v2632, %v2631
        %v2671 = vpack.c.b16 %v2634, %v2633
        %v2672 = vpack.c.b16 %v2636, %v2635
        %v2673 = vpack.c.b16 %v2638, %v2637
        %v2674 = vpack.c.b16 %v2640, %v2639
        %v2675 = vpack.c.b16 %v2642, %v2641
        %v2676 = vpack.c.b16 %v2644, %v2643
        %v2677 = vpack.c.b16 %v2646, %v2645
        %v2678 = vpack.c.b16 %v2648, %v2647
        %v2679 = vpack.c.b16 %v2650, %v2649
        %v2680 = vpack.c.b16 %v2652, %v2651
        %v2681 = vpack.c.b16 %v2654, %v2653
        %v2682 = vpack.c.b16 %v2656, %v2655
        %v2683 = vpack.c.b16 %v2658, %v2657
        %v2684 = vpack.c.b16 %v2660, %v2659
        %2709 = vmatpush.bf16.msra.mxu0 %v2668
        %2710 = vmatpush.bf16.msra.mxu0 %v2667
        %2711 = vmatpush.bf16.msra.mxu0 %v2666
        %2712 = vmatpush.bf16.msra.mxu0 %v2665
        %2713 = vmatpush.bf16.msra.mxu0 %v2664
        %2714 = vmatpush.bf16.msra.mxu0 %v2663
        %2715 = vmatpush.bf16.msra.mxu0 %v2662
        %2716 = vmatpush.bf16.msra.mxu0 %v2661
        %2717 = vmatmul.bf16.gmra.mxu0 %v2383
        %v2718 = vpop.f32.mrf.mxu0
        %v2719 = vadd.f32 0.0, %v2718
        %v2720 = vpop.f32.mrf.mxu0
        %v2721 = vadd.f32 0.0, %v2720
        %2722 = vmatmul.bf16.gmra.mxu0 %v2384
        %v2723 = vpop.f32.mrf.mxu0
        %v2724 = vadd.f32 0.0, %v2723
        %v2725 = vpop.f32.mrf.mxu0
        %v2726 = vadd.f32 0.0, %v2725
        %2727 = vmatmul.bf16.gmra.mxu0 %v2385
        %v2728 = vpop.f32.mrf.mxu0
        %v2729 = vadd.f32 0.0, %v2728
        %v2730 = vpop.f32.mrf.mxu0
        %v2731 = vadd.f32 0.0, %v2730
        %2732 = vmatmul.bf16.gmra.mxu0 %v2386
        %v2733 = vpop.f32.mrf.mxu0
        %v2734 = vadd.f32 0.0, %v2733
        %v2735 = vpop.f32.mrf.mxu0
        %v2736 = vadd.f32 0.0, %v2735
        %2737 = vmatmul.bf16.gmra.mxu0 %v2387
        %v2738 = vpop.f32.mrf.mxu0
        %v2739 = vadd.f32 0.0, %v2738
        %v2740 = vpop.f32.mrf.mxu0
        %v2741 = vadd.f32 0.0, %v2740
        %2742 = vmatmul.bf16.gmra.mxu0 %v2388
        %v2743 = vpop.f32.mrf.mxu0
        %v2744 = vadd.f32 0.0, %v2743
        %v2745 = vpop.f32.mrf.mxu0
        %v2746 = vadd.f32 0.0, %v2745
        %2747 = vmatmul.bf16.gmra.mxu0 %v2389
        %v2748 = vpop.f32.mrf.mxu0
        %v2749 = vadd.f32 0.0, %v2748
        %v2750 = vpop.f32.mrf.mxu0
        %v2751 = vadd.f32 0.0, %v2750
        %2752 = vmatmul.bf16.gmra.mxu0 %v2390
        %v2753 = vpop.f32.mrf.mxu0
        %v2754 = vadd.f32 0.0, %v2753
        %v2755 = vpop.f32.mrf.mxu0
        %v2756 = vadd.f32 0.0, %v2755
        %2757 = vmatmul.bf16.gmra.mxu0 %v2391
        %v2758 = vpop.f32.mrf.mxu0
        %v2759 = vadd.f32 0.0, %v2758
        %v2760 = vpop.f32.mrf.mxu0
        %v2761 = vadd.f32 0.0, %v2760
        %2762 = vmatmul.bf16.gmra.mxu0 %v2392
        %v2763 = vpop.f32.mrf.mxu0
        %v2764 = vadd.f32 0.0, %v2763
        %v2765 = vpop.f32.mrf.mxu0
        %v2766 = vadd.f32 0.0, %v2765
        %2767 = vmatmul.bf16.gmra.mxu0 %v2393
        %v2768 = vpop.f32.mrf.mxu0
        %v2769 = vadd.f32 0.0, %v2768
        %v2770 = vpop.f32.mrf.mxu0
        %v2771 = vadd.f32 0.0, %v2770
        %2772 = vmatmul.bf16.gmra.mxu0 %v2394
        %v2773 = vpop.f32.mrf.mxu0
        %v2774 = vadd.f32 0.0, %v2773
        %v2775 = vpop.f32.mrf.mxu0
        %v2776 = vadd.f32 0.0, %v2775
        %2777 = vmatmul.bf16.gmra.mxu0 %v2395
        %v2778 = vpop.f32.mrf.mxu0
        %v2779 = vadd.f32 0.0, %v2778
        %v2780 = vpop.f32.mrf.mxu0
        %v2781 = vadd.f32 0.0, %v2780
        %2782 = vmatmul.bf16.gmra.mxu0 %v2396
        %v2783 = vpop.f32.mrf.mxu0
        %v2784 = vadd.f32 0.0, %v2783
        %v2785 = vpop.f32.mrf.mxu0
        %v2786 = vadd.f32 0.0, %v2785
        %2787 = vmatmul.bf16.gmra.mxu0 %v2397
        %v2788 = vpop.f32.mrf.mxu0
        %v2789 = vadd.f32 0.0, %v2788
        %v2790 = vpop.f32.mrf.mxu0
        %v2791 = vadd.f32 0.0, %v2790
        %2792 = vmatmul.bf16.gmra.mxu0 %v2398
        %v2793 = vpop.f32.mrf.mxu0
        %v2794 = vadd.f32 0.0, %v2793
        %v2795 = vpop.f32.mrf.mxu0
        %v2796 = vadd.f32 0.0, %v2795
        %2797 = vdwg.mxu0
        %2798 = vmatpush.bf16.msra.mxu0 %v2676
        %2799 = vmatpush.bf16.msra.mxu0 %v2675
        %2800 = vmatpush.bf16.msra.mxu0 %v2674
        %2801 = vmatpush.bf16.msra.mxu0 %v2673
        %2802 = vmatpush.bf16.msra.mxu0 %v2672
        %2803 = vmatpush.bf16.msra.mxu0 %v2671
        %2804 = vmatpush.bf16.msra.mxu0 %v2670
        %2805 = vmatpush.bf16.msra.mxu0 %v2669
        %2806 = vmatmul.bf16.gmra.mxu0 %v2060
        %v2807 = vpop.f32.mrf.mxu0
        %v2808 = vadd.f32 %v2719, %v2807
        %v2809 = vpop.f32.mrf.mxu0
        %v2810 = vadd.f32 %v2721, %v2809
        %2811 = vmatmul.bf16.gmra.mxu0 %v2061
        %v2812 = vpop.f32.mrf.mxu0
        %v2813 = vadd.f32 %v2724, %v2812
        %v2814 = vpop.f32.mrf.mxu0
        %v2815 = vadd.f32 %v2726, %v2814
        %2816 = vmatmul.bf16.gmra.mxu0 %v2062
        %v2817 = vpop.f32.mrf.mxu0
        %v2818 = vadd.f32 %v2729, %v2817
        %v2819 = vpop.f32.mrf.mxu0
        %v2820 = vadd.f32 %v2731, %v2819
        %2821 = vmatmul.bf16.gmra.mxu0 %v2063
        %v2822 = vpop.f32.mrf.mxu0
        %v2823 = vadd.f32 %v2734, %v2822
        %v2824 = vpop.f32.mrf.mxu0
        %v2825 = vadd.f32 %v2736, %v2824
        %2826 = vmatmul.bf16.gmra.mxu0 %v2064
        %v2827 = vpop.f32.mrf.mxu0
        %v2828 = vadd.f32 %v2739, %v2827
        %v2829 = vpop.f32.mrf.mxu0
        %v2830 = vadd.f32 %v2741, %v2829
        %2831 = vmatmul.bf16.gmra.mxu0 %v2065
        %v2832 = vpop.f32.mrf.mxu0
        %v2833 = vadd.f32 %v2744, %v2832
        %v2834 = vpop.f32.mrf.mxu0
        %v2835 = vadd.f32 %v2746, %v2834
        %2836 = vmatmul.bf16.gmra.mxu0 %v2066
        %v2837 = vpop.f32.mrf.mxu0
        %v2838 = vadd.f32 %v2749, %v2837
        %v2839 = vpop.f32.mrf.mxu0
        %v2840 = vadd.f32 %v2751, %v2839
        %2841 = vmatmul.bf16.gmra.mxu0 %v2067
        %v2842 = vpop.f32.mrf.mxu0
        %v2843 = vadd.f32 %v2754, %v2842
        %v2844 = vpop.f32.mrf.mxu0
        %v2845 = vadd.f32 %v2756, %v2844
        %2846 = vmatmul.bf16.gmra.mxu0 %v2068
        %v2847 = vpop.f32.mrf.mxu0
        %v2848 = vadd.f32 %v2759, %v2847
        %v2849 = vpop.f32.mrf.mxu0
        %v2850 = vadd.f32 %v2761, %v2849
        %2851 = vmatmul.bf16.gmra.mxu0 %v2069
        %v2852 = vpop.f32.mrf.mxu0
        %v2853 = vadd.f32 %v2764, %v2852
        %v2854 = vpop.f32.mrf.mxu0
        %v2855 = vadd.f32 %v2766, %v2854
        %2856 = vmatmul.bf16.gmra.mxu0 %v2070
        %v2857 = vpop.f32.mrf.mxu0
        %v2858 = vadd.f32 %v2769, %v2857
        %v2859 = vpop.f32.mrf.mxu0
        %v2860 = vadd.f32 %v2771, %v2859
        %2861 = vmatmul.bf16.gmra.mxu0 %v2071
        %v2862 = vpop.f32.mrf.mxu0
        %v2863 = vadd.f32 %v2774, %v2862
        %v2864 = vpop.f32.mrf.mxu0
        %v2865 = vadd.f32 %v2776, %v2864
        %2866 = vmatmul.bf16.gmra.mxu0 %v2072
        %v2867 = vpop.f32.mrf.mxu0
        %v2868 = vadd.f32 %v2779, %v2867
        %v2869 = vpop.f32.mrf.mxu0
        %v2870 = vadd.f32 %v2781, %v2869
        %2871 = vmatmul.bf16.gmra.mxu0 %v2073
        %v2872 = vpop.f32.mrf.mxu0
        %v2873 = vadd.f32 %v2784, %v2872
        %v2874 = vpop.f32.mrf.mxu0
        %v2875 = vadd.f32 %v2786, %v2874
        %2876 = vmatmul.bf16.gmra.mxu0 %v2074
        %v2877 = vpop.f32.mrf.mxu0
        %v2878 = vadd.f32 %v2789, %v2877
        %v2879 = vpop.f32.mrf.mxu0
        %v2880 = vadd.f32 %v2791, %v2879
        %2881 = vmatmul.bf16.gmra.mxu0 %v2419
        %v2882 = vpop.f32.mrf.mxu0
        %v2883 = vadd.f32 %v2794, %v2882
        %v2884 = vpop.f32.mrf.mxu0
        %v2885 = vadd.f32 %v2796, %v2884
        %2886 = vdwg.mxu0
        %2887 = vmatpush.bf16.msra.mxu0 %v2684
        %2888 = vmatpush.bf16.msra.mxu0 %v2683
        %2889 = vmatpush.bf16.msra.mxu0 %v2682
        %2890 = vmatpush.bf16.msra.mxu0 %v2681
        %2891 = vmatpush.bf16.msra.mxu0 %v2680
        %2892 = vmatpush.bf16.msra.mxu0 %v2679
        %2893 = vmatpush.bf16.msra.mxu0 %v2678
        %2894 = vmatpush.bf16.msra.mxu0 %v2677
        %2895 = vmatmul.bf16.gmra.mxu0 %v2485
        %v2896 = vpop.f32.mrf.mxu0
        %v2897 = vadd.f32 %v2808, %v2896
        %v2898 = vpop.f32.mrf.mxu0
        %v2899 = vadd.f32 %v2810, %v2898
        %2900 = vmatmul.bf16.gmra.mxu0 %v2486
        %v2901 = vpop.f32.mrf.mxu0
        %v2902 = vadd.f32 %v2813, %v2901
        %v2903 = vpop.f32.mrf.mxu0
        %v2904 = vadd.f32 %v2815, %v2903
        %2905 = vmatmul.bf16.gmra.mxu0 %v2487
        %v2906 = vpop.f32.mrf.mxu0
        %v2907 = vadd.f32 %v2818, %v2906
        %v2908 = vpop.f32.mrf.mxu0
        %v2909 = vadd.f32 %v2820, %v2908
        %2910 = vmatmul.bf16.gmra.mxu0 %v2488
        %v2911 = vpop.f32.mrf.mxu0
        %v2912 = vadd.f32 %v2823, %v2911
        %v2913 = vpop.f32.mrf.mxu0
        %v2914 = vadd.f32 %v2825, %v2913
        %2915 = vmatmul.bf16.gmra.mxu0 %v2489
        %v2916 = vpop.f32.mrf.mxu0
        %v2917 = vadd.f32 %v2828, %v2916
        %v2918 = vpop.f32.mrf.mxu0
        %v2919 = vadd.f32 %v2830, %v2918
        %2920 = vmatmul.bf16.gmra.mxu0 %v2490
        %v2921 = vpop.f32.mrf.mxu0
        %v2922 = vadd.f32 %v2833, %v2921
        %v2923 = vpop.f32.mrf.mxu0
        %v2924 = vadd.f32 %v2835, %v2923
        %2925 = vmatmul.bf16.gmra.mxu0 %v2491
        %v2926 = vpop.f32.mrf.mxu0
        %v2927 = vadd.f32 %v2838, %v2926
        %v2928 = vpop.f32.mrf.mxu0
        %v2929 = vadd.f32 %v2840, %v2928
        %2930 = vmatmul.bf16.gmra.mxu0 %v2492
        %v2931 = vpop.f32.mrf.mxu0
        %v2932 = vadd.f32 %v2843, %v2931
        %v2933 = vpop.f32.mrf.mxu0
        %v2934 = vadd.f32 %v2845, %v2933
        %2935 = vmatmul.bf16.gmra.mxu0 %v2493
        %v2936 = vpop.f32.mrf.mxu0
        %v2937 = vadd.f32 %v2848, %v2936
        %v2938 = vpop.f32.mrf.mxu0
        %v2939 = vadd.f32 %v2850, %v2938
        %2940 = vmatmul.bf16.gmra.mxu0 %v2494
        %v2941 = vpop.f32.mrf.mxu0
        %v2942 = vadd.f32 %v2853, %v2941
        %v2943 = vpop.f32.mrf.mxu0
        %v2944 = vadd.f32 %v2855, %v2943
        %2945 = vmatmul.bf16.gmra.mxu0 %v2495
        %v2946 = vpop.f32.mrf.mxu0
        %v2947 = vadd.f32 %v2858, %v2946
        %v2948 = vpop.f32.mrf.mxu0
        %v2949 = vadd.f32 %v2860, %v2948
        %2950 = vmatmul.bf16.gmra.mxu0 %v2496
        %v2951 = vpop.f32.mrf.mxu0
        %v2952 = vadd.f32 %v2863, %v2951
        %v2953 = vpop.f32.mrf.mxu0
        %v2954 = vadd.f32 %v2865, %v2953
        %2955 = vmatmul.bf16.gmra.mxu0 %v2497
        %v2956 = vpop.f32.mrf.mxu0
        %v2957 = vadd.f32 %v2868, %v2956
        %v2958 = vpop.f32.mrf.mxu0
        %v2959 = vadd.f32 %v2870, %v2958
        %2960 = vmatmul.bf16.gmra.mxu0 %v2498
        %v2961 = vpop.f32.mrf.mxu0
        %v2962 = vadd.f32 %v2873, %v2961
        %v2963 = vpop.f32.mrf.mxu0
        %v2964 = vadd.f32 %v2875, %v2963
        %2965 = vmatmul.bf16.gmra.mxu0 %v2499
        %v2966 = vpop.f32.mrf.mxu0
        %v2967 = vadd.f32 %v2878, %v2966
        %v2968 = vpop.f32.mrf.mxu0
        %v2969 = vadd.f32 %v2880, %v2968
        %2970 = vmatmul.bf16.gmra.mxu0 %v2500
        %v2971 = vpop.f32.mrf.mxu0
        %v2972 = vadd.f32 %v2883, %v2971
        %v2973 = vpop.f32.mrf.mxu0
        %v2974 = vadd.f32 %v2885, %v2973
        %2975 = vdwg.mxu0
        %v3024 = vunpack.c.l.b16 %v2187
        %v3025 = vunpack.c.l.b16 %v2188
        %v3026 = vunpack.c.l.b16 %v2189
        %v3027 = vunpack.c.l.b16 %v2190
        %v3028 = vunpack.c.l.b16 %v2191
        %v3029 = vunpack.c.l.b16 %v2192
        %v3030 = vunpack.c.l.b16 %v2193
        %v3031 = vunpack.c.l.b16 %v2194
        %v3032 = vunpack.c.l.b16 %v2195
        %v3033 = vunpack.c.l.b16 %v2196
        %v3034 = vunpack.c.l.b16 %v2197
        %v3035 = vunpack.c.l.b16 %v2198
        %v3036 = vunpack.c.l.b16 %v2199
        %v3037 = vunpack.c.l.b16 %v2200
        %v3038 = vunpack.c.l.b16 %v2201
        %v3039 = vunpack.c.l.b16 %v2202
        %v3040 = vunpack.c.l.b16 %v2203
        %v3041 = vunpack.c.l.b16 %v2204
        %v3042 = vunpack.c.l.b16 %v2205
        %v3043 = vunpack.c.l.b16 %v2206
        %v3044 = vunpack.c.l.b16 %v2207
        %v3045 = vunpack.c.l.b16 %v2208
        %v3046 = vunpack.c.l.b16 %v2209
        %v3047 = vunpack.c.l.b16 %v2210
        %v3048 = vunpack.c.l.b16 %v2211
        %v3049 = vunpack.c.l.b16 %v2212
        %v3050 = vunpack.c.l.b16 %v2213
        %v3051 = vunpack.c.l.b16 %v2214
        %v3052 = vunpack.c.l.b16 %v2215
        %v3053 = vunpack.c.l.b16 %v2216
        %v3054 = vunpack.c.l.b16 %v2217
        %v3055 = vunpack.c.l.b16 %v2218
        %v3056 = vunpack.c.l.b16 %v2219
        %v3057 = vunpack.c.l.b16 %v2220
        %v3058 = vunpack.c.l.b16 %v2221
        %v3059 = vunpack.c.l.b16 %v2222
        %v3060 = vunpack.c.l.b16 %v2223
        %v3061 = vunpack.c.l.b16 %v2224
        %v3062 = vunpack.c.l.b16 %v2225
        %v3063 = vunpack.c.l.b16 %v2226
        %v3064 = vunpack.c.l.b16 %v2227
        %v3065 = vunpack.c.l.b16 %v2228
        %v3066 = vunpack.c.l.b16 %v2229
        %v3067 = vunpack.c.l.b16 %v2230
        %v3068 = vunpack.c.l.b16 %v2231
        %v3069 = vunpack.c.l.b16 %v2232
        %v3070 = vunpack.c.l.b16 %v2233
        %v3071 = vunpack.c.l.b16 %v2234
        %v3072 = vpack.c.b16 %v3025, %v3024
        %v3073 = vpack.c.b16 %v3027, %v3026
        %v3074 = vpack.c.b16 %v3029, %v3028
        %v3075 = vpack.c.b16 %v3031, %v3030
        %v3076 = vpack.c.b16 %v3033, %v3032
        %v3077 = vpack.c.b16 %v3035, %v3034
        %v3078 = vpack.c.b16 %v3037, %v3036
        %v3079 = vpack.c.b16 %v3039, %v3038
        %v3080 = vpack.c.b16 %v3041, %v3040
        %v3081 = vpack.c.b16 %v3043, %v3042
        %v3082 = vpack.c.b16 %v3045, %v3044
        %v3083 = vpack.c.b16 %v3047, %v3046
        %v3084 = vpack.c.b16 %v3049, %v3048
        %v3085 = vpack.c.b16 %v3051, %v3050
        %v3086 = vpack.c.b16 %v3053, %v3052
        %v3087 = vpack.c.b16 %v3055, %v3054
        %v3088 = vpack.c.b16 %v3057, %v3056
        %v3089 = vpack.c.b16 %v3059, %v3058
        %v3090 = vpack.c.b16 %v3061, %v3060
        %v3091 = vpack.c.b16 %v3063, %v3062
        %v3092 = vpack.c.b16 %v3065, %v3064
        %v3093 = vpack.c.b16 %v3067, %v3066
        %v3094 = vpack.c.b16 %v3069, %v3068
        %v3095 = vpack.c.b16 %v3071, %v3070
        %3120 = vmatpush.bf16.msra.mxu0 %v3079
        %3121 = vmatpush.bf16.msra.mxu0 %v3078
        %3122 = vmatpush.bf16.msra.mxu0 %v3077
        %3123 = vmatpush.bf16.msra.mxu0 %v3076
        %3124 = vmatpush.bf16.msra.mxu0 %v3075
        %3125 = vmatpush.bf16.msra.mxu0 %v3074
        %3126 = vmatpush.bf16.msra.mxu0 %v3073
        %3127 = vmatpush.bf16.msra.mxu0 %v3072
        %3128 = vmatmul.bf16.gmra.mxu0 %v1963
        %v3129 = vpop.f32.mrf.mxu0
        %v3130 = vadd.f32 %v2897, %v3129
        %v3131 = vpop.f32.mrf.mxu0
        %v3132 = vadd.f32 %v2899, %v3131
        %3133 = vmatmul.bf16.gmra.mxu0 %v1964
        %v3134 = vpop.f32.mrf.mxu0
        %v3135 = vadd.f32 %v2902, %v3134
        %v3136 = vpop.f32.mrf.mxu0
        %v3137 = vadd.f32 %v2904, %v3136
        %3138 = vmatmul.bf16.gmra.mxu0 %v1965
        %v3139 = vpop.f32.mrf.mxu0
        %v3140 = vadd.f32 %v2907, %v3139
        %v3141 = vpop.f32.mrf.mxu0
        %v3142 = vadd.f32 %v2909, %v3141
        %3143 = vmatmul.bf16.gmra.mxu0 %v1966
        %v3144 = vpop.f32.mrf.mxu0
        %v3145 = vadd.f32 %v2912, %v3144
        %v3146 = vpop.f32.mrf.mxu0
        %v3147 = vadd.f32 %v2914, %v3146
        %3148 = vmatmul.bf16.gmra.mxu0 %v1967
        %v3149 = vpop.f32.mrf.mxu0
        %v3150 = vadd.f32 %v2917, %v3149
        %v3151 = vpop.f32.mrf.mxu0
        %v3152 = vadd.f32 %v2919, %v3151
        %3153 = vmatmul.bf16.gmra.mxu0 %v1968
        %v3154 = vpop.f32.mrf.mxu0
        %v3155 = vadd.f32 %v2922, %v3154
        %v3156 = vpop.f32.mrf.mxu0
        %v3157 = vadd.f32 %v2924, %v3156
        %3158 = vmatmul.bf16.gmra.mxu0 %v1969
        %v3159 = vpop.f32.mrf.mxu0
        %v3160 = vadd.f32 %v2927, %v3159
        %v3161 = vpop.f32.mrf.mxu0
        %v3162 = vadd.f32 %v2929, %v3161
        %3163 = vmatmul.bf16.gmra.mxu0 %v1970
        %v3164 = vpop.f32.mrf.mxu0
        %v3165 = vadd.f32 %v2932, %v3164
        %v3166 = vpop.f32.mrf.mxu0
        %v3167 = vadd.f32 %v2934, %v3166
        %3168 = vmatmul.bf16.gmra.mxu0 %v1971
        %v3169 = vpop.f32.mrf.mxu0
        %v3170 = vadd.f32 %v2937, %v3169
        %v3171 = vpop.f32.mrf.mxu0
        %v3172 = vadd.f32 %v2939, %v3171
        %3173 = vmatmul.bf16.gmra.mxu0 %v1972
        %v3174 = vpop.f32.mrf.mxu0
        %v3175 = vadd.f32 %v2942, %v3174
        %v3176 = vpop.f32.mrf.mxu0
        %v3177 = vadd.f32 %v2944, %v3176
        %3178 = vmatmul.bf16.gmra.mxu0 %v1973
        %v3179 = vpop.f32.mrf.mxu0
        %v3180 = vadd.f32 %v2947, %v3179
        %v3181 = vpop.f32.mrf.mxu0
        %v3182 = vadd.f32 %v2949, %v3181
        %3183 = vmatmul.bf16.gmra.mxu0 %v1974
        %v3184 = vpop.f32.mrf.mxu0
        %v3185 = vadd.f32 %v2952, %v3184
        %v3186 = vpop.f32.mrf.mxu0
        %v3187 = vadd.f32 %v2954, %v3186
        %3188 = vmatmul.bf16.gmra.mxu0 %v1975
        %v3189 = vpop.f32.mrf.mxu0
        %v3190 = vadd.f32 %v2957, %v3189
        %v3191 = vpop.f32.mrf.mxu0
        %v3192 = vadd.f32 %v2959, %v3191
        %3193 = vmatmul.bf16.gmra.mxu0 %v1976
        %v3194 = vpop.f32.mrf.mxu0
        %v3195 = vadd.f32 %v2962, %v3194
        %v3196 = vpop.f32.mrf.mxu0
        %v3197 = vadd.f32 %v2964, %v3196
        %3198 = vmatmul.bf16.gmra.mxu0 %v1977
        %v3199 = vpop.f32.mrf.mxu0
        %v3200 = vadd.f32 %v2967, %v3199
        %v3201 = vpop.f32.mrf.mxu0
        %v3202 = vadd.f32 %v2969, %v3201
        %3203 = vmatmul.bf16.gmra.mxu0 %v1978
        %v3204 = vpop.f32.mrf.mxu0
        %v3205 = vadd.f32 %v2972, %v3204
        %v3206 = vpop.f32.mrf.mxu0
        %v3207 = vadd.f32 %v2974, %v3206
        %3208 = vdwg.mxu0
        %3209 = vmatpush.bf16.msra.mxu0 %v3087
        %3210 = vmatpush.bf16.msra.mxu0 %v3086
        %3211 = vmatpush.bf16.msra.mxu0 %v3085
        %3212 = vmatpush.bf16.msra.mxu0 %v3084
        %3213 = vmatpush.bf16.msra.mxu0 %v3083
        %3214 = vmatpush.bf16.msra.mxu0 %v3082
        %3215 = vmatpush.bf16.msra.mxu0 %v3081
        %3216 = vmatpush.bf16.msra.mxu0 %v3080
        %3217 = vmatmul.bf16.gmra.mxu0 %v2059
        %v3218 = vpop.f32.mrf.mxu0
        %v3219 = vadd.f32 %v3130, %v3218
        %v3220 = vpop.f32.mrf.mxu0
        %v3221 = vadd.f32 %v3132, %v3220
        %3222 = vmatmul.bf16.gmra.mxu0 %v2060
        %v3223 = vpop.f32.mrf.mxu0
        %v3224 = vadd.f32 %v3135, %v3223
        %v3225 = vpop.f32.mrf.mxu0
        %v3226 = vadd.f32 %v3137, %v3225
        %3227 = vmatmul.bf16.gmra.mxu0 %v2061
        %v3228 = vpop.f32.mrf.mxu0
        %v3229 = vadd.f32 %v3140, %v3228
        %v3230 = vpop.f32.mrf.mxu0
        %v3231 = vadd.f32 %v3142, %v3230
        %3232 = vmatmul.bf16.gmra.mxu0 %v2062
        %v3233 = vpop.f32.mrf.mxu0
        %v3234 = vadd.f32 %v3145, %v3233
        %v3235 = vpop.f32.mrf.mxu0
        %v3236 = vadd.f32 %v3147, %v3235
        %3237 = vmatmul.bf16.gmra.mxu0 %v2063
        %v3238 = vpop.f32.mrf.mxu0
        %v3239 = vadd.f32 %v3150, %v3238
        %v3240 = vpop.f32.mrf.mxu0
        %v3241 = vadd.f32 %v3152, %v3240
        %3242 = vmatmul.bf16.gmra.mxu0 %v2064
        %v3243 = vpop.f32.mrf.mxu0
        %v3244 = vadd.f32 %v3155, %v3243
        %v3245 = vpop.f32.mrf.mxu0
        %v3246 = vadd.f32 %v3157, %v3245
        %3247 = vmatmul.bf16.gmra.mxu0 %v2065
        %v3248 = vpop.f32.mrf.mxu0
        %v3249 = vadd.f32 %v3160, %v3248
        %v3250 = vpop.f32.mrf.mxu0
        %v3251 = vadd.f32 %v3162, %v3250
        %3252 = vmatmul.bf16.gmra.mxu0 %v2066
        %v3253 = vpop.f32.mrf.mxu0
        %v3254 = vadd.f32 %v3165, %v3253
        %v3255 = vpop.f32.mrf.mxu0
        %v3256 = vadd.f32 %v3167, %v3255
        %3257 = vmatmul.bf16.gmra.mxu0 %v2067
        %v3258 = vpop.f32.mrf.mxu0
        %v3259 = vadd.f32 %v3170, %v3258
        %v3260 = vpop.f32.mrf.mxu0
        %v3261 = vadd.f32 %v3172, %v3260
        %3262 = vmatmul.bf16.gmra.mxu0 %v2068
        %v3263 = vpop.f32.mrf.mxu0
        %v3264 = vadd.f32 %v3175, %v3263
        %v3265 = vpop.f32.mrf.mxu0
        %v3266 = vadd.f32 %v3177, %v3265
        %3267 = vmatmul.bf16.gmra.mxu0 %v2069
        %v3268 = vpop.f32.mrf.mxu0
        %v3269 = vadd.f32 %v3180, %v3268
        %v3270 = vpop.f32.mrf.mxu0
        %v3271 = vadd.f32 %v3182, %v3270
        %3272 = vmatmul.bf16.gmra.mxu0 %v2070
        %v3273 = vpop.f32.mrf.mxu0
        %v3274 = vadd.f32 %v3185, %v3273
        %v3275 = vpop.f32.mrf.mxu0
        %v3276 = vadd.f32 %v3187, %v3275
        %3277 = vmatmul.bf16.gmra.mxu0 %v2071
        %v3278 = vpop.f32.mrf.mxu0
        %v3279 = vadd.f32 %v3190, %v3278
        %v3280 = vpop.f32.mrf.mxu0
        %v3281 = vadd.f32 %v3192, %v3280
        %3282 = vmatmul.bf16.gmra.mxu0 %v2072
        %v3283 = vpop.f32.mrf.mxu0
        %v3284 = vadd.f32 %v3195, %v3283
        %v3285 = vpop.f32.mrf.mxu0
        %v3286 = vadd.f32 %v3197, %v3285
        %3287 = vmatmul.bf16.gmra.mxu0 %v2073
        %v3288 = vpop.f32.mrf.mxu0
        %v3289 = vadd.f32 %v3200, %v3288
        %v3290 = vpop.f32.mrf.mxu0
        %v3291 = vadd.f32 %v3202, %v3290
        %3292 = vmatmul.bf16.gmra.mxu0 %v2074
        %v3293 = vpop.f32.mrf.mxu0
        %v3294 = vadd.f32 %v3205, %v3293
        %v3295 = vpop.f32.mrf.mxu0
        %v3296 = vadd.f32 %v3207, %v3295
        %3297 = vdwg.mxu0
        %3298 = vmatpush.bf16.msra.mxu0 %v3095
        %3299 = vmatpush.bf16.msra.mxu0 %v3094
        %3300 = vmatpush.bf16.msra.mxu0 %v3093
        %3301 = vmatpush.bf16.msra.mxu0 %v3092
        %3302 = vmatpush.bf16.msra.mxu0 %v3091
        %3303 = vmatpush.bf16.msra.mxu0 %v3090
        %3304 = vmatpush.bf16.msra.mxu0 %v3089
        %3305 = vmatpush.bf16.msra.mxu0 %v3088
        %3306 = vmatmul.bf16.gmra.mxu0 %v2155
        %v3307 = vpop.f32.mrf.mxu0
        %v3308 = vadd.f32 %v3219, %v3307
        %v3309 = vpop.f32.mrf.mxu0
        %v3310 = vadd.f32 %v3221, %v3309
        %3311 = vmatmul.bf16.gmra.mxu0 %v2156
        %v3312 = vpop.f32.mrf.mxu0
        %v3313 = vadd.f32 %v3224, %v3312
        %v3314 = vpop.f32.mrf.mxu0
        %v3315 = vadd.f32 %v3226, %v3314
        %3316 = vmatmul.bf16.gmra.mxu0 %v2157
        %v3317 = vpop.f32.mrf.mxu0
        %v3318 = vadd.f32 %v3229, %v3317
        %v3319 = vpop.f32.mrf.mxu0
        %v3320 = vadd.f32 %v3231, %v3319
        %3321 = vmatmul.bf16.gmra.mxu0 %v2158
        %v3322 = vpop.f32.mrf.mxu0
        %v3323 = vadd.f32 %v3234, %v3322
        %v3324 = vpop.f32.mrf.mxu0
        %v3325 = vadd.f32 %v3236, %v3324
        %3326 = vmatmul.bf16.gmra.mxu0 %v2159
        %v3327 = vpop.f32.mrf.mxu0
        %v3328 = vadd.f32 %v3239, %v3327
        %v3329 = vpop.f32.mrf.mxu0
        %v3330 = vadd.f32 %v3241, %v3329
        %3331 = vmatmul.bf16.gmra.mxu0 %v2160
        %v3332 = vpop.f32.mrf.mxu0
        %v3333 = vadd.f32 %v3244, %v3332
        %v3334 = vpop.f32.mrf.mxu0
        %v3335 = vadd.f32 %v3246, %v3334
        %3336 = vmatmul.bf16.gmra.mxu0 %v2161
        %v3337 = vpop.f32.mrf.mxu0
        %v3338 = vadd.f32 %v3249, %v3337
        %v3339 = vpop.f32.mrf.mxu0
        %v3340 = vadd.f32 %v3251, %v3339
        %3341 = vmatmul.bf16.gmra.mxu0 %v2162
        %v3342 = vpop.f32.mrf.mxu0
        %v3343 = vadd.f32 %v3254, %v3342
        %v3344 = vpop.f32.mrf.mxu0
        %v3345 = vadd.f32 %v3256, %v3344
        %3346 = vmatmul.bf16.gmra.mxu0 %v2163
        %v3347 = vpop.f32.mrf.mxu0
        %v3348 = vadd.f32 %v3259, %v3347
        %v3349 = vpop.f32.mrf.mxu0
        %v3350 = vadd.f32 %v3261, %v3349
        %3351 = vmatmul.bf16.gmra.mxu0 %v2164
        %v3352 = vpop.f32.mrf.mxu0
        %v3353 = vadd.f32 %v3264, %v3352
        %v3354 = vpop.f32.mrf.mxu0
        %v3355 = vadd.f32 %v3266, %v3354
        %3356 = vmatmul.bf16.gmra.mxu0 %v2165
        %v3357 = vpop.f32.mrf.mxu0
        %v3358 = vadd.f32 %v3269, %v3357
        %v3359 = vpop.f32.mrf.mxu0
        %v3360 = vadd.f32 %v3271, %v3359
        %3361 = vmatmul.bf16.gmra.mxu0 %v2166
        %v3362 = vpop.f32.mrf.mxu0
        %v3363 = vadd.f32 %v3274, %v3362
        %v3364 = vpop.f32.mrf.mxu0
        %v3365 = vadd.f32 %v3276, %v3364
        %3366 = vmatmul.bf16.gmra.mxu0 %v2167
        %v3367 = vpop.f32.mrf.mxu0
        %v3368 = vadd.f32 %v3279, %v3367
        %v3369 = vpop.f32.mrf.mxu0
        %v3370 = vadd.f32 %v3281, %v3369
        %3371 = vmatmul.bf16.gmra.mxu0 %v2168
        %v3372 = vpop.f32.mrf.mxu0
        %v3373 = vadd.f32 %v3284, %v3372
        %v3374 = vpop.f32.mrf.mxu0
        %v3375 = vadd.f32 %v3286, %v3374
        %3376 = vmatmul.bf16.gmra.mxu0 %v2169
        %v3377 = vpop.f32.mrf.mxu0
        %v3378 = vadd.f32 %v3289, %v3377
        %v3379 = vpop.f32.mrf.mxu0
        %v3380 = vadd.f32 %v3291, %v3379
        %3381 = vmatmul.bf16.gmra.mxu0 %v2170
        %v3382 = vpop.f32.mrf.mxu0
        %v3383 = vadd.f32 %v3294, %v3382
        %v3384 = vpop.f32.mrf.mxu0
        %v3385 = vadd.f32 %v3296, %v3384
        %3386 = vdwg.mxu0
        %v3387 = vld [vmem:[#allocation2 + $0x20] sm:$0xff]
        %v3388 = vld [vmem:[#allocation2 + $0x28] sm:$0xff]
        %v3389 = vld [vmem:[#allocation2 + $0x30] sm:$0xff]
        %v3390 = vld [vmem:[#allocation2 + $0x38] sm:$0xff]
        %v3391 = vld [vmem:[#allocation2 + $0x40] sm:$0xff]
        %v3392 = vld [vmem:[#allocation2 + $0x48] sm:$0xff]
        %v3393 = vld [vmem:[#allocation2 + $0x50] sm:$0xff]
        %v3394 = vld [vmem:[#allocation2 + $0x58] sm:$0xff]
        %v3395 = vld [vmem:[#allocation2 + $0x60] sm:$0xff]
        %v3396 = vld [vmem:[#allocation2 + $0x68] sm:$0xff]
        %v3397 = vld [vmem:[#allocation2 + $0x70] sm:$0xff]
        %v3398 = vld [vmem:[#allocation2 + $0x78] sm:$0xff]
        %v3399 = vld [vmem:[#allocation2 + $0x80] sm:$0xff]
        %v3400 = vld [vmem:[#allocation2 + $0x88] sm:$0xff]
        %v3401 = vld [vmem:[#allocation2 + $0x90] sm:$0xff]
        %v3402 = vld [vmem:[#allocation2 + $0x98] sm:$0xff]
        %v3403 = vld [vmem:[#allocation2 + $0xa0] sm:$0xff]
        %v3404 = vld [vmem:[#allocation2 + $0xa8] sm:$0xff]
        %v3405 = vld [vmem:[#allocation2 + $0xb0] sm:$0xff]
        %v3406 = vld [vmem:[#allocation2 + $0xb8] sm:$0xff]
        %v3407 = vld [vmem:[#allocation2 + $0xc0] sm:$0xff]
        %v3408 = vld [vmem:[#allocation2 + $0xc8] sm:$0xff]
        %v3409 = vld [vmem:[#allocation2 + $0xd0] sm:$0xff]
        %v3410 = vld [vmem:[#allocation2 + $0xd8] sm:$0xff]
        %v3411 = vld [vmem:[#allocation2 + $0xe0] sm:$0xff]
        %v3412 = vld [vmem:[#allocation2 + $0xe8] sm:$0xff]
        %v3413 = vld [vmem:[#allocation2 + $0xf0] sm:$0xff]
        %v3414 = vld [vmem:[#allocation2 + $0xf8] sm:$0xff]
        %v3415 = vld [vmem:[#allocation2 + $0x100] sm:$0xff]
        %v3416 = vld [vmem:[#allocation2 + $0x108] sm:$0xff]
        %v3417 = vld [vmem:[#allocation2 + $0x110] sm:$0xff]
        %v3418 = vld [vmem:[#allocation2 + $0x118] sm:$0xff]
        %v3419 = vpack.c.bf16 %v3387, %v3387
        %v3420 = vpack.c.bf16 %v3388, %v3388
        %v3421 = vpack.c.bf16 %v3389, %v3389
        %v3422 = vpack.c.bf16 %v3390, %v3390
        %v3423 = vpack.c.bf16 %v3391, %v3391
        %v3424 = vpack.c.bf16 %v3392, %v3392
        %v3425 = vpack.c.bf16 %v3393, %v3393
        %v3426 = vpack.c.bf16 %v3394, %v3394
        %v3427 = vpack.c.bf16 %v3395, %v3395
        %v3428 = vpack.c.bf16 %v3396, %v3396
        %v3429 = vpack.c.bf16 %v3397, %v3397
        %v3430 = vpack.c.bf16 %v3398, %v3398
        %v3431 = vpack.c.bf16 %v3399, %v3399
        %v3432 = vpack.c.bf16 %v3400, %v3400
        %v3433 = vpack.c.bf16 %v3401, %v3401
        %v3434 = vpack.c.bf16 %v3402, %v3402
        %v3435 = vpack.c.bf16 %v3403, %v3403
        %v3436 = vpack.c.bf16 %v3404, %v3404
        %v3437 = vpack.c.bf16 %v3405, %v3405
        %v3438 = vpack.c.bf16 %v3406, %v3406
        %v3439 = vpack.c.bf16 %v3407, %v3407
        %v3440 = vpack.c.bf16 %v3408, %v3408
        %v3441 = vpack.c.bf16 %v3409, %v3409
        %v3442 = vpack.c.bf16 %v3410, %v3410
        %v3443 = vpack.c.bf16 %v3411, %v3411
        %v3444 = vpack.c.bf16 %v3412, %v3412
        %v3445 = vpack.c.bf16 %v3413, %v3413
        %v3446 = vpack.c.bf16 %v3414, %v3414
        %v3447 = vpack.c.bf16 %v3415, %v3415
        %v3448 = vpack.c.bf16 %v3416, %v3416
        %v3449 = vpack.c.bf16 %v3417, %v3417
        %v3450 = vpack.c.bf16 %v3418, %v3418
        %v3451 = vrot.slane %v3387, 7
        %v3452 = vrot.slane %v3388, 7
        %v3453 = vrot.slane %v3389, 7
        %v3454 = vrot.slane %v3390, 7
        %v3455 = vrot.slane %v3391, 7
        %v3456 = vrot.slane %v3392, 7
        %v3457 = vrot.slane %v3393, 7
        %v3458 = vrot.slane %v3394, 7
        %v3459 = vrot.slane %v3395, 7
        %v3460 = vrot.slane %v3396, 7
        %v3461 = vrot.slane %v3397, 7
        %v3462 = vrot.slane %v3398, 7
        %v3463 = vrot.slane %v3399, 7
        %v3464 = vrot.slane %v3400, 7
        %v3465 = vrot.slane %v3401, 7
        %v3466 = vrot.slane %v3402, 7
        %v3467 = vrot.slane %v3403, 7
        %v3468 = vrot.slane %v3404, 7
        %v3469 = vrot.slane %v3405, 7
        %v3470 = vrot.slane %v3406, 7
        %v3471 = vrot.slane %v3407, 7
        %v3472 = vrot.slane %v3408, 7
        %v3473 = vrot.slane %v3409, 7
        %v3474 = vrot.slane %v3410, 7
        %v3475 = vrot.slane %v3411, 7
        %v3476 = vrot.slane %v3412, 7
        %v3477 = vrot.slane %v3413, 7
        %v3478 = vrot.slane %v3414, 7
        %v3479 = vrot.slane %v3415, 7
        %v3480 = vrot.slane %v3416, 7
        %v3481 = vrot.slane %v3417, 7
        %v3482 = vrot.slane %v3418, 7
        %v3483 = vsel %vm1481, %v3481, %v3482
        %v3484 = vsel %vm1481, %v3480, %v3481
        %v3485 = vsel %vm1481, %v3479, %v3480
        %v3486 = vsel %vm1481, %v3478, %v3479
        %v3487 = vsel %vm1481, %v3477, %v3478
        %v3488 = vsel %vm1481, %v3476, %v3477
        %v3489 = vsel %vm1481, %v3475, %v3476
        %v3490 = vsel %vm1481, %v3474, %v3475
        %v3491 = vsel %vm1481, %v3473, %v3474
        %v3492 = vsel %vm1481, %v3472, %v3473
        %v3493 = vsel %vm1481, %v3471, %v3472
        %v3494 = vsel %vm1481, %v3470, %v3471
        %v3495 = vsel %vm1481, %v3469, %v3470
        %v3496 = vsel %vm1481, %v3468, %v3469
        %v3497 = vsel %vm1481, %v3467, %v3468
        %v3498 = vsel %vm1481, %v3466, %v3467
        %v3499 = vsel %vm1481, %v3465, %v3466
        %v3500 = vsel %vm1481, %v3464, %v3465
        %v3501 = vsel %vm1481, %v3463, %v3464
        %v3502 = vsel %vm1481, %v3462, %v3463
        %v3503 = vsel %vm1481, %v3461, %v3462
        %v3504 = vsel %vm1481, %v3460, %v3461
        %v3505 = vsel %vm1481, %v3459, %v3460
        %v3506 = vsel %vm1481, %v3458, %v3459
        %v3507 = vsel %vm1481, %v3457, %v3458
        %v3508 = vsel %vm1481, %v3456, %v3457
        %v3509 = vsel %vm1481, %v3455, %v3456
        %v3510 = vsel %vm1481, %v3454, %v3455
        %v3511 = vsel %vm1481, %v3453, %v3454
        %v3512 = vsel %vm1481, %v3452, %v3453
        %v3513 = vsel %vm1481, %v3451, %v3452
        %v3514 = vsel %vm1481, %v3482, %v3451
        %v3515 = vpack.c.bf16 %v3514, %v3514
        %v3516 = vpack.c.bf16 %v3513, %v3513
        %v3517 = vpack.c.bf16 %v3512, %v3512
        %v3518 = vpack.c.bf16 %v3511, %v3511
        %v3519 = vpack.c.bf16 %v3510, %v3510
        %v3520 = vpack.c.bf16 %v3509, %v3509
        %v3521 = vpack.c.bf16 %v3508, %v3508
        %v3522 = vpack.c.bf16 %v3507, %v3507
        %v3523 = vpack.c.bf16 %v3506, %v3506
        %v3524 = vpack.c.bf16 %v3505, %v3505
        %v3525 = vpack.c.bf16 %v3504, %v3504
        %v3526 = vpack.c.bf16 %v3503, %v3503
        %v3527 = vpack.c.bf16 %v3502, %v3502
        %v3528 = vpack.c.bf16 %v3501, %v3501
        %v3529 = vpack.c.bf16 %v3500, %v3500
        %v3530 = vpack.c.bf16 %v3499, %v3499
        %v3531 = vpack.c.bf16 %v3498, %v3498
        %v3532 = vpack.c.bf16 %v3497, %v3497
        %v3533 = vpack.c.bf16 %v3496, %v3496
        %v3534 = vpack.c.bf16 %v3495, %v3495
        %v3535 = vpack.c.bf16 %v3494, %v3494
        %v3536 = vpack.c.bf16 %v3493, %v3493
        %v3537 = vpack.c.bf16 %v3492, %v3492
        %v3538 = vpack.c.bf16 %v3491, %v3491
        %v3539 = vpack.c.bf16 %v3490, %v3490
        %v3540 = vpack.c.bf16 %v3489, %v3489
        %v3541 = vpack.c.bf16 %v3488, %v3488
        %v3542 = vpack.c.bf16 %v3487, %v3487
        %v3543 = vpack.c.bf16 %v3486, %v3486
        %v3544 = vpack.c.bf16 %v3485, %v3485
        %v3545 = vpack.c.bf16 %v3484, %v3484
        %v3546 = vpack.c.bf16 %v3483, %v3483
        %v3547 = vsel %vm1610, %v3515, 0
        %v3548 = vsel %vm1611, %v3516, 0
        %v3549 = vsel %vm1612, %v3517, 0
        %v3550 = vsel %vm1613, %v3518, 0
        %v3551 = vsel %vm1614, %v3519, 0
        %v3552 = vsel %vm1615, %v3520, 0
        %v3553 = vsel %vm1616, %v3521, 0
        %v3554 = vsel %vm1617, %v3522, 0
        %v3555 = vsel %vm1618, %v3523, 0
        %v3556 = vsel %vm1619, %v3524, 0
        %v3557 = vsel %vm1620, %v3525, 0
        %v3558 = vsel %vm1621, %v3526, 0
        %v3559 = vsel %vm1622, %v3527, 0
        %v3560 = vsel %vm1623, %v3528, 0
        %v3561 = vsel %vm1624, %v3529, 0
        %v3562 = vsel %vm1625, %v3530, 0
        %v3563 = vsel %vm1626, %v3531, 0
        %v3564 = vsel %vm1627, %v3532, 0
        %v3565 = vsel %vm1628, %v3533, 0
        %v3566 = vsel %vm1629, %v3534, 0
        %v3567 = vsel %vm1630, %v3535, 0
        %v3568 = vsel %vm1631, %v3536, 0
        %v3569 = vsel %vm1632, %v3537, 0
        %v3570 = vsel %vm1633, %v3538, 0
        %v3571 = vsel %vm1634, %v3539, 0
        %v3572 = vsel %vm1635, %v3540, 0
        %v3573 = vsel %vm1636, %v3541, 0
        %v3574 = vsel %vm1637, %v3542, 0
        %v3575 = vsel %vm1638, %v3543, 0
        %v3576 = vsel %vm1639, %v3544, 0
        %v3577 = vsel %vm1640, %v3545, 0
        %v3578 = vsel %vm1641, %v3546, 0
        %v3579 = vrot.slane %v3387, 1
        %v3580 = vrot.slane %v3388, 1
        %v3581 = vrot.slane %v3389, 1
        %v3582 = vrot.slane %v3390, 1
        %v3583 = vrot.slane %v3391, 1
        %v3584 = vrot.slane %v3392, 1
        %v3585 = vrot.slane %v3393, 1
        %v3586 = vrot.slane %v3394, 1
        %v3587 = vrot.slane %v3395, 1
        %v3588 = vrot.slane %v3396, 1
        %v3589 = vrot.slane %v3397, 1
        %v3590 = vrot.slane %v3398, 1
        %v3591 = vrot.slane %v3399, 1
        %v3592 = vrot.slane %v3400, 1
        %v3593 = vrot.slane %v3401, 1
        %v3594 = vrot.slane %v3402, 1
        %v3595 = vrot.slane %v3403, 1
        %v3596 = vrot.slane %v3404, 1
        %v3597 = vrot.slane %v3405, 1
        %v3598 = vrot.slane %v3406, 1
        %v3599 = vrot.slane %v3407, 1
        %v3600 = vrot.slane %v3408, 1
        %v3601 = vrot.slane %v3409, 1
        %v3602 = vrot.slane %v3410, 1
        %v3603 = vrot.slane %v3411, 1
        %v3604 = vrot.slane %v3412, 1
        %v3605 = vrot.slane %v3413, 1
        %v3606 = vrot.slane %v3414, 1
        %v3607 = vrot.slane %v3415, 1
        %v3608 = vrot.slane %v3416, 1
        %v3609 = vrot.slane %v3417, 1
        %v3610 = vrot.slane %v3418, 1
        %v3611 = vsel %vm1706, %v3609, %v3610
        %v3612 = vsel %vm1706, %v3608, %v3609
        %v3613 = vsel %vm1706, %v3607, %v3608
        %v3614 = vsel %vm1706, %v3606, %v3607
        %v3615 = vsel %vm1706, %v3605, %v3606
        %v3616 = vsel %vm1706, %v3604, %v3605
        %v3617 = vsel %vm1706, %v3603, %v3604
        %v3618 = vsel %vm1706, %v3602, %v3603
        %v3619 = vsel %vm1706, %v3601, %v3602
        %v3620 = vsel %vm1706, %v3600, %v3601
        %v3621 = vsel %vm1706, %v3599, %v3600
        %v3622 = vsel %vm1706, %v3598, %v3599
        %v3623 = vsel %vm1706, %v3597, %v3598
        %v3624 = vsel %vm1706, %v3596, %v3597
        %v3625 = vsel %vm1706, %v3595, %v3596
        %v3626 = vsel %vm1706, %v3594, %v3595
        %v3627 = vsel %vm1706, %v3593, %v3594
        %v3628 = vsel %vm1706, %v3592, %v3593
        %v3629 = vsel %vm1706, %v3591, %v3592
        %v3630 = vsel %vm1706, %v3590, %v3591
        %v3631 = vsel %vm1706, %v3589, %v3590
        %v3632 = vsel %vm1706, %v3588, %v3589
        %v3633 = vsel %vm1706, %v3587, %v3588
        %v3634 = vsel %vm1706, %v3586, %v3587
        %v3635 = vsel %vm1706, %v3585, %v3586
        %v3636 = vsel %vm1706, %v3584, %v3585
        %v3637 = vsel %vm1706, %v3583, %v3584
        %v3638 = vsel %vm1706, %v3582, %v3583
        %v3639 = vsel %vm1706, %v3581, %v3582
        %v3640 = vsel %vm1706, %v3580, %v3581
        %v3641 = vsel %vm1706, %v3579, %v3580
        %v3642 = vsel %vm1706, %v3610, %v3579
        %v3643 = vpack.c.bf16 %v3641, %v3641
        %v3644 = vpack.c.bf16 %v3640, %v3640
        %v3645 = vpack.c.bf16 %v3639, %v3639
        %v3646 = vpack.c.bf16 %v3638, %v3638
        %v3647 = vpack.c.bf16 %v3637, %v3637
        %v3648 = vpack.c.bf16 %v3636, %v3636
        %v3649 = vpack.c.bf16 %v3635, %v3635
        %v3650 = vpack.c.bf16 %v3634, %v3634
        %v3651 = vpack.c.bf16 %v3633, %v3633
        %v3652 = vpack.c.bf16 %v3632, %v3632
        %v3653 = vpack.c.bf16 %v3631, %v3631
        %v3654 = vpack.c.bf16 %v3630, %v3630
        %v3655 = vpack.c.bf16 %v3629, %v3629
        %v3656 = vpack.c.bf16 %v3628, %v3628
        %v3657 = vpack.c.bf16 %v3627, %v3627
        %v3658 = vpack.c.bf16 %v3626, %v3626
        %v3659 = vpack.c.bf16 %v3625, %v3625
        %v3660 = vpack.c.bf16 %v3624, %v3624
        %v3661 = vpack.c.bf16 %v3623, %v3623
        %v3662 = vpack.c.bf16 %v3622, %v3622
        %v3663 = vpack.c.bf16 %v3621, %v3621
        %v3664 = vpack.c.bf16 %v3620, %v3620
        %v3665 = vpack.c.bf16 %v3619, %v3619
        %v3666 = vpack.c.bf16 %v3618, %v3618
        %v3667 = vpack.c.bf16 %v3617, %v3617
        %v3668 = vpack.c.bf16 %v3616, %v3616
        %v3669 = vpack.c.bf16 %v3615, %v3615
        %v3670 = vpack.c.bf16 %v3614, %v3614
        %v3671 = vpack.c.bf16 %v3613, %v3613
        %v3672 = vpack.c.bf16 %v3612, %v3612
        %v3673 = vpack.c.bf16 %v3611, %v3611
        %v3674 = vpack.c.bf16 %v3642, %v3642
        %v3675 = vsel %vm1835, %v3643, 0
        %v3676 = vsel %vm1836, %v3644, 0
        %v3677 = vsel %vm1837, %v3645, 0
        %v3678 = vsel %vm1838, %v3646, 0
        %v3679 = vsel %vm1839, %v3647, 0
        %v3680 = vsel %vm1840, %v3648, 0
        %v3681 = vsel %vm1841, %v3649, 0
        %v3682 = vsel %vm1842, %v3650, 0
        %v3683 = vsel %vm1843, %v3651, 0
        %v3684 = vsel %vm1844, %v3652, 0
        %v3685 = vsel %vm1845, %v3653, 0
        %v3686 = vsel %vm1846, %v3654, 0
        %v3687 = vsel %vm1847, %v3655, 0
        %v3688 = vsel %vm1848, %v3656, 0
        %v3689 = vsel %vm1849, %v3657, 0
        %v3690 = vsel %vm1850, %v3658, 0
        %v3691 = vsel %vm1851, %v3659, 0
        %v3692 = vsel %vm1852, %v3660, 0
        %v3693 = vsel %vm1853, %v3661, 0
        %v3694 = vsel %vm1854, %v3662, 0
        %v3695 = vsel %vm1855, %v3663, 0
        %v3696 = vsel %vm1856, %v3664, 0
        %v3697 = vsel %vm1857, %v3665, 0
        %v3698 = vsel %vm1858, %v3666, 0
        %v3699 = vsel %vm1859, %v3667, 0
        %v3700 = vsel %vm1860, %v3668, 0
        %v3701 = vsel %vm1861, %v3669, 0
        %v3702 = vsel %vm1862, %v3670, 0
        %v3703 = vsel %vm1863, %v3671, 0
        %v3704 = vsel %vm1864, %v3672, 0
        %v3705 = vsel %vm1865, %v3673, 0
        %v3706 = vsel %vm1866, %v3674, 0
        %v3739 = vunpack.c.l.b16 %v3547
        %v3740 = vunpack.c.l.b16 %v3548
        %v3741 = vunpack.c.l.b16 %v3549
        %v3742 = vunpack.c.l.b16 %v3550
        %v3743 = vunpack.c.l.b16 %v3551
        %v3744 = vunpack.c.l.b16 %v3552
        %v3745 = vunpack.c.l.b16 %v3553
        %v3746 = vunpack.c.l.b16 %v3554
        %v3747 = vunpack.c.l.b16 %v3555
        %v3748 = vunpack.c.l.b16 %v3556
        %v3749 = vunpack.c.l.b16 %v3557
        %v3750 = vunpack.c.l.b16 %v3558
        %v3751 = vunpack.c.l.b16 %v3559
        %v3752 = vunpack.c.l.b16 %v3560
        %v3753 = vunpack.c.l.b16 %v3561
        %v3754 = vunpack.c.l.b16 %v3562
        %v3755 = vunpack.c.l.b16 %v3563
        %v3756 = vunpack.c.l.b16 %v3564
        %v3757 = vunpack.c.l.b16 %v3565
        %v3758 = vunpack.c.l.b16 %v3566
        %v3759 = vunpack.c.l.b16 %v3567
        %v3760 = vunpack.c.l.b16 %v3568
        %v3761 = vunpack.c.l.b16 %v3569
        %v3762 = vunpack.c.l.b16 %v3570
        %v3763 = vunpack.c.l.b16 %v3571
        %v3764 = vunpack.c.l.b16 %v3572
        %v3765 = vunpack.c.l.b16 %v3573
        %v3766 = vunpack.c.l.b16 %v3574
        %v3767 = vunpack.c.l.b16 %v3575
        %v3768 = vunpack.c.l.b16 %v3576
        %v3769 = vunpack.c.l.b16 %v3577
        %v3770 = vunpack.c.l.b16 %v3578
        %v3771 = vpack.c.b16 %v3740, %v3739
        %v3772 = vpack.c.b16 %v3742, %v3741
        %v3773 = vpack.c.b16 %v3744, %v3743
        %v3774 = vpack.c.b16 %v3746, %v3745
        %v3775 = vpack.c.b16 %v3748, %v3747
        %v3776 = vpack.c.b16 %v3750, %v3749
        %v3777 = vpack.c.b16 %v3752, %v3751
        %v3778 = vpack.c.b16 %v3754, %v3753
        %v3779 = vpack.c.b16 %v3756, %v3755
        %v3780 = vpack.c.b16 %v3758, %v3757
        %v3781 = vpack.c.b16 %v3760, %v3759
        %v3782 = vpack.c.b16 %v3762, %v3761
        %v3783 = vpack.c.b16 %v3764, %v3763
        %v3784 = vpack.c.b16 %v3766, %v3765
        %v3785 = vpack.c.b16 %v3768, %v3767
        %v3786 = vpack.c.b16 %v3770, %v3769
        %v3835 = vunpack.c.l.b16 %v3419
        %v3836 = vunpack.c.l.b16 %v3420
        %v3837 = vunpack.c.l.b16 %v3421
        %v3838 = vunpack.c.l.b16 %v3422
        %v3839 = vunpack.c.l.b16 %v3423
        %v3840 = vunpack.c.l.b16 %v3424
        %v3841 = vunpack.c.l.b16 %v3425
        %v3842 = vunpack.c.l.b16 %v3426
        %v3843 = vunpack.c.l.b16 %v3427
        %v3844 = vunpack.c.l.b16 %v3428
        %v3845 = vunpack.c.l.b16 %v3429
        %v3846 = vunpack.c.l.b16 %v3430
        %v3847 = vunpack.c.l.b16 %v3431
        %v3848 = vunpack.c.l.b16 %v3432
        %v3849 = vunpack.c.l.b16 %v3433
        %v3850 = vunpack.c.l.b16 %v3434
        %v3851 = vunpack.c.l.b16 %v3435
        %v3852 = vunpack.c.l.b16 %v3436
        %v3853 = vunpack.c.l.b16 %v3437
        %v3854 = vunpack.c.l.b16 %v3438
        %v3855 = vunpack.c.l.b16 %v3439
        %v3856 = vunpack.c.l.b16 %v3440
        %v3857 = vunpack.c.l.b16 %v3441
        %v3858 = vunpack.c.l.b16 %v3442
        %v3859 = vunpack.c.l.b16 %v3443
        %v3860 = vunpack.c.l.b16 %v3444
        %v3861 = vunpack.c.l.b16 %v3445
        %v3862 = vunpack.c.l.b16 %v3446
        %v3863 = vunpack.c.l.b16 %v3447
        %v3864 = vunpack.c.l.b16 %v3448
        %v3865 = vunpack.c.l.b16 %v3449
        %v3866 = vunpack.c.l.b16 %v3450
        %v3867 = vpack.c.b16 %v3836, %v3835
        %v3868 = vpack.c.b16 %v3838, %v3837
        %v3869 = vpack.c.b16 %v3840, %v3839
        %v3870 = vpack.c.b16 %v3842, %v3841
        %v3871 = vpack.c.b16 %v3844, %v3843
        %v3872 = vpack.c.b16 %v3846, %v3845
        %v3873 = vpack.c.b16 %v3848, %v3847
        %v3874 = vpack.c.b16 %v3850, %v3849
        %v3875 = vpack.c.b16 %v3852, %v3851
        %v3876 = vpack.c.b16 %v3854, %v3853
        %v3877 = vpack.c.b16 %v3856, %v3855
        %v3878 = vpack.c.b16 %v3858, %v3857
        %v3879 = vpack.c.b16 %v3860, %v3859
        %v3880 = vpack.c.b16 %v3862, %v3861
        %v3881 = vpack.c.b16 %v3864, %v3863
        %v3882 = vpack.c.b16 %v3866, %v3865
        %v3931 = vunpack.c.l.b16 %v3675
        %v3932 = vunpack.c.l.b16 %v3676
        %v3933 = vunpack.c.l.b16 %v3677
        %v3934 = vunpack.c.l.b16 %v3678
        %v3935 = vunpack.c.l.b16 %v3679
        %v3936 = vunpack.c.l.b16 %v3680
        %v3937 = vunpack.c.l.b16 %v3681
        %v3938 = vunpack.c.l.b16 %v3682
        %v3939 = vunpack.c.l.b16 %v3683
        %v3940 = vunpack.c.l.b16 %v3684
        %v3941 = vunpack.c.l.b16 %v3685
        %v3942 = vunpack.c.l.b16 %v3686
        %v3943 = vunpack.c.l.b16 %v3687
        %v3944 = vunpack.c.l.b16 %v3688
        %v3945 = vunpack.c.l.b16 %v3689
        %v3946 = vunpack.c.l.b16 %v3690
        %v3947 = vunpack.c.l.b16 %v3691
        %v3948 = vunpack.c.l.b16 %v3692
        %v3949 = vunpack.c.l.b16 %v3693
        %v3950 = vunpack.c.l.b16 %v3694
        %v3951 = vunpack.c.l.b16 %v3695
        %v3952 = vunpack.c.l.b16 %v3696
        %v3953 = vunpack.c.l.b16 %v3697
        %v3954 = vunpack.c.l.b16 %v3698
        %v3955 = vunpack.c.l.b16 %v3699
        %v3956 = vunpack.c.l.b16 %v3700
        %v3957 = vunpack.c.l.b16 %v3701
        %v3958 = vunpack.c.l.b16 %v3702
        %v3959 = vunpack.c.l.b16 %v3703
        %v3960 = vunpack.c.l.b16 %v3704
        %v3961 = vunpack.c.l.b16 %v3705
        %v3962 = vunpack.c.l.b16 %v3706
        %v3963 = vpack.c.b16 %v3932, %v3931
        %v3964 = vpack.c.b16 %v3934, %v3933
        %v3965 = vpack.c.b16 %v3936, %v3935
        %v3966 = vpack.c.b16 %v3938, %v3937
        %v3967 = vpack.c.b16 %v3940, %v3939
        %v3968 = vpack.c.b16 %v3942, %v3941
        %v3969 = vpack.c.b16 %v3944, %v3943
        %v3970 = vpack.c.b16 %v3946, %v3945
        %v3971 = vpack.c.b16 %v3948, %v3947
        %v3972 = vpack.c.b16 %v3950, %v3949
        %v3973 = vpack.c.b16 %v3952, %v3951
        %v3974 = vpack.c.b16 %v3954, %v3953
        %v3975 = vpack.c.b16 %v3956, %v3955
        %v3976 = vpack.c.b16 %v3958, %v3957
        %v3977 = vpack.c.b16 %v3960, %v3959
        %v3978 = vpack.c.b16 %v3962, %v3961
        %v3995 = vld [vmem:[#allocation8 + $0x180] sm:$0xf]
        %v3996 = vld [vmem:[#allocation8 + $0x184] sm:$0xf]
        %v3997 = vld [vmem:[#allocation8 + $0x188] sm:$0xf]
        %v3998 = vld [vmem:[#allocation8 + $0x18c] sm:$0xf]
        %v3999 = vld [vmem:[#allocation8 + $0x190] sm:$0xf]
        %v4000 = vld [vmem:[#allocation8 + $0x194] sm:$0xf]
        %v4001 = vld [vmem:[#allocation8 + $0x198] sm:$0xf]
        %v4002 = vld [vmem:[#allocation8 + $0x19c] sm:$0xf]
        %v4003 = vld [vmem:[#allocation8 + $0x1a0] sm:$0xf]
        %v4004 = vld [vmem:[#allocation8 + $0x1a4] sm:$0xf]
        %v4005 = vld [vmem:[#allocation8 + $0x1a8] sm:$0xf]
        %v4006 = vld [vmem:[#allocation8 + $0x1ac] sm:$0xf]
        %v4007 = vld [vmem:[#allocation8 + $0x1b0] sm:$0xf]
        %v4008 = vld [vmem:[#allocation8 + $0x1b4] sm:$0xf]
        %v4009 = vld [vmem:[#allocation8 + $0x1b8] sm:$0xf]
        %v4010 = vld [vmem:[#allocation8 + $0x1bc] sm:$0xf]
        %v4011 = vld [vmem:[#allocation8 + $0x1c0] sm:$0xf]
        %v4012 = vld [vmem:[#allocation8 + $0x1c4] sm:$0xf]
        %v4013 = vld [vmem:[#allocation8 + $0x1c8] sm:$0xf]
        %v4014 = vld [vmem:[#allocation8 + $0x1cc] sm:$0xf]
        %v4015 = vld [vmem:[#allocation8 + $0x1d0] sm:$0xf]
        %v4016 = vld [vmem:[#allocation8 + $0x1d4] sm:$0xf]
        %v4017 = vld [vmem:[#allocation8 + $0x1d8] sm:$0xf]
        %v4018 = vld [vmem:[#allocation8 + $0x1dc] sm:$0xf]
        %v4019 = vld [vmem:[#allocation8 + $0x1e0] sm:$0xf]
        %v4020 = vld [vmem:[#allocation8 + $0x1e4] sm:$0xf]
        %v4021 = vld [vmem:[#allocation8 + $0x1e8] sm:$0xf]
        %v4022 = vld [vmem:[#allocation8 + $0x1ec] sm:$0xf]
        %v4023 = vld [vmem:[#allocation8 + $0x1f0] sm:$0xf]
        %v4024 = vld [vmem:[#allocation8 + $0x1f4] sm:$0xf]
        %v4025 = vld [vmem:[#allocation8 + $0x1f8] sm:$0xf]
        %v4026 = vld [vmem:[#allocation8 + $0x1fc] sm:$0xf]
        %v4027 = vld [vmem:[#allocation8 + $0x200] sm:$0xf]
        %v4028 = vld [vmem:[#allocation8 + $0x204] sm:$0xf]
        %v4029 = vld [vmem:[#allocation8 + $0x208] sm:$0xf]
        %v4030 = vld [vmem:[#allocation8 + $0x20c] sm:$0xf]
        %v4031 = vld [vmem:[#allocation8 + $0x210] sm:$0xf]
        %v4032 = vld [vmem:[#allocation8 + $0x214] sm:$0xf]
        %v4033 = vld [vmem:[#allocation8 + $0x218] sm:$0xf]
        %v4034 = vld [vmem:[#allocation8 + $0x21c] sm:$0xf]
        %v4035 = vld [vmem:[#allocation8 + $0x220] sm:$0xf]
        %v4036 = vld [vmem:[#allocation8 + $0x224] sm:$0xf]
        %v4037 = vld [vmem:[#allocation8 + $0x228] sm:$0xf]
        %v4038 = vld [vmem:[#allocation8 + $0x22c] sm:$0xf]
        %v4039 = vld [vmem:[#allocation8 + $0x230] sm:$0xf]
        %v4040 = vld [vmem:[#allocation8 + $0x234] sm:$0xf]
        %v4041 = vld [vmem:[#allocation8 + $0x238] sm:$0xf]
        %v4042 = vld [vmem:[#allocation8 + $0x23c] sm:$0xf]
        %v4091 = vunpack.c.l.b16 %v3995
        %v4092 = vunpack.c.l.b16 %v3996
        %v4093 = vunpack.c.l.b16 %v3997
        %v4094 = vunpack.c.l.b16 %v3998
        %v4095 = vunpack.c.l.b16 %v3999
        %v4096 = vunpack.c.l.b16 %v4000
        %v4097 = vunpack.c.l.b16 %v4001
        %v4098 = vunpack.c.l.b16 %v4002
        %v4099 = vunpack.c.l.b16 %v4003
        %v4100 = vunpack.c.l.b16 %v4004
        %v4101 = vunpack.c.l.b16 %v4005
        %v4102 = vunpack.c.l.b16 %v4006
        %v4103 = vunpack.c.l.b16 %v4007
        %v4104 = vunpack.c.l.b16 %v4008
        %v4105 = vunpack.c.l.b16 %v4009
        %v4106 = vunpack.c.l.b16 %v4010
        %v4107 = vunpack.c.l.b16 %v4011
        %v4108 = vunpack.c.l.b16 %v4012
        %v4109 = vunpack.c.l.b16 %v4013
        %v4110 = vunpack.c.l.b16 %v4014
        %v4111 = vunpack.c.l.b16 %v4015
        %v4112 = vunpack.c.l.b16 %v4016
        %v4113 = vunpack.c.l.b16 %v4017
        %v4114 = vunpack.c.l.b16 %v4018
        %v4115 = vunpack.c.l.b16 %v4019
        %v4116 = vunpack.c.l.b16 %v4020
        %v4117 = vunpack.c.l.b16 %v4021
        %v4118 = vunpack.c.l.b16 %v4022
        %v4119 = vunpack.c.l.b16 %v4023
        %v4120 = vunpack.c.l.b16 %v4024
        %v4121 = vunpack.c.l.b16 %v4025
        %v4122 = vunpack.c.l.b16 %v4026
        %v4123 = vunpack.c.l.b16 %v4027
        %v4124 = vunpack.c.l.b16 %v4028
        %v4125 = vunpack.c.l.b16 %v4029
        %v4126 = vunpack.c.l.b16 %v4030
        %v4127 = vunpack.c.l.b16 %v4031
        %v4128 = vunpack.c.l.b16 %v4032
        %v4129 = vunpack.c.l.b16 %v4033
        %v4130 = vunpack.c.l.b16 %v4034
        %v4131 = vunpack.c.l.b16 %v4035
        %v4132 = vunpack.c.l.b16 %v4036
        %v4133 = vunpack.c.l.b16 %v4037
        %v4134 = vunpack.c.l.b16 %v4038
        %v4135 = vunpack.c.l.b16 %v4039
        %v4136 = vunpack.c.l.b16 %v4040
        %v4137 = vunpack.c.l.b16 %v4041
        %v4138 = vunpack.c.l.b16 %v4042
        %v4139 = vpack.c.b16 %v4092, %v4091
        %v4140 = vpack.c.b16 %v4094, %v4093
        %v4141 = vpack.c.b16 %v4096, %v4095
        %v4142 = vpack.c.b16 %v4098, %v4097
        %v4143 = vpack.c.b16 %v4100, %v4099
        %v4144 = vpack.c.b16 %v4102, %v4101
        %v4145 = vpack.c.b16 %v4104, %v4103
        %v4146 = vpack.c.b16 %v4106, %v4105
        %v4147 = vpack.c.b16 %v4108, %v4107
        %v4148 = vpack.c.b16 %v4110, %v4109
        %v4149 = vpack.c.b16 %v4112, %v4111
        %v4150 = vpack.c.b16 %v4114, %v4113
        %v4151 = vpack.c.b16 %v4116, %v4115
        %v4152 = vpack.c.b16 %v4118, %v4117
        %v4153 = vpack.c.b16 %v4120, %v4119
        %v4154 = vpack.c.b16 %v4122, %v4121
        %v4155 = vpack.c.b16 %v4124, %v4123
        %v4156 = vpack.c.b16 %v4126, %v4125
        %v4157 = vpack.c.b16 %v4128, %v4127
        %v4158 = vpack.c.b16 %v4130, %v4129
        %v4159 = vpack.c.b16 %v4132, %v4131
        %v4160 = vpack.c.b16 %v4134, %v4133
        %v4161 = vpack.c.b16 %v4136, %v4135
        %v4162 = vpack.c.b16 %v4138, %v4137
        %4187 = vmatpush.bf16.msra.mxu0 %v4146
        %4188 = vmatpush.bf16.msra.mxu0 %v4145
        %4189 = vmatpush.bf16.msra.mxu0 %v4144
        %4190 = vmatpush.bf16.msra.mxu0 %v4143
        %4191 = vmatpush.bf16.msra.mxu0 %v4142
        %4192 = vmatpush.bf16.msra.mxu0 %v4141
        %4193 = vmatpush.bf16.msra.mxu0 %v4140
        %4194 = vmatpush.bf16.msra.mxu0 %v4139
        %4195 = vmatmul.bf16.gmra.mxu0 %v3771
        %v4196 = vpop.f32.mrf.mxu0
        %v4197 = vadd.f32 0.0, %v4196
        %v4198 = vpop.f32.mrf.mxu0
        %v4199 = vadd.f32 0.0, %v4198
        %4200 = vmatmul.bf16.gmra.mxu0 %v3772
        %v4201 = vpop.f32.mrf.mxu0
        %v4202 = vadd.f32 0.0, %v4201
        %v4203 = vpop.f32.mrf.mxu0
        %v4204 = vadd.f32 0.0, %v4203
        %4205 = vmatmul.bf16.gmra.mxu0 %v3773
        %v4206 = vpop.f32.mrf.mxu0
        %v4207 = vadd.f32 0.0, %v4206
        %v4208 = vpop.f32.mrf.mxu0
        %v4209 = vadd.f32 0.0, %v4208
        %4210 = vmatmul.bf16.gmra.mxu0 %v3774
        %v4211 = vpop.f32.mrf.mxu0
        %v4212 = vadd.f32 0.0, %v4211
        %v4213 = vpop.f32.mrf.mxu0
        %v4214 = vadd.f32 0.0, %v4213
        %4215 = vmatmul.bf16.gmra.mxu0 %v3775
        %v4216 = vpop.f32.mrf.mxu0
        %v4217 = vadd.f32 0.0, %v4216
        %v4218 = vpop.f32.mrf.mxu0
        %v4219 = vadd.f32 0.0, %v4218
        %4220 = vmatmul.bf16.gmra.mxu0 %v3776
        %v4221 = vpop.f32.mrf.mxu0
        %v4222 = vadd.f32 0.0, %v4221
        %v4223 = vpop.f32.mrf.mxu0
        %v4224 = vadd.f32 0.0, %v4223
        %4225 = vmatmul.bf16.gmra.mxu0 %v3777
        %v4226 = vpop.f32.mrf.mxu0
        %v4227 = vadd.f32 0.0, %v4226
        %v4228 = vpop.f32.mrf.mxu0
        %v4229 = vadd.f32 0.0, %v4228
        %4230 = vmatmul.bf16.gmra.mxu0 %v3778
        %v4231 = vpop.f32.mrf.mxu0
        %v4232 = vadd.f32 0.0, %v4231
        %v4233 = vpop.f32.mrf.mxu0
        %v4234 = vadd.f32 0.0, %v4233
        %4235 = vmatmul.bf16.gmra.mxu0 %v3779
        %v4236 = vpop.f32.mrf.mxu0
        %v4237 = vadd.f32 0.0, %v4236
        %v4238 = vpop.f32.mrf.mxu0
        %v4239 = vadd.f32 0.0, %v4238
        %4240 = vmatmul.bf16.gmra.mxu0 %v3780
        %v4241 = vpop.f32.mrf.mxu0
        %v4242 = vadd.f32 0.0, %v4241
        %v4243 = vpop.f32.mrf.mxu0
        %v4244 = vadd.f32 0.0, %v4243
        %4245 = vmatmul.bf16.gmra.mxu0 %v3781
        %v4246 = vpop.f32.mrf.mxu0
        %v4247 = vadd.f32 0.0, %v4246
        %v4248 = vpop.f32.mrf.mxu0
        %v4249 = vadd.f32 0.0, %v4248
        %4250 = vmatmul.bf16.gmra.mxu0 %v3782
        %v4251 = vpop.f32.mrf.mxu0
        %v4252 = vadd.f32 0.0, %v4251
        %v4253 = vpop.f32.mrf.mxu0
        %v4254 = vadd.f32 0.0, %v4253
        %4255 = vmatmul.bf16.gmra.mxu0 %v3783
        %v4256 = vpop.f32.mrf.mxu0
        %v4257 = vadd.f32 0.0, %v4256
        %v4258 = vpop.f32.mrf.mxu0
        %v4259 = vadd.f32 0.0, %v4258
        %4260 = vmatmul.bf16.gmra.mxu0 %v3784
        %v4261 = vpop.f32.mrf.mxu0
        %v4262 = vadd.f32 0.0, %v4261
        %v4263 = vpop.f32.mrf.mxu0
        %v4264 = vadd.f32 0.0, %v4263
        %4265 = vmatmul.bf16.gmra.mxu0 %v3785
        %v4266 = vpop.f32.mrf.mxu0
        %v4267 = vadd.f32 0.0, %v4266
        %v4268 = vpop.f32.mrf.mxu0
        %v4269 = vadd.f32 0.0, %v4268
        %4270 = vmatmul.bf16.gmra.mxu0 %v3786
        %v4271 = vpop.f32.mrf.mxu0
        %v4272 = vadd.f32 0.0, %v4271
        %v4273 = vpop.f32.mrf.mxu0
        %v4274 = vadd.f32 0.0, %v4273
        %4275 = vdwg.mxu0
        %4276 = vmatpush.bf16.msra.mxu0 %v4154
        %4277 = vmatpush.bf16.msra.mxu0 %v4153
        %4278 = vmatpush.bf16.msra.mxu0 %v4152
        %4279 = vmatpush.bf16.msra.mxu0 %v4151
        %4280 = vmatpush.bf16.msra.mxu0 %v4150
        %4281 = vmatpush.bf16.msra.mxu0 %v4149
        %4282 = vmatpush.bf16.msra.mxu0 %v4148
        %4283 = vmatpush.bf16.msra.mxu0 %v4147
        %4284 = vmatmul.bf16.gmra.mxu0 %v3867
        %v4285 = vpop.f32.mrf.mxu0
        %v4286 = vadd.f32 %v4197, %v4285
        %v4287 = vpop.f32.mrf.mxu0
        %v4288 = vadd.f32 %v4199, %v4287
        %4289 = vmatmul.bf16.gmra.mxu0 %v3868
        %v4290 = vpop.f32.mrf.mxu0
        %v4291 = vadd.f32 %v4202, %v4290
        %v4292 = vpop.f32.mrf.mxu0
        %v4293 = vadd.f32 %v4204, %v4292
        %4294 = vmatmul.bf16.gmra.mxu0 %v3869
        %v4295 = vpop.f32.mrf.mxu0
        %v4296 = vadd.f32 %v4207, %v4295
        %v4297 = vpop.f32.mrf.mxu0
        %v4298 = vadd.f32 %v4209, %v4297
        %4299 = vmatmul.bf16.gmra.mxu0 %v3870
        %v4300 = vpop.f32.mrf.mxu0
        %v4301 = vadd.f32 %v4212, %v4300
        %v4302 = vpop.f32.mrf.mxu0
        %v4303 = vadd.f32 %v4214, %v4302
        %4304 = vmatmul.bf16.gmra.mxu0 %v3871
        %v4305 = vpop.f32.mrf.mxu0
        %v4306 = vadd.f32 %v4217, %v4305
        %v4307 = vpop.f32.mrf.mxu0
        %v4308 = vadd.f32 %v4219, %v4307
        %4309 = vmatmul.bf16.gmra.mxu0 %v3872
        %v4310 = vpop.f32.mrf.mxu0
        %v4311 = vadd.f32 %v4222, %v4310
        %v4312 = vpop.f32.mrf.mxu0
        %v4313 = vadd.f32 %v4224, %v4312
        %4314 = vmatmul.bf16.gmra.mxu0 %v3873
        %v4315 = vpop.f32.mrf.mxu0
        %v4316 = vadd.f32 %v4227, %v4315
        %v4317 = vpop.f32.mrf.mxu0
        %v4318 = vadd.f32 %v4229, %v4317
        %4319 = vmatmul.bf16.gmra.mxu0 %v3874
        %v4320 = vpop.f32.mrf.mxu0
        %v4321 = vadd.f32 %v4232, %v4320
        %v4322 = vpop.f32.mrf.mxu0
        %v4323 = vadd.f32 %v4234, %v4322
        %4324 = vmatmul.bf16.gmra.mxu0 %v3875
        %v4325 = vpop.f32.mrf.mxu0
        %v4326 = vadd.f32 %v4237, %v4325
        %v4327 = vpop.f32.mrf.mxu0
        %v4328 = vadd.f32 %v4239, %v4327
        %4329 = vmatmul.bf16.gmra.mxu0 %v3876
        %v4330 = vpop.f32.mrf.mxu0
        %v4331 = vadd.f32 %v4242, %v4330
        %v4332 = vpop.f32.mrf.mxu0
        %v4333 = vadd.f32 %v4244, %v4332
        %4334 = vmatmul.bf16.gmra.mxu0 %v3877
        %v4335 = vpop.f32.mrf.mxu0
        %v4336 = vadd.f32 %v4247, %v4335
        %v4337 = vpop.f32.mrf.mxu0
        %v4338 = vadd.f32 %v4249, %v4337
        %4339 = vmatmul.bf16.gmra.mxu0 %v3878
        %v4340 = vpop.f32.mrf.mxu0
        %v4341 = vadd.f32 %v4252, %v4340
        %v4342 = vpop.f32.mrf.mxu0
        %v4343 = vadd.f32 %v4254, %v4342
        %4344 = vmatmul.bf16.gmra.mxu0 %v3879
        %v4345 = vpop.f32.mrf.mxu0
        %v4346 = vadd.f32 %v4257, %v4345
        %v4347 = vpop.f32.mrf.mxu0
        %v4348 = vadd.f32 %v4259, %v4347
        %4349 = vmatmul.bf16.gmra.mxu0 %v3880
        %v4350 = vpop.f32.mrf.mxu0
        %v4351 = vadd.f32 %v4262, %v4350
        %v4352 = vpop.f32.mrf.mxu0
        %v4353 = vadd.f32 %v4264, %v4352
        %4354 = vmatmul.bf16.gmra.mxu0 %v3881
        %v4355 = vpop.f32.mrf.mxu0
        %v4356 = vadd.f32 %v4267, %v4355
        %v4357 = vpop.f32.mrf.mxu0
        %v4358 = vadd.f32 %v4269, %v4357
        %4359 = vmatmul.bf16.gmra.mxu0 %v3882
        %v4360 = vpop.f32.mrf.mxu0
        %v4361 = vadd.f32 %v4272, %v4360
        %v4362 = vpop.f32.mrf.mxu0
        %v4363 = vadd.f32 %v4274, %v4362
        %4364 = vdwg.mxu0
        %4365 = vmatpush.bf16.msra.mxu0 %v4162
        %4366 = vmatpush.bf16.msra.mxu0 %v4161
        %4367 = vmatpush.bf16.msra.mxu0 %v4160
        %4368 = vmatpush.bf16.msra.mxu0 %v4159
        %4369 = vmatpush.bf16.msra.mxu0 %v4158
        %4370 = vmatpush.bf16.msra.mxu0 %v4157
        %4371 = vmatpush.bf16.msra.mxu0 %v4156
        %4372 = vmatpush.bf16.msra.mxu0 %v4155
        %4373 = vmatmul.bf16.gmra.mxu0 %v3963
        %v4374 = vpop.f32.mrf.mxu0
        %v4375 = vadd.f32 %v4286, %v4374
        %v4376 = vpop.f32.mrf.mxu0
        %v4377 = vadd.f32 %v4288, %v4376
        %4378 = vmatmul.bf16.gmra.mxu0 %v3964
        %v4379 = vpop.f32.mrf.mxu0
        %v4380 = vadd.f32 %v4291, %v4379
        %v4381 = vpop.f32.mrf.mxu0
        %v4382 = vadd.f32 %v4293, %v4381
        %4383 = vmatmul.bf16.gmra.mxu0 %v3965
        %v4384 = vpop.f32.mrf.mxu0
        %v4385 = vadd.f32 %v4296, %v4384
        %v4386 = vpop.f32.mrf.mxu0
        %v4387 = vadd.f32 %v4298, %v4386
        %4388 = vmatmul.bf16.gmra.mxu0 %v3966
        %v4389 = vpop.f32.mrf.mxu0
        %v4390 = vadd.f32 %v4301, %v4389
        %v4391 = vpop.f32.mrf.mxu0
        %v4392 = vadd.f32 %v4303, %v4391
        %4393 = vmatmul.bf16.gmra.mxu0 %v3967
        %v4394 = vpop.f32.mrf.mxu0
        %v4395 = vadd.f32 %v4306, %v4394
        %v4396 = vpop.f32.mrf.mxu0
        %v4397 = vadd.f32 %v4308, %v4396
        %4398 = vmatmul.bf16.gmra.mxu0 %v3968
        %v4399 = vpop.f32.mrf.mxu0
        %v4400 = vadd.f32 %v4311, %v4399
        %v4401 = vpop.f32.mrf.mxu0
        %v4402 = vadd.f32 %v4313, %v4401
        %4403 = vmatmul.bf16.gmra.mxu0 %v3969
        %v4404 = vpop.f32.mrf.mxu0
        %v4405 = vadd.f32 %v4316, %v4404
        %v4406 = vpop.f32.mrf.mxu0
        %v4407 = vadd.f32 %v4318, %v4406
        %4408 = vmatmul.bf16.gmra.mxu0 %v3970
        %v4409 = vpop.f32.mrf.mxu0
        %v4410 = vadd.f32 %v4321, %v4409
        %v4411 = vpop.f32.mrf.mxu0
        %v4412 = vadd.f32 %v4323, %v4411
        %4413 = vmatmul.bf16.gmra.mxu0 %v3971
        %v4414 = vpop.f32.mrf.mxu0
        %v4415 = vadd.f32 %v4326, %v4414
        %v4416 = vpop.f32.mrf.mxu0
        %v4417 = vadd.f32 %v4328, %v4416
        %4418 = vmatmul.bf16.gmra.mxu0 %v3972
        %v4419 = vpop.f32.mrf.mxu0
        %v4420 = vadd.f32 %v4331, %v4419
        %v4421 = vpop.f32.mrf.mxu0
        %v4422 = vadd.f32 %v4333, %v4421
        %4423 = vmatmul.bf16.gmra.mxu0 %v3973
        %v4424 = vpop.f32.mrf.mxu0
        %v4425 = vadd.f32 %v4336, %v4424
        %v4426 = vpop.f32.mrf.mxu0
        %v4427 = vadd.f32 %v4338, %v4426
        %4428 = vmatmul.bf16.gmra.mxu0 %v3974
        %v4429 = vpop.f32.mrf.mxu0
        %v4430 = vadd.f32 %v4341, %v4429
        %v4431 = vpop.f32.mrf.mxu0
        %v4432 = vadd.f32 %v4343, %v4431
        %4433 = vmatmul.bf16.gmra.mxu0 %v3975
        %v4434 = vpop.f32.mrf.mxu0
        %v4435 = vadd.f32 %v4346, %v4434
        %v4436 = vpop.f32.mrf.mxu0
        %v4437 = vadd.f32 %v4348, %v4436
        %4438 = vmatmul.bf16.gmra.mxu0 %v3976
        %v4439 = vpop.f32.mrf.mxu0
        %v4440 = vadd.f32 %v4351, %v4439
        %v4441 = vpop.f32.mrf.mxu0
        %v4442 = vadd.f32 %v4353, %v4441
        %4443 = vmatmul.bf16.gmra.mxu0 %v3977
        %v4444 = vpop.f32.mrf.mxu0
        %v4445 = vadd.f32 %v4356, %v4444
        %v4446 = vpop.f32.mrf.mxu0
        %v4447 = vadd.f32 %v4358, %v4446
        %4448 = vmatmul.bf16.gmra.mxu0 %v3978
        %v4449 = vpop.f32.mrf.mxu0
        %v4450 = vadd.f32 %v4361, %v4449
        %v4451 = vpop.f32.mrf.mxu0
        %v4452 = vadd.f32 %v4363, %v4451
        %4453 = vdwg.mxu0
        %v4454 = vadd.f32 %v3308, %v4375
        %v4455 = vadd.f32 %v3310, %v4377
        %v4456 = vadd.f32 %v3313, %v4380
        %v4457 = vadd.f32 %v3315, %v4382
        %v4458 = vadd.f32 %v3318, %v4385
        %v4459 = vadd.f32 %v3320, %v4387
        %v4460 = vadd.f32 %v3323, %v4390
        %v4461 = vadd.f32 %v3325, %v4392
        %v4462 = vadd.f32 %v3328, %v4395
        %v4463 = vadd.f32 %v3330, %v4397
        %v4464 = vadd.f32 %v3333, %v4400
        %v4465 = vadd.f32 %v3335, %v4402
        %v4466 = vadd.f32 %v3338, %v4405
        %v4467 = vadd.f32 %v3340, %v4407
        %v4468 = vadd.f32 %v3343, %v4410
        %v4469 = vadd.f32 %v3345, %v4412
        %v4470 = vadd.f32 %v3348, %v4415
        %v4471 = vadd.f32 %v3350, %v4417
        %v4472 = vadd.f32 %v3353, %v4420
        %v4473 = vadd.f32 %v3355, %v4422
        %v4474 = vadd.f32 %v3358, %v4425
        %v4475 = vadd.f32 %v3360, %v4427
        %v4476 = vadd.f32 %v3363, %v4430
        %v4477 = vadd.f32 %v3365, %v4432
        %v4478 = vadd.f32 %v3368, %v4435
        %v4479 = vadd.f32 %v3370, %v4437
        %v4480 = vadd.f32 %v3373, %v4440
        %v4481 = vadd.f32 %v3375, %v4442
        %v4482 = vadd.f32 %v3378, %v4445
        %v4483 = vadd.f32 %v3380, %v4447
        %v4484 = vadd.f32 %v3383, %v4450
        %v4485 = vadd.f32 %v3385, %v4452
        %v4486 = vld [vmem:[%s349] sm:$0xff]
        %v4487 = vld [vmem:[%s349 + $0x8] sm:$0xff]
        %v4488 = vld [vmem:[%s349 + $0x10] sm:$0xff]
        %v4489 = vld [vmem:[%s349 + $0x18] sm:$0xff]
        %v4490 = vld [vmem:[%s349 + $0x20] sm:$0xff]
        %v4491 = vld [vmem:[%s349 + $0x28] sm:$0xff]
        %v4492 = vld [vmem:[%s349 + $0x30] sm:$0xff]
        %v4493 = vld [vmem:[%s349 + $0x38] sm:$0xff]
        %v4494 = vld [vmem:[%s349 + $0x40] sm:$0xff]
        %v4495 = vld [vmem:[%s349 + $0x48] sm:$0xff]
        %v4496 = vld [vmem:[%s349 + $0x50] sm:$0xff]
        %v4497 = vld [vmem:[%s349 + $0x58] sm:$0xff]
        %v4498 = vld [vmem:[%s349 + $0x60] sm:$0xff]
        %v4499 = vld [vmem:[%s349 + $0x68] sm:$0xff]
        %v4500 = vld [vmem:[%s349 + $0x70] sm:$0xff]
        %v4501 = vld [vmem:[%s349 + $0x78] sm:$0xff]
        %v4502 = vld [vmem:[%s349 + $0x80] sm:$0xff]
        %v4503 = vld [vmem:[%s349 + $0x88] sm:$0xff]
        %v4504 = vld [vmem:[%s349 + $0x90] sm:$0xff]
        %v4505 = vld [vmem:[%s349 + $0x98] sm:$0xff]
        %v4506 = vld [vmem:[%s349 + $0xa0] sm:$0xff]
        %v4507 = vld [vmem:[%s349 + $0xa8] sm:$0xff]
        %v4508 = vld [vmem:[%s349 + $0xb0] sm:$0xff]
        %v4509 = vld [vmem:[%s349 + $0xb8] sm:$0xff]
        %v4510 = vld [vmem:[%s349 + $0xc0] sm:$0xff]
        %v4511 = vld [vmem:[%s349 + $0xc8] sm:$0xff]
        %v4512 = vld [vmem:[%s349 + $0xd0] sm:$0xff]
        %v4513 = vld [vmem:[%s349 + $0xd8] sm:$0xff]
        %v4514 = vld [vmem:[%s349 + $0xe0] sm:$0xff]
        %v4515 = vld [vmem:[%s349 + $0xe8] sm:$0xff]
        %v4516 = vld [vmem:[%s349 + $0xf0] sm:$0xff]
        %v4517 = vld [vmem:[%s349 + $0xf8] sm:$0xff]
        %v4518 = vld [vmem:[%s5] sm:$0x1]
        %v4520 = vperm.slane %v4518, 0
        %v4522 = vmul.f32 %v4454, %v4520
        %v4523 = vmul.f32 %v4455, %v4520
        %v4524 = vmul.f32 %v4456, %v4520
        %v4525 = vmul.f32 %v4457, %v4520
        %v4526 = vmul.f32 %v4458, %v4520
        %v4527 = vmul.f32 %v4459, %v4520
        %v4528 = vmul.f32 %v4460, %v4520
        %v4529 = vmul.f32 %v4461, %v4520
        %v4530 = vmul.f32 %v4462, %v4520
        %v4531 = vmul.f32 %v4463, %v4520
        %v4532 = vmul.f32 %v4464, %v4520
        %v4533 = vmul.f32 %v4465, %v4520
        %v4534 = vmul.f32 %v4466, %v4520
        %v4535 = vmul.f32 %v4467, %v4520
        %v4536 = vmul.f32 %v4468, %v4520
        %v4537 = vmul.f32 %v4469, %v4520
        %v4538 = vmul.f32 %v4470, %v4520
        %v4539 = vmul.f32 %v4471, %v4520
        %v4540 = vmul.f32 %v4472, %v4520
        %v4541 = vmul.f32 %v4473, %v4520
        %v4542 = vmul.f32 %v4474, %v4520
        %v4543 = vmul.f32 %v4475, %v4520
        %v4544 = vmul.f32 %v4476, %v4520
        %v4545 = vmul.f32 %v4477, %v4520
        %v4546 = vmul.f32 %v4478, %v4520
        %v4547 = vmul.f32 %v4479, %v4520
        %v4548 = vmul.f32 %v4480, %v4520
        %v4549 = vmul.f32 %v4481, %v4520
        %v4550 = vmul.f32 %v4482, %v4520
        %v4551 = vmul.f32 %v4483, %v4520
        %v4552 = vmul.f32 %v4484, %v4520
        %v4553 = vmul.f32 %v4485, %v4520
        %v4554 = vld [vmem:[%s6] sm:$0x1]
        %v4556 = vperm.slane %v4554, 0
        %v4558 = vadd.f32 %v4522, %v4556
        %v4559 = vadd.f32 %v4523, %v4556
        %v4560 = vadd.f32 %v4524, %v4556
        %v4561 = vadd.f32 %v4525, %v4556
        %v4562 = vadd.f32 %v4526, %v4556
        %v4563 = vadd.f32 %v4527, %v4556
        %v4564 = vadd.f32 %v4528, %v4556
        %v4565 = vadd.f32 %v4529, %v4556
        %v4566 = vadd.f32 %v4530, %v4556
        %v4567 = vadd.f32 %v4531, %v4556
        %v4568 = vadd.f32 %v4532, %v4556
        %v4569 = vadd.f32 %v4533, %v4556
        %v4570 = vadd.f32 %v4534, %v4556
        %v4571 = vadd.f32 %v4535, %v4556
        %v4572 = vadd.f32 %v4536, %v4556
        %v4573 = vadd.f32 %v4537, %v4556
        %v4574 = vadd.f32 %v4538, %v4556
        %v4575 = vadd.f32 %v4539, %v4556
        %v4576 = vadd.f32 %v4540, %v4556
        %v4577 = vadd.f32 %v4541, %v4556
        %v4578 = vadd.f32 %v4542, %v4556
        %v4579 = vadd.f32 %v4543, %v4556
        %v4580 = vadd.f32 %v4544, %v4556
        %v4581 = vadd.f32 %v4545, %v4556
        %v4582 = vadd.f32 %v4546, %v4556
        %v4583 = vadd.f32 %v4547, %v4556
        %v4584 = vadd.f32 %v4548, %v4556
        %v4585 = vadd.f32 %v4549, %v4556
        %v4586 = vadd.f32 %v4550, %v4556
        %v4587 = vadd.f32 %v4551, %v4556
        %v4588 = vadd.f32 %v4552, %v4556
        %v4589 = vadd.f32 %v4553, %v4556
        %v4590 = vadd.f32 %v4558, %v4486
        %v4591 = vadd.f32 %v4559, %v4487
        %v4592 = vadd.f32 %v4560, %v4488
        %v4593 = vadd.f32 %v4561, %v4489
        %v4594 = vadd.f32 %v4562, %v4490
        %v4595 = vadd.f32 %v4563, %v4491
        %v4596 = vadd.f32 %v4564, %v4492
        %v4597 = vadd.f32 %v4565, %v4493
        %v4598 = vadd.f32 %v4566, %v4494
        %v4599 = vadd.f32 %v4567, %v4495
        %v4600 = vadd.f32 %v4568, %v4496
        %v4601 = vadd.f32 %v4569, %v4497
        %v4602 = vadd.f32 %v4570, %v4498
        %v4603 = vadd.f32 %v4571, %v4499
        %v4604 = vadd.f32 %v4572, %v4500
        %v4605 = vadd.f32 %v4573, %v4501
        %v4606 = vadd.f32 %v4574, %v4502
        %v4607 = vadd.f32 %v4575, %v4503
        %v4608 = vadd.f32 %v4576, %v4504
        %v4609 = vadd.f32 %v4577, %v4505
        %v4610 = vadd.f32 %v4578, %v4506
        %v4611 = vadd.f32 %v4579, %v4507
        %v4612 = vadd.f32 %v4580, %v4508
        %v4613 = vadd.f32 %v4581, %v4509
        %v4614 = vadd.f32 %v4582, %v4510
        %v4615 = vadd.f32 %v4583, %v4511
        %v4616 = vadd.f32 %v4584, %v4512
        %v4617 = vadd.f32 %v4585, %v4513
        %v4618 = vadd.f32 %v4586, %v4514
        %v4619 = vadd.f32 %v4587, %v4515
        %v4620 = vadd.f32 %v4588, %v4516
        %v4621 = vadd.f32 %v4589, %v4517
        %v4622 = vmax.f32 %v4590, 0.0
        %v4623 = vmax.f32 %v4591, 0.0
        %v4624 = vmax.f32 %v4592, 0.0
        %v4625 = vmax.f32 %v4593, 0.0
        %v4626 = vmax.f32 %v4594, 0.0
        %v4627 = vmax.f32 %v4595, 0.0
        %v4628 = vmax.f32 %v4596, 0.0
        %v4629 = vmax.f32 %v4597, 0.0
        %v4630 = vmax.f32 %v4598, 0.0
        %v4631 = vmax.f32 %v4599, 0.0
        %v4632 = vmax.f32 %v4600, 0.0
        %v4633 = vmax.f32 %v4601, 0.0
        %v4634 = vmax.f32 %v4602, 0.0
        %v4635 = vmax.f32 %v4603, 0.0
        %v4636 = vmax.f32 %v4604, 0.0
        %v4637 = vmax.f32 %v4605, 0.0
        %v4638 = vmax.f32 %v4606, 0.0
        %v4639 = vmax.f32 %v4607, 0.0
        %v4640 = vmax.f32 %v4608, 0.0
        %v4641 = vmax.f32 %v4609, 0.0
        %v4642 = vmax.f32 %v4610, 0.0
        %v4643 = vmax.f32 %v4611, 0.0
        %v4644 = vmax.f32 %v4612, 0.0
        %v4645 = vmax.f32 %v4613, 0.0
        %v4646 = vmax.f32 %v4614, 0.0
        %v4647 = vmax.f32 %v4615, 0.0
        %v4648 = vmax.f32 %v4616, 0.0
        %v4649 = vmax.f32 %v4617, 0.0
        %v4650 = vmax.f32 %v4618, 0.0
        %v4651 = vmax.f32 %v4619, 0.0
        %v4652 = vmax.f32 %v4620, 0.0
        %v4653 = vmax.f32 %v4621, 0.0
        %4654 = vst [vmem:[%s345] sm:$0xff] %v4622
        %4655 = vst [vmem:[%s345 + $0x8] sm:$0xff] %v4623
        %4656 = vst [vmem:[%s345 + $0x10] sm:$0xff] %v4624
        %4657 = vst [vmem:[%s345 + $0x18] sm:$0xff] %v4625
        %4658 = vst [vmem:[%s345 + $0x20] sm:$0xff] %v4626
        %4659 = vst [vmem:[%s345 + $0x28] sm:$0xff] %v4627
        %4660 = vst [vmem:[%s345 + $0x30] sm:$0xff] %v4628
        %4661 = vst [vmem:[%s345 + $0x38] sm:$0xff] %v4629
        %4662 = vst [vmem:[%s345 + $0x40] sm:$0xff] %v4630
        %4663 = vst [vmem:[%s345 + $0x48] sm:$0xff] %v4631
        %4664 = vst [vmem:[%s345 + $0x50] sm:$0xff] %v4632
        %4665 = vst [vmem:[%s345 + $0x58] sm:$0xff] %v4633
        %4666 = vst [vmem:[%s345 + $0x60] sm:$0xff] %v4634
        %4667 = vst [vmem:[%s345 + $0x68] sm:$0xff] %v4635
        %4668 = vst [vmem:[%s345 + $0x70] sm:$0xff] %v4636
        %4669 = vst [vmem:[%s345 + $0x78] sm:$0xff] %v4637
        %4670 = vst [vmem:[%s345 + $0x80] sm:$0xff] %v4638
        %4671 = vst [vmem:[%s345 + $0x88] sm:$0xff] %v4639
        %4672 = vst [vmem:[%s345 + $0x90] sm:$0xff] %v4640
        %4673 = vst [vmem:[%s345 + $0x98] sm:$0xff] %v4641
        %4674 = vst [vmem:[%s345 + $0xa0] sm:$0xff] %v4642
        %4675 = vst [vmem:[%s345 + $0xa8] sm:$0xff] %v4643
        %4676 = vst [vmem:[%s345 + $0xb0] sm:$0xff] %v4644
        %4677 = vst [vmem:[%s345 + $0xb8] sm:$0xff] %v4645
        %4678 = vst [vmem:[%s345 + $0xc0] sm:$0xff] %v4646
        %4679 = vst [vmem:[%s345 + $0xc8] sm:$0xff] %v4647
        %4680 = vst [vmem:[%s345 + $0xd0] sm:$0xff] %v4648
        %4681 = vst [vmem:[%s345 + $0xd8] sm:$0xff] %v4649
        %4682 = vst [vmem:[%s345 + $0xe0] sm:$0xff] %v4650
        %4683 = vst [vmem:[%s345 + $0xe8] sm:$0xff] %v4651
        %4684 = vst [vmem:[%s345 + $0xf0] sm:$0xff] %v4652
        %4685 = vst [vmem:[%s345 + $0xf8] sm:$0xff] %v4653
        %s4686 = sand.u32 %s199, 1
        %s4687 = scalar_lea.sflag [#allocation5], %s4686
        %s4688 = sand.u32 %s199, 1
        %s4689 = smul.addr %s4688, 256
        %s4690 = scalar_lea.vmem [#allocation9], %s4689
        // Predicated region
        $region77: #{tpu_custom_call.1} parent=47 // pred_check
          %p4691 = pneg %p209
        $region78: #{tpu_custom_call.1} parent=47 // pred_check_branch
          %4693 = sbr.rel (%p4691) target = $region80
        $region79: #{tpu_custom_call.1} parent=47 // pred_region
          %s4694 = smul.u32 32, %s30
          %4696 = vsyncadd %s4687, 0
          %s4697 = smul.addr %s29, 32
          %s4698 = sadd.s32 %s4694, %s4697
          %s4699 = smul.addr %s4698, 8
          %s4700 = scalar_lea.hbm %s7, %s4699
          %s4701 = sshll.u32 %s4690, 4
          %s4702 = int_to_ptr.vmem [resolvable:$true] %s4701
          %s4703 = sshll.u32 %s4700, 4
          %s4704 = int_to_ptr.hbm [resolvable:$true] %s4703
          %4709 = dma.vmem_to_hbm [thread:$0]  %s4702, 4096, %s4704, %s4687, 128, 128, 8
        $region80: #{tpu_custom_call.1} parent=47 // pred_fallthru
          _
      $region48: #{tpu_custom_call.1} parent=5 // pred_fallthru
        _
      %p4710 = scmp.le.s32.totalorder 2, %s20
      // Predicated region
      $region81: #{tpu_custom_call.1} parent=5 // pred_check
        %p4711 = pneg %p4710
      $region82: #{tpu_custom_call.1} parent=5 // pred_check_branch
        %4713 = sbr.rel (%p4711) target = $region84
      $region83: #{tpu_custom_call.1} parent=5 // pred_region
        %s4714 = ssub.s32 %s20, 2
        // Predicated region
        $region85: #{tpu_custom_call.1} parent=83 // pred_check
          %p4715 = pneg %p215
        $region86: #{tpu_custom_call.1} parent=83 // pred_check_branch
          %4717 = sbr.rel (%p4715) target = $region88
        $region87: #{tpu_custom_call.1} parent=83 // pred_region
          %s4718 = sand.u32 %s200, 1
          %s4719 = scalar_lea.sflag [#allocation5], %s4718
          %s4720 = sand.u32 %s200, 1
          %s4721 = smul.addr %s4720, 256
          %s4722 = scalar_lea.vmem [#allocation9], %s4721
          %4724 = dma.done %s4719, 4096
        $region88: #{tpu_custom_call.1} parent=83 // pred_fallthru
          _
      $region84: #{tpu_custom_call.1} parent=5 // pred_fallthru
        _
    $region6: #{tpu_custom_call.1} parent=1 // loop_footer
      %s24 = sadd.s32 1, %s20
    $region7: #{tpu_custom_call.1} parent=1 // loop_footer_branch
      %19 = sbr.rel target = $region3
    $region8: #{tpu_custom_call.1} parent=1 // loop_exit
      _
    %4725 = vsyncpa [#allocation4], 1
    %s4726 = scalar_lea.sflag [#allocation4], 1
    %4727 = vsyncpa %s4726, 1
    %4728 = vsyncpa [#allocation7], 1
    %4729 = vsyncpa [#allocation5], 1
    %s4730 = scalar_lea.sflag [#allocation5], 1
    %4731 = vsyncpa %s4730, 1

</llo_original>
